<compile_context>
chip_gen: v7x
topology: tpu7x:2x2x1
jax: 0.10.0
libtpu: 0.0.40
codegen_flags: <defaults>
</compile_context>

<pallas_src>
import functools
import math

import jax
import jax.numpy as jnp
import numpy as np
from jax.experimental import pallas as pl
from jax.experimental.pallas import tpu as pltpu

_COMPUTE_DTYPE = jnp.bfloat16   # MXU-operand / activation-storage dtype; accumulation stays f32.


def _tpu_budget():
    """Generation-aware tile / scoped-VMEM choices (v5e/v6e: 128 MiB VMEM, v7x: 64 MiB/TC)."""
    vmem_cap = 64 * 1024 * 1024
    try:
        info = pltpu.get_tpu_info()
        cap = getattr(info, "vmem_capacity_bytes", None)
        if cap:
            vmem_cap = int(cap)
    except Exception:
        pass
    if vmem_cap >= 96 * 1024 * 1024:          # v5e / v6e (128 MiB parts)
        return dict(vmem_limit=100 * 1024 * 1024, tm=512, tn=1024, tk=1024,
                    tq=512, tkv=512)
    # v7x (64 MiB per TensorCore)
    return dict(vmem_limit=48 * 1024 * 1024, tm=256, tn=512, tk=512,
                tq=512, tkv=256)


_BUDGET = _tpu_budget()
_VMEM_LIMIT = _BUDGET["vmem_limit"]

_SUBLANE_ALIGNS = (256, 128, 8)   # second-minor block dims: multiple of 8 (prefer MXU size)
_LANE_ALIGNS = (256, 128)         # minor (lane) block dims: multiple of 128, else full extent


def _pick_tile(dim, target, aligns):
    """Largest divisor of `dim` <= target that is a multiple of a preferred alignment
    (tried in order); falls back to the full extent (a full-dim block is always legal)."""
    target = min(target, dim)
    for align in aligns:
        for cand in range(target - target % align, 0, -align):
            if dim % cand == 0:
                return cand
    return dim


def _gelu_tanh(x):
    # tanh-form GELU: the transcendental goes to the EUP slot; |err| vs erf-GELU <= ~1e-3.
    c = 0.7978845608028654  # sqrt(2/pi)
    return 0.5 * x * (1.0 + jnp.tanh(c * (x + 0.044715 * x * x * x)))


# ----------------------------- LayerNorm (attn_ln) --------------------------------

def _make_layernorm_kernel(eps):
    def kernel(x_ref, g_ref, b_ref, o_ref):
        x = x_ref[...].astype(jnp.float32)
        mean = jnp.mean(x, axis=-1, keepdims=True)
        xc = x - mean
        var = jnp.mean(xc * xc, axis=-1, keepdims=True)
        y = xc * jax.lax.rsqrt(var + eps)
        o_ref[...] = (y * g_ref[...] + b_ref[...]).astype(o_ref.dtype)
    return kernel


def layernorm(x2d, gamma, beta, eps, *, out_dtype=_COMPUTE_DTYPE, tm=None):
    M, D = x2d.shape
    tm = _pick_tile(M, tm or _BUDGET["tm"], _SUBLANE_ALIGNS)
    return pl.pallas_call(
        _make_layernorm_kernel(eps),
        out_shape=jax.ShapeDtypeStruct((M, D), out_dtype),
        grid=(M // tm,),
        in_specs=[pl.BlockSpec((tm, D), lambda i: (i, 0)),
                  pl.BlockSpec((1, D), lambda i: (0, 0)),
                  pl.BlockSpec((1, D), lambda i: (0, 0))],
        out_specs=pl.BlockSpec((tm, D), lambda i: (i, 0)),
        compiler_params=pltpu.CompilerParams(
            dimension_semantics=("parallel",),
            vmem_limit_bytes=_VMEM_LIMIT),
    )(x2d, gamma.reshape(1, D).astype(jnp.float32), beta.reshape(1, D).astype(jnp.float32))


# ----------------------------- fused linear (matmul) ------------------------------

def _make_linear_kernel(activation, has_residual, res_alpha):
    def body(x_ref, w_ref, b_ref, r_ref, o_ref, acc_ref):
        k = pl.program_id(2)

        @pl.when(k == 0)
        def _():
            acc_ref[...] = jnp.zeros_like(acc_ref)

        # bf16 x bf16 operands, f32 accumulation on the MXU (no per-step operand casts).
        acc_ref[...] += jnp.dot(x_ref[...], w_ref[...],
                                preferred_element_type=jnp.float32)

        @pl.when(k == pl.num_programs(2) - 1)
        def _():
            y = acc_ref[...] + b_ref[...].astype(jnp.float32)
            if activation == "gelu":
                y = _gelu_tanh(y)
            if has_residual:
                y = r_ref[...].astype(jnp.float32) * res_alpha + y
            o_ref[...] = y.astype(o_ref.dtype)

    if has_residual:
        def kernel(x_ref, w_ref, b_ref, r_ref, o_ref, acc_ref):
            body(x_ref, w_ref, b_ref, r_ref, o_ref, acc_ref)
    else:
        def kernel(x_ref, w_ref, b_ref, o_ref, acc_ref):
            body(x_ref, w_ref, b_ref, None, o_ref, acc_ref)
    return kernel


def linear(x2d, w, b, *, activation=None, residual=None, res_alpha=1.0,
           out_dtype=_COMPUTE_DTYPE, tm=None, tn=None, tk=None):
    """y = act(x @ w + b) [+ residual * res_alpha], tiled over (M, N, K)."""
    M, K = x2d.shape
    N = w.shape[1]
    tm = _pick_tile(M, tm or _BUDGET["tm"], _SUBLANE_ALIGNS)
    tn = _pick_tile(N, tn or _BUDGET["tn"], _LANE_ALIGNS)
    tk = _pick_tile(K, tk or _BUDGET["tk"], _LANE_ALIGNS)

    inputs = [x2d.astype(_COMPUTE_DTYPE), w.astype(_COMPUTE_DTYPE),
              b.reshape(1, N).astype(jnp.float32)]
    in_specs = [pl.BlockSpec((tm, tk), lambda i, j, k: (i, k)),
                pl.BlockSpec((tk, tn), lambda i, j, k: (k, j)),
                pl.BlockSpec((1, tn), lambda i, j, k: (0, j))]
    if residual is not None:
        # Residual tile shares the output's (i, j) index -> DMA'd once per output tile.
        # TODO(synk): pipeline_mode=pl.Buffered(1) on bias/residual would reclaim the
        # second buffer on v7x when tiles are pushed toward the 64 MiB budget.
        inputs.append(residual.astype(_COMPUTE_DTYPE))
        in_specs.append(pl.BlockSpec((tm, tn), lambda i, j, k: (i, j)))

    return pl.pallas_call(
        _make_linear_kernel(activation, residual is not None, res_alpha),
        out_shape=jax.ShapeDtypeStruct((M, N), out_dtype),
        grid=(M // tm, N // tn, K // tk),
        in_specs=in_specs,
        out_specs=pl.BlockSpec((tm, tn), lambda i, j, k: (i, j)),
        scratch_shapes=[pltpu.VMEM((tm, tn), jnp.float32)],
        compiler_params=pltpu.CompilerParams(
            dimension_semantics=("parallel", "parallel", "arbitrary"),
            vmem_limit_bytes=_VMEM_LIMIT),
    )(*inputs)


# --------------------- o_proj + attn residual + ffn_ln (fused) --------------------

def _make_matmul_residual_ln_kernel(res_alpha, eps):
    def kernel(x_ref, w_ref, b_ref, r_ref, g_ref, bt_ref, o_ref, acc_ref):
        k = pl.program_id(1)

        @pl.when(k == 0)
        def _():
            acc_ref[...] = jnp.zeros_like(acc_ref)

        acc_ref[...] += jnp.dot(x_ref[...], w_ref[...],
                                preferred_element_type=jnp.float32)

        @pl.when(k == pl.num_programs(1) - 1)
        def _():
            h = (r_ref[...].astype(jnp.float32) * res_alpha
                 + acc_ref[...] + b_ref[...].astype(jnp.float32))
            mean = jnp.mean(h, axis=-1, keepdims=True)
            hc = h - mean
            var = jnp.mean(hc * hc, axis=-1, keepdims=True)
            y = hc * jax.lax.rsqrt(var + eps)
            o_ref[...] = (y * g_ref[...] + bt_ref[...]).astype(o_ref.dtype)
    return kernel


def matmul_residual_layernorm(x2d, w, b, residual, res_alpha, gamma, beta, eps, *,
                              out_dtype=_COMPUTE_DTYPE, tm=None, tk=None):
    """x2 = LayerNorm(residual*alpha + (x @ w + b)).  Keeps the full output row (tn == N)
    resident so the LN statistics run in the matmul epilogue — saves one (M, N) HBM
    round-trip of the intermediate `h`."""
    M, K = x2d.shape
    N = w.shape[1]
    tm = _pick_tile(M, tm or _BUDGET["tm"], _SUBLANE_ALIGNS)
    tk = _pick_tile(K, tk or _BUDGET["tk"], _LANE_ALIGNS)
    return pl.pallas_call(
        _make_matmul_residual_ln_kernel(res_alpha, eps),
        out_shape=jax.ShapeDtypeStruct((M, N), out_dtype),
        grid=(M // tm, K // tk),
        in_specs=[pl.BlockSpec((tm, tk), lambda i, k: (i, k)),
                  pl.BlockSpec((tk, N), lambda i, k: (k, 0)),
                  pl.BlockSpec((1, N), lambda i, k: (0, 0)),
                  pl.BlockSpec((tm, N), lambda i, k: (i, 0)),
                  pl.BlockSpec((1, N), lambda i, k: (0, 0)),
                  pl.BlockSpec((1, N), lambda i, k: (0, 0))],
        out_specs=pl.BlockSpec((tm, N), lambda i, k: (i, 0)),
        scratch_shapes=[pltpu.VMEM((tm, N), jnp.float32)],
        compiler_params=pltpu.CompilerParams(
            dimension_semantics=("parallel", "arbitrary"),
            vmem_limit_bytes=_VMEM_LIMIT),
    )(x2d.astype(_COMPUTE_DTYPE), w.astype(_COMPUTE_DTYPE),
      b.reshape(1, N).astype(jnp.float32), residual.astype(_COMPUTE_DTYPE),
      gamma.reshape(1, N).astype(jnp.float32), beta.reshape(1, N).astype(jnp.float32))


# ----------------------------- 2D rotary embedding --------------------------------

def _rotary2d_kernel(q_ref, k_ref, f0r_ref, f0i_ref, f1r_ref, f1i_ref,
                     oq_ref, ok_ref):
    E = f0r_ref.shape[-1]
    # (tm, E) frequency tiles are broadcast over heads inside VMEM (no HBM broadcast).
    f0r = f0r_ref[...][:, None, :]
    f0i = f0i_ref[...][:, None, :]
    f1r = f1r_ref[...][:, None, :]
    f1i = f1i_ref[...][:, None, :]

    def rotate(x_ref, o_ref):
        x = x_ref[...].astype(jnp.float32)        # (tm, H, Dh)
        x1r = x[..., 0 * E:1 * E]
        x1i = x[..., 1 * E:2 * E]
        x2r = x[..., 2 * E:3 * E]
        x2i = x[..., 3 * E:4 * E]
        # Assemble the full head row and emit ONE lane-dense store instead of four
        # masked width-E partial stores.
        o = jnp.concatenate([x1r * f0r - x1i * f0i,
                             x1r * f0i + x1i * f0r,
                             x2r * f1r - x2i * f1i,
                             x2r * f1i + x2i * f1r], axis=-1)
        o_ref[...] = o.astype(o_ref.dtype)

    rotate(q_ref, oq_ref)
    rotate(k_ref, ok_ref)


def rotary_2d(qkv4, f0r, f0i, f1r, f1i, *, out_dtype=_COMPUTE_DTYPE, tm=None):
    """2D rotary embedding.  Reads the q and k planes directly out of the fused
    (M, 3, H, Dh) qkv tensor (zero-copy split) with (M, E) frequency tables."""
    M, _, H, Dh = qkv4.shape
    E = Dh // 4
    tm = _pick_tile(M, tm or _BUDGET["tm"], _SUBLANE_ALIGNS)

    def plane_spec(p):
        return pl.BlockSpec((tm, None, H, Dh), lambda i: (i, p, 0, 0))

    f_spec = pl.BlockSpec((tm, E), lambda i: (i, 0))
    out_spec = pl.BlockSpec((tm, H, Dh), lambda i: (i, 0, 0))
    return pl.pallas_call(
        _rotary2d_kernel,
        out_shape=(jax.ShapeDtypeStruct((M, H, Dh), out_dtype),
                   jax.ShapeDtypeStruct((M, H, Dh), out_dtype)),
        grid=(M // tm,),
        in_specs=[plane_spec(0), plane_spec(1), f_spec, f_spec, f_spec, f_spec],
        out_specs=(out_spec, out_spec),
        compiler_params=pltpu.CompilerParams(
            dimension_semantics=("parallel",),
            vmem_limit_bytes=_VMEM_LIMIT),
    )(qkv4, qkv4, f0r, f0i, f1r, f1i)


# ----------------------------- flash attention -------------------------------------

def _make_flash_attn_kernel(sm_scale, use_mask):
    def body(q_ref, k_ref, v_ref, mask_ref, o_ref, m_sc, l_sc, acc_sc):
        ki = pl.program_id(3)

        @pl.when(ki == 0)
        def _():
            m_sc[...] = jnp.full(m_sc.shape, -jnp.inf, m_sc.dtype)
            l_sc[...] = jnp.zeros(l_sc.shape, l_sc.dtype)
            acc_sc[...] = jnp.zeros(acc_sc.shape, acc_sc.dtype)

        # bf16 q/k/v straight from HBM; single folded softmax scale (module's double
        # scaling by layer_idx cancels exactly for 0/-inf masks).
        s = jax.lax.dot_general(q_ref[...], k_ref[...], (((1,), (1,)), ((), ())),
                                preferred_element_type=jnp.float32)
        s = s * sm_scale
        if use_mask:
            s = s + mask_ref[...].astype(jnp.float32)

        m_prev = m_sc[...]
        m_new = jnp.maximum(m_prev, jnp.max(s, axis=-1, keepdims=True))
        a = jnp.exp(m_prev - m_new)
        # TODO(synk): on v6e/v7x the exp could run in bf16 on the EUP (~2x); kept f32
        # for v5e portability.
        p = jnp.exp(s - m_new)
        l_sc[...] = a * l_sc[...] + jnp.sum(p, axis=-1, keepdims=True)
        acc_sc[...] = a * acc_sc[...] + jnp.dot(
            p.astype(_COMPUTE_DTYPE), v_ref[...], preferred_element_type=jnp.float32)
        m_sc[...] = m_new

        @pl.when(ki == pl.num_programs(3) - 1)
        def _():
            o_ref[...] = (acc_sc[...] *
                          pl.reciprocal(l_sc[...], approx=True)).astype(o_ref.dtype)

    if use_mask:
        return body

    def body_nomask(q_ref, k_ref, v_ref, o_ref, m_sc, l_sc, acc_sc):
        body(q_ref, k_ref, v_ref, None, o_ref, m_sc, l_sc, acc_sc)
    return body_nomask


def flash_attention(q, k, v, attn_mask=None, *, tq=None, tkv=None):
    """Online-softmax attention over (B, H, S, Dh).  attn_mask: additive (B, S, S) mask
    (0 / -inf style) or None for no masking (module semantics)."""
    B, H, S, Dh = q.shape
    tq = _pick_tile(S, tq or _BUDGET["tq"], _SUBLANE_ALIGNS)
    tkv = _pick_tile(S, tkv or _BUDGET["tkv"], _LANE_ALIGNS)
    sm_scale = 1.0 / math.sqrt(Dh)
    use_mask = attn_mask is not None

    inputs = [q, k, v]
    in_specs = [
        pl.BlockSpec((None, None, tq, Dh), lambda b, h, qi, ki: (b, h, qi, 0)),
        pl.BlockSpec((None, None, tkv, Dh), lambda b, h, qi, ki: (b, h, ki, 0)),
        pl.BlockSpec((None, None, tkv, Dh), lambda b, h, qi, ki: (b, h, ki, 0)),
    ]
    if use_mask:
        # bf16 mask halves mask HBM traffic (it is re-fetched per head).
        inputs.append(attn_mask.astype(_COMPUTE_DTYPE))
        in_specs.append(pl.BlockSpec((None, tq, tkv),
                                     lambda b, h, qi, ki: (b, qi, ki)))

    return pl.pallas_call(
        _make_flash_attn_kernel(sm_scale, use_mask),
        out_shape=jax.ShapeDtypeStruct((B, H, S, Dh), q.dtype),
        grid=(B, H, S // tq, S // tkv),
        in_specs=in_specs,
        out_specs=pl.BlockSpec((None, None, tq, Dh),
                               lambda b, h, qi, ki: (b, h, qi, 0)),
        scratch_shapes=[pltpu.VMEM((tq, 1), jnp.float32),
                        pltpu.VMEM((tq, 1), jnp.float32),
                        pltpu.VMEM((tq, Dh), jnp.float32)],
        compiler_params=pltpu.CompilerParams(
            dimension_semantics=("parallel", "parallel", "parallel", "arbitrary"),
            vmem_limit_bytes=_VMEM_LIMIT),
    )(*inputs)


# ----------------------------- GLMBlock forward -------------------------------------

def prepare_params(params, n_head):
    """One-time parameter prep: permute qkv columns from per-head-interleaved
    [q_h | k_h | v_h] to [Q | K | V] (head-major inside each) so the q/k/v split after the
    fused matmul is a free reshape, and cast the big weights to bf16 (MXU operand dtype)."""
    D = params["qkv_w"].shape[0]
    d_head = D // n_head
    perm = np.arange(3 * D).reshape(n_head, 3, d_head).transpose(1, 0, 2).reshape(-1)
    p = dict(params)
    p["qkv_w"] = params["qkv_w"][:, perm].astype(_COMPUTE_DTYPE)
    p["qkv_b"] = params["qkv_b"][perm]
    for name in ("o_w", "w_in", "w_out"):
        p[name] = params[name].astype(_COMPUTE_DTYPE)
    return p


def glm_block_forward(x, p, freqs_cis, attn_mask, *, layer_idx, n_layers, n_head, eps):
    del layer_idx  # the module's per-layer double scaling of qk cancels exactly (0/-inf masks)
    B, S, D = x.shape
    Dh = D // n_head
    E = Dh // 4
    M = B * S
    alpha = (2.0 * n_layers) ** 0.5

    # attn_ln: f32 stats, bf16 activation out.
    x_ln = layernorm(x.reshape(M, D), p["attn_ln_g"], p["attn_ln_b"], eps)
    # TODO(synk): attn_ln could be fused into the QKV matmul prologue to save one
    # activation read-back; kept standalone so the K axis stays freely tileable.

    # Fused QKV projection; columns are pre-permuted to [Q | K | V] so this reshape is free
    # and the rotary kernel reads the q/k planes directly (zero-copy split).
    qkv = linear(x_ln, p["qkv_w"], p["qkv_b"])                      # (M, 3D) bf16
    qkv4 = qkv.reshape(M, 3, n_head, Dh)

    (f0_r, f0_i), (f1_r, f1_i) = freqs_cis
    q_rot, k_rot = rotary_2d(qkv4,
                             f0_r.reshape(M, E), f0_i.reshape(M, E),
                             f1_r.reshape(M, E), f1_i.reshape(M, E))
    v = qkv4[:, 2]                                                  # (M, H, Dh) bf16

    k4 = k_rot.reshape(B, S, n_head, Dh)
    v4 = v.reshape(B, S, n_head, Dh)
    # merge_kv_cache with use_past=False: the cache is just the fresh (k, v).
    kv_cache = (k4.astype(x.dtype), v4.astype(x.dtype))

    # TODO(synk): the transposes to (B, H, S, Dh) are still XLA ops; indexing the
    # (B, S, H, Dh) layout directly from the attention BlockSpecs would remove them but
    # needs sublane-unaligned per-head slices, so they are kept for lowering safety.
    qh = q_rot.reshape(B, S, n_head, Dh).transpose(0, 2, 1, 3)
    kh = k4.transpose(0, 2, 1, 3)
    vh = v4.transpose(0, 2, 1, 3)
    ctx = flash_attention(qh, kh, vh, attn_mask)
    ctx2d = ctx.transpose(0, 2, 1, 3).reshape(M, D)
    # TODO(synk): nn.Dropout(rate=0.0) on scores/outputs is an identity and is omitted.

    # o_proj + attention residual + ffn_ln fused: emits x2 directly (no `h` round-trip).
    x2 = matmul_residual_layernorm(ctx2d, p["o_w"], p["o_b"], x_ln, alpha,
                                   p["ffn_ln_g"], p["ffn_ln_b"], eps)

    # FFN: GELU fused into w_in epilogue, final residual fused into w_out epilogue.
    h1 = linear(x2, p["w_in"], p["b_in"], activation="gelu")
    out = linear(h1, p["w_out"], p["b_out"], residual=x2, res_alpha=alpha,
                 out_dtype=x.dtype)

    return out.reshape(B, S, D), kv_cache


# ----------------------------- pure-JAX reference ------------------------------------

def glm_block_reference(x, p, freqs_cis, attn_mask, *, layer_idx, n_layers, n_head, eps):
    B, S, D = x.shape
    Dh = D // n_head
    alpha = (2.0 * n_layers) ** 0.5
    c = float(layer_idx + 1)

    def ln(t, g, b):
        mu = t.mean(-1, keepdims=True)
        var = ((t - mu) ** 2).mean(-1, keepdims=True)
        return (t - mu) / jnp.sqrt(var + eps) * g + b

    def rot(xr, xi, fr, fi):
        fr = fr[:, :, None, :]
        fi = fi[:, :, None, :]
        return jnp.concatenate([xr * fr - xi * fi, xr * fi + xi * fr], -1)

    x_ln = ln(x, p["attn_ln_g"], p["attn_ln_b"])
    qkv = x_ln @ p["qkv_w"] + p["qkv_b"]
    fused = qkv.reshape(B, S, n_head, 3 * Dh)
    q, k, v = jnp.split(fused, 3, -1)
    q1r, q1i, q2r, q2i = jnp.split(q, 4, -1)
    k1r, k1i, k2r, k2i = jnp.split(k, 4, -1)
    (f0r, f0i), (f1r, f1i) = freqs_cis
    q = jnp.concatenate([rot(q1r, q1i, f0r, f0i), rot(q2r, q2i, f1r, f1i)], -1)
    k = jnp.concatenate([rot(k1r, k1i, f0r, f0i), rot(k2r, k2i, f1r, f1i)], -1)
    kv_cache = (k, v)
    qh = q.transpose(0, 2, 1, 3) / (math.sqrt(Dh) * c)
    kh = k.transpose(0, 2, 1, 3)
    vh = v.transpose(0, 2, 1, 3)
    qk = jnp.einsum("bhqd,bhkd->bhqk", qh, kh)
    if attn_mask is not None:
        qk = qk + attn_mask[:, None]
    scores = jax.nn.softmax(qk * c, axis=-1)
    ctx = jnp.einsum("bhqk,bhkd->bhqd", scores, vh).transpose(0, 2, 1, 3).reshape(B, S, D)
    h = ctx @ p["o_w"] + p["o_b"]
    h = x_ln * alpha + h
    x2 = ln(h, p["ffn_ln_g"], p["ffn_ln_b"])
    g = x2 @ p["w_in"] + p["b_in"]
    g = 0.5 * g * (1.0 + jax.scipy.special.erf(g / jnp.sqrt(2.0)))
    h2 = g @ p["w_out"] + p["b_out"]
    out = x2 * alpha + h2
    return out, kv_cache


# ----------------------------- main ---------------------------------------------------

if __name__ == "__main__":
    # Small config consistent with GLMBlock: hidden % (heads*4) == 0.
    B, S = 2, 8
    D, H, INNER = 32, 4, 128
    N_LAYERS, LAYER_IDX, EPS = 28, 0, 1e-5
    Dh = D // H
    E = Dh // 4  # 2d-pe rotary emb dim

    key = jax.random.PRNGKey(0)
    ks = jax.random.split(key, 16)

    def nrm(k, shape, scale):
        return scale * jax.random.normal(k, shape, jnp.float32)

    params = dict(
        attn_ln_g=1.0 + nrm(ks[0], (D,), 0.1),
        attn_ln_b=nrm(ks[1], (D,), 0.1),
        qkv_w=nrm(ks[2], (D, 3 * D), 0.02),
        qkv_b=nrm(ks[3], (3 * D,), 0.02),
        o_w=nrm(ks[4], (D, D), 0.02),
        o_b=nrm(ks[5], (D,), 0.02),
        ffn_ln_g=1.0 + nrm(ks[6], (D,), 0.1),
        ffn_ln_b=nrm(ks[7], (D,), 0.1),
        w_in=nrm(ks[8], (D, INNER), 0.02),
        b_in=nrm(ks[9], (INNER,), 0.02),
        w_out=nrm(ks[10], (INNER, D), 0.02),
        b_out=nrm(ks[11], (D,), 0.02),
    )
    kparams = prepare_params(params, H)   # permuted / bf16 weights for the kernels

    x = jax.random.normal(ks[12], (B, S, D), jnp.float32)

    # deterministic 2D rotary frequency tables: shape (B, S, E) each
    pos = jnp.arange(S, dtype=jnp.float32)
    inv0 = 1.0 / (10000.0 ** (jnp.arange(E, dtype=jnp.float32) / max(E, 1)))
    ang0 = pos[:, None] * inv0[None, :]
    ang1 = pos[:, None] * (0.5 * inv0[None, :])

    def bc(a):
        return jnp.broadcast_to(a[None], (B, S, E)).astype(jnp.float32)

    freqs_cis = ((bc(jnp.cos(ang0)), bc(jnp.sin(ang0))),
                 (bc(jnp.cos(ang1)), bc(jnp.sin(ang1))))

    # attention mask: 0 for visible, large negative for masked (causal), shape (B, S, S)
    causal = jnp.tril(jnp.ones((S, S), jnp.float32))
    attn_mask = jnp.where(causal == 1.0, 0.0, -1e9)
    attn_mask = jnp.broadcast_to(attn_mask[None], (B, S, S)).astype(jnp.float32)

    fwd = jax.jit(functools.partial(
        glm_block_forward, layer_idx=LAYER_IDX, n_layers=N_LAYERS, n_head=H, eps=EPS))
    ref = functools.partial(
        glm_block_reference, layer_idx=LAYER_IDX, n_layers=N_LAYERS, n_head=H, eps=EPS)

    # Path 1: explicit additive (causal) mask — primary module semantics.
    out, (k_cache, v_cache) = fwd(x, kparams, freqs_cis, attn_mask)
    jax.block_until_ready(out)
    jax.block_until_ready(k_cache)
    jax.block_until_ready(v_cache)

    ref_out, (ref_k, ref_v) = ref(x, params, freqs_cis, attn_mask)
    # bf16 activations / MXU operands + tanh-GELU + approx reciprocal => loosened tolerance.
    np.testing.assert_allclose(np.asarray(out), np.asarray(ref_out), rtol=2e-2, atol=2e-2)
    np.testing.assert_allclose(np.asarray(k_cache), np.asarray(ref_k), rtol=2e-2, atol=2e-2)
    np.testing.assert_allclose(np.asarray(v_cache), np.asarray(ref_v), rtol=2e-2, atol=2e-2)

    # Path 2: attention_mask=None (module semantics: no masking at all).
    out_n, (k_n, v_n) = fwd(x, kparams, freqs_cis, None)
    jax.block_until_ready(out_n)
    ref_out_n, (ref_k_n, ref_v_n) = ref(x, params, freqs_cis, None)
    np.testing.assert_allclose(np.asarray(out_n), np.asarray(ref_out_n), rtol=2e-2, atol=2e-2)
    np.testing.assert_allclose(np.asarray(k_n), np.asarray(ref_k_n), rtol=2e-2, atol=2e-2)
    np.testing.assert_allclose(np.asarray(v_n), np.asarray(ref_v_n), rtol=2e-2, atol=2e-2)

    print("KERNEL_OK")
</pallas_src>

<mosaic_0001>
module attributes {stable_mosaic.version = 11 : i64} {
  func.func @kernel(%arg0: i32, %arg1: i32, %arg2: i32, %arg3: memref<16x32xbf16, #tpu.memory_space<vmem>>, %arg4: memref<32x96xbf16, #tpu.memory_space<vmem>>, %arg5: memref<1x96xf32, #tpu.memory_space<vmem>>, %arg6: memref<16x96xbf16, #tpu.memory_space<vmem>>, %arg7: memref<16x96xf32, #tpu.memory_space<vmem>>) attributes {dimension_semantics = [#tpu.dimension_semantics<parallel>, #tpu.dimension_semantics<parallel>, #tpu.dimension_semantics<arbitrary>], iteration_bounds = array<i64: 1, 1, 1>, scalar_prefetch = 0 : i64, scratch_operands = 1 : i64, tpu.core_type = #tpu.core_type<tc>, window_params = [{transform_indices = @transform_0, window_bounds = array<i64: 16, 32>}, {transform_indices = @transform_1, window_bounds = array<i64: 32, 96>}, {transform_indices = @transform_2, window_bounds = array<i64: 1, 96>}, {transform_indices = @transform_3, window_bounds = array<i64: 16, 96>}]} {
    %c0_i32 = arith.constant 0 : i32
    %0 = arith.cmpi eq, %arg2, %c0_i32 : i32
    %1 = arith.extui %0 : i1 to i32
    %c0_i32_0 = arith.constant 0 : i32
    %2 = arith.cmpi ne, %1, %c0_i32_0 : i32
    scf.if %2 {
      %cst_10 = arith.constant 0.000000e+00 : f32
      %12 = vector.broadcast %cst_10 : f32 to vector<16x96xf32>
      %c0_11 = arith.constant 0 : index
      %c0_12 = arith.constant 0 : index
      %13 = vector.load %arg7[%c0_11, %c0_12] : memref<16x96xf32, #tpu.memory_space<vmem>>, vector<16x96xf32>
      tpu.vector_store %arg7[%c0_11, %c0_12], %12 {strides = array<i32>} : memref<16x96xf32, #tpu.memory_space<vmem>>, vector<16x96xf32>,
    } else {
    }
    %c0 = arith.constant 0 : index
    %c0_1 = arith.constant 0 : index
    %3 = vector.load %arg7[%c0, %c0_1] : memref<16x96xf32, #tpu.memory_space<vmem>>, vector<16x96xf32>
    %c0_2 = arith.constant 0 : index
    %c0_3 = arith.constant 0 : index
    %4 = vector.load %arg3[%c0_2, %c0_3] : memref<16x32xbf16, #tpu.memory_space<vmem>>, vector<16x32xbf16>
    %c0_4 = arith.constant 0 : index
    %c0_5 = arith.constant 0 : index
    %5 = vector.load %arg4[%c0_4, %c0_5] : memref<32x96xbf16, #tpu.memory_space<vmem>>, vector<32x96xbf16>
    %cst = arith.constant dense<0.000000e+00> : vector<16x96xf32>
    %6 = tpu.matmul %4, %5, %cst {dimension_numbers = #tpu.dot_dimension_numbers<[1], [0], [0], [1], [0, 0, 1, 1], [], []>} : vector<16x32xbf16>, vector<32x96xbf16>, vector<16x96xf32> -> vector<16x96xf32>
    %7 = arith.addf %3, %6 : vector<16x96xf32>
    %c0_6 = arith.constant 0 : index
    %c0_7 = arith.constant 0 : index
    %8 = vector.load %arg7[%c0_6, %c0_7] : memref<16x96xf32, #tpu.memory_space<vmem>>, vector<16x96xf32>
    tpu.vector_store %arg7[%c0_6, %c0_7], %7 {strides = array<i32>} : memref<16x96xf32, #tpu.memory_space<vmem>>, vector<16x96xf32>,
    %c0_i32_8 = arith.constant 0 : i32
    %9 = arith.cmpi eq, %arg2, %c0_i32_8 : i32
    %10 = arith.extui %9 : i1 to i32
    %c0_i32_9 = arith.constant 0 : i32
    %11 = arith.cmpi ne, %10, %c0_i32_9 : i32
    scf.if %11 {
      %c0_10 = arith.constant 0 : index
      %c0_11 = arith.constant 0 : index
      %12 = vector.load %arg7[%c0_10, %c0_11] : memref<16x96xf32, #tpu.memory_space<vmem>>, vector<16x96xf32>
      %c0_12 = arith.constant 0 : index
      %c0_13 = arith.constant 0 : index
      %13 = vector.load %arg5[%c0_12, %c0_13] : memref<1x96xf32, #tpu.memory_space<vmem>>, vector<1x96xf32>
      %14 = vector.broadcast %13 : vector<1x96xf32> to vector<16x96xf32>
      %15 = arith.addf %12, %14 : vector<16x96xf32>
      %16 = arith.truncf %15 : vector<16x96xf32> to vector<16x96xbf16>
      %c0_14 = arith.constant 0 : index
      %c0_15 = arith.constant 0 : index
      %17 = vector.load %arg6[%c0_14, %c0_15] : memref<16x96xbf16, #tpu.memory_space<vmem>>, vector<16x96xbf16>
      tpu.vector_store %arg6[%c0_14, %c0_15], %16 {strides = array<i32>} : memref<16x96xbf16, #tpu.memory_space<vmem>>, vector<16x96xbf16>,
    } else {
    }
    return
  }
  func.func @transform_0(%arg0: i32, %arg1: i32, %arg2: i32) -> (i32, i32) {
    %c0_i32 = arith.constant 0 : i32
    return %arg0, %arg2 : i32, i32
  }
  func.func @transform_1(%arg0: i32, %arg1: i32, %arg2: i32) -> (i32, i32) {
    %c0_i32 = arith.constant 0 : i32
    return %arg2, %arg1 : i32, i32
  }
  func.func @transform_2(%arg0: i32, %arg1: i32, %arg2: i32) -> (i32, i32) {
    %c0_i32 = arith.constant 0 : i32
    %c0_i32_0 = arith.constant 0 : i32
    return %c0_i32, %arg1 : i32, i32
  }
  func.func @transform_3(%arg0: i32, %arg1: i32, %arg2: i32) -> (i32, i32) {
    %c0_i32 = arith.constant 0 : i32
    return %arg0, %arg1 : i32, i32
  }
}

module attributes {stable_mosaic.version = 11 : i64} {
  func.func @kernel(%arg0: i32, %arg1: memref<16x32xf32, #tpu.memory_space<vmem>>, %arg2: memref<1x32xf32, #tpu.memory_space<vmem>>, %arg3: memref<1x32xf32, #tpu.memory_space<vmem>>, %arg4: memref<16x32xbf16, #tpu.memory_space<vmem>>) attributes {dimension_semantics = [#tpu.dimension_semantics<parallel>], iteration_bounds = array<i64: 1>, scalar_prefetch = 0 : i64, scratch_operands = 0 : i64, tpu.core_type = #tpu.core_type<tc>, window_params = [{transform_indices = @transform_0, window_bounds = array<i64: 16, 32>}, {pipeline_mode = #tpu.pipeline_mode<synchronous>, transform_indices = @transform_1, window_bounds = array<i64: 1, 32>}, {pipeline_mode = #tpu.pipeline_mode<synchronous>, transform_indices = @transform_2, window_bounds = array<i64: 1, 32>}, {transform_indices = @transform_3, window_bounds = array<i64: 16, 32>}]} {
    %c0 = arith.constant 0 : index
    %c0_0 = arith.constant 0 : index
    %0 = vector.load %arg1[%c0, %c0_0] : memref<16x32xf32, #tpu.memory_space<vmem>>, vector<16x32xf32>
    %cst = arith.constant dense<0.000000e+00> : vector<16xf32>
    %1 = vector.multi_reduction <add>, %0, %cst [1] : vector<16x32xf32> to vector<16xf32>
    %2 = vector.shape_cast %1 : vector<16xf32> to vector<16x1xf32>
    %cst_1 = arith.constant 3.200000e+01 : f32
    %3 = vector.broadcast %cst_1 : f32 to vector<16x1xf32>
    %4 = arith.divf %2, %3 : vector<16x1xf32>
    %5 = vector.broadcast %4 : vector<16x1xf32> to vector<16x32xf32>
    %6 = arith.subf %0, %5 : vector<16x32xf32>
    %7 = arith.mulf %6, %6 : vector<16x32xf32>
    %cst_2 = arith.constant dense<0.000000e+00> : vector<16xf32>
    %8 = vector.multi_reduction <add>, %7, %cst_2 [1] : vector<16x32xf32> to vector<16xf32>
    %9 = vector.shape_cast %8 : vector<16xf32> to vector<16x1xf32>
    %cst_3 = arith.constant 3.200000e+01 : f32
    %10 = vector.broadcast %cst_3 : f32 to vector<16x1xf32>
    %11 = arith.divf %9, %10 : vector<16x1xf32>
    %cst_4 = arith.constant 9.99999974E-6 : f32
    %12 = vector.broadcast %cst_4 : f32 to vector<16x1xf32>
    %13 = arith.addf %11, %12 : vector<16x1xf32>
    %14 = math.rsqrt %13 : vector<16x1xf32>
    %15 = vector.broadcast %14 : vector<16x1xf32> to vector<16x32xf32>
    %16 = arith.mulf %6, %15 : vector<16x32xf32>
    %c0_5 = arith.constant 0 : index
    %c0_6 = arith.constant 0 : index
    %17 = vector.load %arg2[%c0_5, %c0_6] : memref<1x32xf32, #tpu.memory_space<vmem>>, vector<1x32xf32>
    %18 = vector.broadcast %17 : vector<1x32xf32> to vector<16x32xf32>
    %19 = arith.mulf %16, %18 : vector<16x32xf32>
    %c0_7 = arith.constant 0 : index
    %c0_8 = arith.constant 0 : index
    %20 = vector.load %arg3[%c0_7, %c0_8] : memref<1x32xf32, #tpu.memory_space<vmem>>, vector<1x32xf32>
    %21 = vector.broadcast %20 : vector<1x32xf32> to vector<16x32xf32>
    %22 = arith.addf %19, %21 : vector<16x32xf32>
    %23 = arith.truncf %22 : vector<16x32xf32> to vector<16x32xbf16>
    %c0_9 = arith.constant 0 : index
    %c0_10 = arith.constant 0 : index
    %24 = vector.load %arg4[%c0_9, %c0_10] : memref<16x32xbf16, #tpu.memory_space<vmem>>, vector<16x32xbf16>
    tpu.vector_store %arg4[%c0_9, %c0_10], %23 {strides = array<i32>} : memref<16x32xbf16, #tpu.memory_space<vmem>>, vector<16x32xbf16>,
    return
  }
  func.func @transform_0(%arg0: i32) -> (i32, i32) {
    %c0_i32 = arith.constant 0 : i32
    %c0_i32_0 = arith.constant 0 : i32
    return %arg0, %c0_i32 : i32, i32
  }
  func.func @transform_1(%arg0: i32) -> (i32, i32) {
    %c0_i32 = arith.constant 0 : i32
    %c0_i32_0 = arith.constant 0 : i32
    %c0_i32_1 = arith.constant 0 : i32
    return %c0_i32, %c0_i32_0 : i32, i32
  }
  func.func @transform_2(%arg0: i32) -> (i32, i32) {
    %c0_i32 = arith.constant 0 : i32
    %c0_i32_0 = arith.constant 0 : i32
    %c0_i32_1 = arith.constant 0 : i32
    return %c0_i32, %c0_i32_0 : i32, i32
  }
  func.func @transform_3(%arg0: i32) -> (i32, i32) {
    %c0_i32 = arith.constant 0 : i32
    %c0_i32_0 = arith.constant 0 : i32
    return %arg0, %c0_i32 : i32, i32
  }
}

module attributes {stable_mosaic.version = 11 : i64} {
  func.func @_rotary2d_kernel(%arg0: i32, %arg1: memref<16x1x4x8xbf16, #tpu.memory_space<vmem>>, %arg2: memref<16x1x4x8xbf16, #tpu.memory_space<vmem>>, %arg3: memref<16x2xf32, #tpu.memory_space<vmem>>, %arg4: memref<16x2xf32, #tpu.memory_space<vmem>>, %arg5: memref<16x2xf32, #tpu.memory_space<vmem>>, %arg6: memref<16x2xf32, #tpu.memory_space<vmem>>, %arg7: memref<16x4x8xbf16, #tpu.memory_space<vmem>>, %arg8: memref<16x4x8xbf16, #tpu.memory_space<vmem>>) attributes {dimension_semantics = [#tpu.dimension_semantics<parallel>], iteration_bounds = array<i64: 1>, scalar_prefetch = 0 : i64, scratch_operands = 0 : i64, tpu.core_type = #tpu.core_type<tc>, window_params = [{transform_indices = @transform_0, window_bounds = array<i64: 16, 1, 4, 8>}, {transform_indices = @transform_1, window_bounds = array<i64: 16, 1, 4, 8>}, {transform_indices = @transform_2, window_bounds = array<i64: 16, 2>}, {transform_indices = @transform_3, window_bounds = array<i64: 16, 2>}, {transform_indices = @transform_4, window_bounds = array<i64: 16, 2>}, {transform_indices = @transform_5, window_bounds = array<i64: 16, 2>}, {transform_indices = @transform_6, window_bounds = array<i64: 16, 4, 8>}, {transform_indices = @transform_7, window_bounds = array<i64: 16, 4, 8>}]} {
    %c0 = arith.constant 0 : index
    %c0_0 = arith.constant 0 : index
    %0 = vector.load %arg3[%c0, %c0_0] : memref<16x2xf32, #tpu.memory_space<vmem>>, vector<16x2xf32>
    %1 = vector.shape_cast %0 : vector<16x2xf32> to vector<16x1x2xf32>
    %c0_1 = arith.constant 0 : index
    %c0_2 = arith.constant 0 : index
    %2 = vector.load %arg4[%c0_1, %c0_2] : memref<16x2xf32, #tpu.memory_space<vmem>>, vector<16x2xf32>
    %3 = vector.shape_cast %2 : vector<16x2xf32> to vector<16x1x2xf32>
    %c0_3 = arith.constant 0 : index
    %c0_4 = arith.constant 0 : index
    %4 = vector.load %arg5[%c0_3, %c0_4] : memref<16x2xf32, #tpu.memory_space<vmem>>, vector<16x2xf32>
    %5 = vector.shape_cast %4 : vector<16x2xf32> to vector<16x1x2xf32>
    %c0_5 = arith.constant 0 : index
    %c0_6 = arith.constant 0 : index
    %6 = vector.load %arg6[%c0_5, %c0_6] : memref<16x2xf32, #tpu.memory_space<vmem>>, vector<16x2xf32>
    %7 = vector.shape_cast %6 : vector<16x2xf32> to vector<16x1x2xf32>
    %c0_7 = arith.constant 0 : index
    %c0_8 = arith.constant 0 : index
    %c0_9 = arith.constant 0 : index
    %c0_10 = arith.constant 0 : index
    %8 = vector.load %arg1[%c0_7, %c0_8, %c0_9, %c0_10] : memref<16x1x4x8xbf16, #tpu.memory_space<vmem>>, vector<16x1x4x8xbf16>
    %9 = vector.shape_cast %8 : vector<16x1x4x8xbf16> to vector<16x4x8xbf16>
    %10 = arith.extf %9 : vector<16x4x8xbf16> to vector<16x4x8xf32>
    %11 = vector.extract_strided_slice %10 {offsets = [0, 0, 0], sizes = [16, 4, 2], strides = [1, 1, 1]} : vector<16x4x8xf32> to vector<16x4x2xf32>
    %12 = vector.extract_strided_slice %10 {offsets = [0, 0, 2], sizes = [16, 4, 2], strides = [1, 1, 1]} : vector<16x4x8xf32> to vector<16x4x2xf32>
    %13 = vector.extract_strided_slice %10 {offsets = [0, 0, 4], sizes = [16, 4, 2], strides = [1, 1, 1]} : vector<16x4x8xf32> to vector<16x4x2xf32>
    %14 = vector.extract_strided_slice %10 {offsets = [0, 0, 6], sizes = [16, 4, 2], strides = [1, 1, 1]} : vector<16x4x8xf32> to vector<16x4x2xf32>
    %15 = vector.broadcast %1 : vector<16x1x2xf32> to vector<16x4x2xf32>
    %16 = arith.mulf %11, %15 : vector<16x4x2xf32>
    %17 = vector.broadcast %3 : vector<16x1x2xf32> to vector<16x4x2xf32>
    %18 = arith.mulf %12, %17 : vector<16x4x2xf32>
    %19 = arith.subf %16, %18 : vector<16x4x2xf32>
    %20 = vector.broadcast %3 : vector<16x1x2xf32> to vector<16x4x2xf32>
    %21 = arith.mulf %11, %20 : vector<16x4x2xf32>
    %22 = vector.broadcast %1 : vector<16x1x2xf32> to vector<16x4x2xf32>
    %23 = arith.mulf %12, %22 : vector<16x4x2xf32>
    %24 = arith.addf %21, %23 : vector<16x4x2xf32>
    %25 = vector.broadcast %5 : vector<16x1x2xf32> to vector<16x4x2xf32>
    %26 = arith.mulf %13, %25 : vector<16x4x2xf32>
    %27 = vector.broadcast %7 : vector<16x1x2xf32> to vector<16x4x2xf32>
    %28 = arith.mulf %14, %27 : vector<16x4x2xf32>
    %29 = arith.subf %26, %28 : vector<16x4x2xf32>
    %30 = vector.broadcast %7 : vector<16x1x2xf32> to vector<16x4x2xf32>
    %31 = arith.mulf %13, %30 : vector<16x4x2xf32>
    %32 = vector.broadcast %5 : vector<16x1x2xf32> to vector<16x4x2xf32>
    %33 = arith.mulf %14, %32 : vector<16x4x2xf32>
    %34 = arith.addf %31, %33 : vector<16x4x2xf32>
    %35 = tpu.concatenate %19, %24, %29, %34 in 2 : vector<16x4x2xf32>, vector<16x4x2xf32>, vector<16x4x2xf32>, vector<16x4x2xf32> -> vector<16x4x8xf32>
    %36 = arith.truncf %35 : vector<16x4x8xf32> to vector<16x4x8xbf16>
    %c0_11 = arith.constant 0 : index
    %c0_12 = arith.constant 0 : index
    %c0_13 = arith.constant 0 : index
    %37 = vector.load %arg7[%c0_11, %c0_12, %c0_13] : memref<16x4x8xbf16, #tpu.memory_space<vmem>>, vector<16x4x8xbf16>
    tpu.vector_store %arg7[%c0_11, %c0_12, %c0_13], %36 {strides = array<i32>} : memref<16x4x8xbf16, #tpu.memory_space<vmem>>, vector<16x4x8xbf16>,
    %c0_14 = arith.constant 0 : index
    %c0_15 = arith.constant 0 : index
    %c0_16 = arith.constant 0 : index
    %c0_17 = arith.constant 0 : index
    %38 = vector.load %arg2[%c0_14, %c0_15, %c0_16, %c0_17] : memref<16x1x4x8xbf16, #tpu.memory_space<vmem>>, vector<16x1x4x8xbf16>
    %39 = vector.shape_cast %38 : vector<16x1x4x8xbf16> to vector<16x4x8xbf16>
    %40 = arith.extf %39 : vector<16x4x8xbf16> to vector<16x4x8xf32>
    %41 = vector.extract_strided_slice %40 {offsets = [0, 0, 0], sizes = [16, 4, 2], strides = [1, 1, 1]} : vector<16x4x8xf32> to vector<16x4x2xf32>
    %42 = vector.extract_strided_slice %40 {offsets = [0, 0, 2], sizes = [16, 4, 2], strides = [1, 1, 1]} : vector<16x4x8xf32> to vector<16x4x2xf32>
    %43 = vector.extract_strided_slice %40 {offsets = [0, 0, 4], sizes = [16, 4, 2], strides = [1, 1, 1]} : vector<16x4x8xf32> to vector<16x4x2xf32>
    %44 = vector.extract_strided_slice %40 {offsets = [0, 0, 6], sizes = [16, 4, 2], strides = [1, 1, 1]} : vector<16x4x8xf32> to vector<16x4x2xf32>
    %45 = vector.broadcast %1 : vector<16x1x2xf32> to vector<16x4x2xf32>
    %46 = arith.mulf %41, %45 : vector<16x4x2xf32>
    %47 = vector.broadcast %3 : vector<16x1x2xf32> to vector<16x4x2xf32>
    %48 = arith.mulf %42, %47 : vector<16x4x2xf32>
    %49 = arith.subf %46, %48 : vector<16x4x2xf32>
    %50 = vector.broadcast %3 : vector<16x1x2xf32> to vector<16x4x2xf32>
    %51 = arith.mulf %41, %50 : vector<16x4x2xf32>
    %52 = vector.broadcast %1 : vector<16x1x2xf32> to vector<16x4x2xf32>
    %53 = arith.mulf %42, %52 : vector<16x4x2xf32>
    %54 = arith.addf %51, %53 : vector<16x4x2xf32>
    %55 = vector.broadcast %5 : vector<16x1x2xf32> to vector<16x4x2xf32>
    %56 = arith.mulf %43, %55 : vector<16x4x2xf32>
    %57 = vector.broadcast %7 : vector<16x1x2xf32> to vector<16x4x2xf32>
    %58 = arith.mulf %44, %57 : vector<16x4x2xf32>
    %59 = arith.subf %56, %58 : vector<16x4x2xf32>
    %60 = vector.broadcast %7 : vector<16x1x2xf32> to vector<16x4x2xf32>
    %61 = arith.mulf %43, %60 : vector<16x4x2xf32>
    %62 = vector.broadcast %5 : vector<16x1x2xf32> to vector<16x4x2xf32>
    %63 = arith.mulf %44, %62 : vector<16x4x2xf32>
    %64 = arith.addf %61, %63 : vector<16x4x2xf32>
    %65 = tpu.concatenate %49, %54, %59, %64 in 2 : vector<16x4x2xf32>, vector<16x4x2xf32>, vector<16x4x2xf32>, vector<16x4x2xf32> -> vector<16x4x8xf32>
    %66 = arith.truncf %65 : vector<16x4x8xf32> to vector<16x4x8xbf16>
    %c0_18 = arith.constant 0 : index
    %c0_19 = arith.constant 0 : index
    %c0_20 = arith.constant 0 : index
    %67 = vector.load %arg8[%c0_18, %c0_19, %c0_20] : memref<16x4x8xbf16, #tpu.memory_space<vmem>>, vector<16x4x8xbf16>
    tpu.vector_store %arg8[%c0_18, %c0_19, %c0_20], %66 {strides = array<i32>} : memref<16x4x8xbf16, #tpu.memory_space<vmem>>, vector<16x4x8xbf16>,
    return
  }
  func.func @transform_0(%arg0: i32) -> (i32, i32, i32, i32) {
    %c0_i32 = arith.constant 0 : i32
    %c0_i32_0 = arith.constant 0 : i32
    %c0_i32_1 = arith.constant 0 : i32
    %c0_i32_2 = arith.constant 0 : i32
    return %arg0, %c0_i32, %c0_i32_0, %c0_i32_1 : i32, i32, i32, i32
  }
  func.func @transform_1(%arg0: i32) -> (i32, i32, i32, i32) {
    %c1_i32 = arith.constant 1 : i32
    %c0_i32 = arith.constant 0 : i32
    %c0_i32_0 = arith.constant 0 : i32
    %c0_i32_1 = arith.constant 0 : i32
    return %arg0, %c1_i32, %c0_i32, %c0_i32_0 : i32, i32, i32, i32
  }
  func.func @transform_2(%arg0: i32) -> (i32, i32) {
    %c0_i32 = arith.constant 0 : i32
    %c0_i32_0 = arith.constant 0 : i32
    return %arg0, %c0_i32 : i32, i32
  }
  func.func @transform_3(%arg0: i32) -> (i32, i32) {
    %c0_i32 = arith.constant 0 : i32
    %c0_i32_0 = arith.constant 0 : i32
    return %arg0, %c0_i32 : i32, i32
  }
  func.func @transform_4(%arg0: i32) -> (i32, i32) {
    %c0_i32 = arith.constant 0 : i32
    %c0_i32_0 = arith.constant 0 : i32
    return %arg0, %c0_i32 : i32, i32
  }
  func.func @transform_5(%arg0: i32) -> (i32, i32) {
    %c0_i32 = arith.constant 0 : i32
    %c0_i32_0 = arith.constant 0 : i32
    return %arg0, %c0_i32 : i32, i32
  }
  func.func @transform_6(%arg0: i32) -> (i32, i32, i32) {
    %c0_i32 = arith.constant 0 : i32
    %c0_i32_0 = arith.constant 0 : i32
    %c0_i32_1 = arith.constant 0 : i32
    return %arg0, %c0_i32, %c0_i32_0 : i32, i32, i32
  }
  func.func @transform_7(%arg0: i32) -> (i32, i32, i32) {
    %c0_i32 = arith.constant 0 : i32
    %c0_i32_0 = arith.constant 0 : i32
    %c0_i32_1 = arith.constant 0 : i32
    return %arg0, %c0_i32, %c0_i32_0 : i32, i32, i32
  }
}

module attributes {stable_mosaic.version = 11 : i64} {
  func.func @kernel(%arg0: i32, %arg1: i32, %arg2: memref<16x32xbf16, #tpu.memory_space<vmem>>, %arg3: memref<32x32xbf16, #tpu.memory_space<vmem>>, %arg4: memref<1x32xf32, #tpu.memory_space<vmem>>, %arg5: memref<16x32xbf16, #tpu.memory_space<vmem>>, %arg6: memref<1x32xf32, #tpu.memory_space<vmem>>, %arg7: memref<1x32xf32, #tpu.memory_space<vmem>>, %arg8: memref<16x32xbf16, #tpu.memory_space<vmem>>, %arg9: memref<16x32xf32, #tpu.memory_space<vmem>>) attributes {dimension_semantics = [#tpu.dimension_semantics<parallel>, #tpu.dimension_semantics<arbitrary>], iteration_bounds = array<i64: 1, 1>, scalar_prefetch = 0 : i64, scratch_operands = 1 : i64, tpu.core_type = #tpu.core_type<tc>, window_params = [{transform_indices = @transform_0, window_bounds = array<i64: 16, 32>}, {transform_indices = @transform_1, window_bounds = array<i64: 32, 32>}, {pipeline_mode = #tpu.pipeline_mode<synchronous>, transform_indices = @transform_2, window_bounds = array<i64: 1, 32>}, {transform_indices = @transform_3, window_bounds = array<i64: 16, 32>}, {pipeline_mode = #tpu.pipeline_mode<synchronous>, transform_indices = @transform_4, window_bounds = array<i64: 1, 32>}, {pipeline_mode = #tpu.pipeline_mode<synchronous>, transform_indices = @transform_5, window_bounds = array<i64: 1, 32>}, {transform_indices = @transform_6, window_bounds = array<i64: 16, 32>}]} {
    %c0_i32 = arith.constant 0 : i32
    %0 = arith.cmpi eq, %arg1, %c0_i32 : i32
    %1 = arith.extui %0 : i1 to i32
    %c0_i32_0 = arith.constant 0 : i32
    %2 = arith.cmpi ne, %1, %c0_i32_0 : i32
    scf.if %2 {
      %cst_10 = arith.constant 0.000000e+00 : f32
      %12 = vector.broadcast %cst_10 : f32 to vector<16x32xf32>
      %c0_11 = arith.constant 0 : index
      %c0_12 = arith.constant 0 : index
      %13 = vector.load %arg9[%c0_11, %c0_12] : memref<16x32xf32, #tpu.memory_space<vmem>>, vector<16x32xf32>
      tpu.vector_store %arg9[%c0_11, %c0_12], %12 {strides = array<i32>} : memref<16x32xf32, #tpu.memory_space<vmem>>, vector<16x32xf32>,
    } else {
    }
    %c0 = arith.constant 0 : index
    %c0_1 = arith.constant 0 : index
    %3 = vector.load %arg9[%c0, %c0_1] : memref<16x32xf32, #tpu.memory_space<vmem>>, vector<16x32xf32>
    %c0_2 = arith.constant 0 : index
    %c0_3 = arith.constant 0 : index
    %4 = vector.load %arg2[%c0_2, %c0_3] : memref<16x32xbf16, #tpu.memory_space<vmem>>, vector<16x32xbf16>
    %c0_4 = arith.constant 0 : index
    %c0_5 = arith.constant 0 : index
    %5 = vector.load %arg3[%c0_4, %c0_5] : memref<32x32xbf16, #tpu.memory_space<vmem>>, vector<32x32xbf16>
    %cst = arith.constant dense<0.000000e+00> : vector<16x32xf32>
    %6 = tpu.matmul %4, %5, %cst {dimension_numbers = #tpu.dot_dimension_numbers<[1], [0], [0], [1], [0, 0, 1, 1], [], []>} : vector<16x32xbf16>, vector<32x32xbf16>, vector<16x32xf32> -> vector<16x32xf32>
    %7 = arith.addf %3, %6 : vector<16x32xf32>
    %c0_6 = arith.constant 0 : index
    %c0_7 = arith.constant 0 : index
    %8 = vector.load %arg9[%c0_6, %c0_7] : memref<16x32xf32, #tpu.memory_space<vmem>>, vector<16x32xf32>
    tpu.vector_store %arg9[%c0_6, %c0_7], %7 {strides = array<i32>} : memref<16x32xf32, #tpu.memory_space<vmem>>, vector<16x32xf32>,
    %c0_i32_8 = arith.constant 0 : i32
    %9 = arith.cmpi eq, %arg1, %c0_i32_8 : i32
    %10 = arith.extui %9 : i1 to i32
    %c0_i32_9 = arith.constant 0 : i32
    %11 = arith.cmpi ne, %10, %c0_i32_9 : i32
    scf.if %11 {
      %c0_10 = arith.constant 0 : index
      %c0_11 = arith.constant 0 : index
      %12 = vector.load %arg5[%c0_10, %c0_11] : memref<16x32xbf16, #tpu.memory_space<vmem>>, vector<16x32xbf16>
      %13 = arith.extf %12 : vector<16x32xbf16> to vector<16x32xf32>
      %cst_12 = arith.constant 7.48331499 : f32
      %14 = vector.broadcast %cst_12 : f32 to vector<16x32xf32>
      %15 = arith.mulf %13, %14 : vector<16x32xf32>
      %c0_13 = arith.constant 0 : index
      %c0_14 = arith.constant 0 : index
      %16 = vector.load %arg9[%c0_13, %c0_14] : memref<16x32xf32, #tpu.memory_space<vmem>>, vector<16x32xf32>
      %17 = arith.addf %15, %16 : vector<16x32xf32>
      %c0_15 = arith.constant 0 : index
      %c0_16 = arith.constant 0 : index
      %18 = vector.load %arg4[%c0_15, %c0_16] : memref<1x32xf32, #tpu.memory_space<vmem>>, vector<1x32xf32>
      %19 = vector.broadcast %18 : vector<1x32xf32> to vector<16x32xf32>
      %20 = arith.addf %17, %19 : vector<16x32xf32>
      %cst_17 = arith.constant dense<0.000000e+00> : vector<16xf32>
      %21 = vector.multi_reduction <add>, %20, %cst_17 [1] : vector<16x32xf32> to vector<16xf32>
      %22 = vector.shape_cast %21 : vector<16xf32> to vector<16x1xf32>
      %cst_18 = arith.constant 3.200000e+01 : f32
      %23 = vector.broadcast %cst_18 : f32 to vector<16x1xf32>
      %24 = arith.divf %22, %23 : vector<16x1xf32>
      %25 = vector.broadcast %24 : vector<16x1xf32> to vector<16x32xf32>
      %26 = arith.subf %20, %25 : vector<16x32xf32>
      %27 = arith.mulf %26, %26 : vector<16x32xf32>
      %cst_19 = arith.constant dense<0.000000e+00> : vector<16xf32>
      %28 = vector.multi_reduction <add>, %27, %cst_19 [1] : vector<16x32xf32> to vector<16xf32>
      %29 = vector.shape_cast %28 : vector<16xf32> to vector<16x1xf32>
      %cst_20 = arith.constant 3.200000e+01 : f32
      %30 = vector.broadcast %cst_20 : f32 to vector<16x1xf32>
      %31 = arith.divf %29, %30 : vector<16x1xf32>
      %cst_21 = arith.constant 9.99999974E-6 : f32
      %32 = vector.broadcast %cst_21 : f32 to vector<16x1xf32>
      %33 = arith.addf %31, %32 : vector<16x1xf32>
      %34 = math.rsqrt %33 : vector<16x1xf32>
      %35 = vector.broadcast %34 : vector<16x1xf32> to vector<16x32xf32>
      %36 = arith.mulf %26, %35 : vector<16x32xf32>
      %c0_22 = arith.constant 0 : index
      %c0_23 = arith.constant 0 : index
      %37 = vector.load %arg6[%c0_22, %c0_23] : memref<1x32xf32, #tpu.memory_space<vmem>>, vector<1x32xf32>
      %38 = vector.broadcast %37 : vector<1x32xf32> to vector<16x32xf32>
      %39 = arith.mulf %36, %38 : vector<16x32xf32>
      %c0_24 = arith.constant 0 : index
      %c0_25 = arith.constant 0 : index
      %40 = vector.load %arg7[%c0_24, %c0_25] : memref<1x32xf32, #tpu.memory_space<vmem>>, vector<1x32xf32>
      %41 = vector.broadcast %40 : vector<1x32xf32> to vector<16x32xf32>
      %42 = arith.addf %39, %41 : vector<16x32xf32>
      %43 = arith.truncf %42 : vector<16x32xf32> to vector<16x32xbf16>
      %c0_26 = arith.constant 0 : index
      %c0_27 = arith.constant 0 : index
      %44 = vector.load %arg8[%c0_26, %c0_27] : memref<16x32xbf16, #tpu.memory_space<vmem>>, vector<16x32xbf16>
      tpu.vector_store %arg8[%c0_26, %c0_27], %43 {strides = array<i32>} : memref<16x32xbf16, #tpu.memory_space<vmem>>, vector<16x32xbf16>,
    } else {
    }
    return
  }
  func.func @transform_0(%arg0: i32, %arg1: i32) -> (i32, i32) {
    %c0_i32 = arith.constant 0 : i32
    return %arg0, %arg1 : i32, i32
  }
  func.func @transform_1(%arg0: i32, %arg1: i32) -> (i32, i32) {
    %c0_i32 = arith.constant 0 : i32
    %c0_i32_0 = arith.constant 0 : i32
    return %arg1, %c0_i32 : i32, i32
  }
  func.func @transform_2(%arg0: i32, %arg1: i32) -> (i32, i32) {
    %c0_i32 = arith.constant 0 : i32
    %c0_i32_0 = arith.constant 0 : i32
    %c0_i32_1 = arith.constant 0 : i32
    return %c0_i32, %c0_i32_0 : i32, i32
  }
  func.func @transform_3(%arg0: i32, %arg1: i32) -> (i32, i32) {
    %c0_i32 = arith.constant 0 : i32
    %c0_i32_0 = arith.constant 0 : i32
    return %arg0, %c0_i32 : i32, i32
  }
  func.func @transform_4(%arg0: i32, %arg1: i32) -> (i32, i32) {
    %c0_i32 = arith.constant 0 : i32
    %c0_i32_0 = arith.constant 0 : i32
    %c0_i32_1 = arith.constant 0 : i32
    return %c0_i32, %c0_i32_0 : i32, i32
  }
  func.func @transform_5(%arg0: i32, %arg1: i32) -> (i32, i32) {
    %c0_i32 = arith.constant 0 : i32
    %c0_i32_0 = arith.constant 0 : i32
    %c0_i32_1 = arith.constant 0 : i32
    return %c0_i32, %c0_i32_0 : i32, i32
  }
  func.func @transform_6(%arg0: i32, %arg1: i32) -> (i32, i32) {
    %c0_i32 = arith.constant 0 : i32
    %c0_i32_0 = arith.constant 0 : i32
    return %arg0, %c0_i32 : i32, i32
  }
}

module attributes {stable_mosaic.version = 11 : i64} {
  func.func @body(%arg0: i32, %arg1: i32, %arg2: i32, %arg3: i32, %arg4: memref<1x1x8x8xbf16, #tpu.memory_space<vmem>>, %arg5: memref<1x1x8x8xbf16, #tpu.memory_space<vmem>>, %arg6: memref<1x1x8x8xbf16, #tpu.memory_space<vmem>>, %arg7: memref<1x8x8xbf16, #tpu.memory_space<vmem>>, %arg8: memref<1x1x8x8xbf16, #tpu.memory_space<vmem>>, %arg9: memref<8x1xf32, #tpu.memory_space<vmem>>, %arg10: memref<8x1xf32, #tpu.memory_space<vmem>>, %arg11: memref<8x8xf32, #tpu.memory_space<vmem>>) attributes {dimension_semantics = [#tpu.dimension_semantics<parallel>, #tpu.dimension_semantics<parallel>, #tpu.dimension_semantics<parallel>, #tpu.dimension_semantics<arbitrary>], iteration_bounds = array<i64: 2, 4, 1, 1>, scalar_prefetch = 0 : i64, scratch_operands = 3 : i64, tpu.core_type = #tpu.core_type<tc>, window_params = [{transform_indices = @transform_0, window_bounds = array<i64: 1, 1, 8, 8>}, {transform_indices = @transform_1, window_bounds = array<i64: 1, 1, 8, 8>}, {transform_indices = @transform_2, window_bounds = array<i64: 1, 1, 8, 8>}, {transform_indices = @transform_3, window_bounds = array<i64: 1, 8, 8>}, {transform_indices = @transform_4, window_bounds = array<i64: 1, 1, 8, 8>}]} {
    %c0_i32 = arith.constant 0 : i32
    %0 = arith.cmpi eq, %arg3, %c0_i32 : i32
    %1 = arith.extui %0 : i1 to i32
    %c0_i32_0 = arith.constant 0 : i32
    %2 = arith.cmpi ne, %1, %c0_i32_0 : i32
    scf.if %2 {
      %cst_33 = arith.constant 0xFF800000 : f32
      %42 = vector.broadcast %cst_33 : f32 to vector<8x1xf32>
      %c0_34 = arith.constant 0 : index
      %c0_35 = arith.constant 0 : index
      %43 = vector.load %arg9[%c0_34, %c0_35] : memref<8x1xf32, #tpu.memory_space<vmem>>, vector<8x1xf32>
      tpu.vector_store %arg9[%c0_34, %c0_35], %42 {strides = array<i32>} : memref<8x1xf32, #tpu.memory_space<vmem>>, vector<8x1xf32>,
      %cst_36 = arith.constant 0.000000e+00 : f32
      %44 = vector.broadcast %cst_36 : f32 to vector<8x1xf32>
      %c0_37 = arith.constant 0 : index
      %c0_38 = arith.constant 0 : index
      %45 = vector.load %arg10[%c0_37, %c0_38] : memref<8x1xf32, #tpu.memory_space<vmem>>, vector<8x1xf32>
      tpu.vector_store %arg10[%c0_37, %c0_38], %44 {strides = array<i32>} : memref<8x1xf32, #tpu.memory_space<vmem>>, vector<8x1xf32>,
      %cst_39 = arith.constant 0.000000e+00 : f32
      %46 = vector.broadcast %cst_39 : f32 to vector<8x8xf32>
      %c0_40 = arith.constant 0 : index
      %c0_41 = arith.constant 0 : index
      %47 = vector.load %arg11[%c0_40, %c0_41] : memref<8x8xf32, #tpu.memory_space<vmem>>, vector<8x8xf32>
      tpu.vector_store %arg11[%c0_40, %c0_41], %46 {strides = array<i32>} : memref<8x8xf32, #tpu.memory_space<vmem>>, vector<8x8xf32>,
    } else {
    }
    %c0 = arith.constant 0 : index
    %c0_1 = arith.constant 0 : index
    %c0_2 = arith.constant 0 : index
    %c0_3 = arith.constant 0 : index
    %3 = vector.load %arg4[%c0, %c0_1, %c0_2, %c0_3] : memref<1x1x8x8xbf16, #tpu.memory_space<vmem>>, vector<1x1x8x8xbf16>
    %4 = vector.shape_cast %3 : vector<1x1x8x8xbf16> to vector<8x8xbf16>
    %c0_4 = arith.constant 0 : index
    %c0_5 = arith.constant 0 : index
    %c0_6 = arith.constant 0 : index
    %c0_7 = arith.constant 0 : index
    %5 = vector.load %arg5[%c0_4, %c0_5, %c0_6, %c0_7] : memref<1x1x8x8xbf16, #tpu.memory_space<vmem>>, vector<1x1x8x8xbf16>
    %6 = vector.shape_cast %5 : vector<1x1x8x8xbf16> to vector<8x8xbf16>
    %cst = arith.constant dense<0.000000e+00> : vector<8x8xf32>
    %7 = tpu.matmul %4, %6, %cst {dimension_numbers = #tpu.dot_dimension_numbers<[1], [1], [0], [0], [0, 0, 1, 0], [], []>} : vector<8x8xbf16>, vector<8x8xbf16>, vector<8x8xf32> -> vector<8x8xf32>
    %cst_8 = arith.constant 0.353553385 : f32
    %8 = vector.broadcast %cst_8 : f32 to vector<8x8xf32>
    %9 = arith.mulf %7, %8 : vector<8x8xf32>
    %c0_9 = arith.constant 0 : index
    %c0_10 = arith.constant 0 : index
    %c0_11 = arith.constant 0 : index
    %10 = vector.load %arg7[%c0_9, %c0_10, %c0_11] : memref<1x8x8xbf16, #tpu.memory_space<vmem>>, vector<1x8x8xbf16>
    %11 = vector.shape_cast %10 : vector<1x8x8xbf16> to vector<8x8xbf16>
    %12 = arith.extf %11 : vector<8x8xbf16> to vector<8x8xf32>
    %13 = arith.addf %9, %12 : vector<8x8xf32>
    %c0_12 = arith.constant 0 : index
    %c0_13 = arith.constant 0 : index
    %14 = vector.load %arg9[%c0_12, %c0_13] : memref<8x1xf32, #tpu.memory_space<vmem>>, vector<8x1xf32>
    %cst_14 = arith.constant dense<0xFF800000> : vector<8xf32>
    %15 = vector.multi_reduction <maximumf>, %13, %cst_14 [1] : vector<8x8xf32> to vector<8xf32>
    %16 = vector.shape_cast %15 : vector<8xf32> to vector<8x1xf32>
    %17 = arith.maximumf %14, %16 : vector<8x1xf32>
    %18 = arith.subf %14, %17 : vector<8x1xf32>
    %19 = math.exp %18 : vector<8x1xf32>
    %20 = vector.broadcast %17 : vector<8x1xf32> to vector<8x8xf32>
    %21 = arith.subf %13, %20 : vector<8x8xf32>
    %22 = math.exp %21 : vector<8x8xf32>
    %c0_15 = arith.constant 0 : index
    %c0_16 = arith.constant 0 : index
    %23 = vector.load %arg10[%c0_15, %c0_16] : memref<8x1xf32, #tpu.memory_space<vmem>>, vector<8x1xf32>
    %24 = arith.mulf %19, %23 : vector<8x1xf32>
    %cst_17 = arith.constant dense<0.000000e+00> : vector<8xf32>
    %25 = vector.multi_reduction <add>, %22, %cst_17 [1] : vector<8x8xf32> to vector<8xf32>
    %26 = vector.shape_cast %25 : vector<8xf32> to vector<8x1xf32>
    %27 = arith.addf %24, %26 : vector<8x1xf32>
    %c0_18 = arith.constant 0 : index
    %c0_19 = arith.constant 0 : index
    %28 = vector.load %arg10[%c0_18, %c0_19] : memref<8x1xf32, #tpu.memory_space<vmem>>, vector<8x1xf32>
    tpu.vector_store %arg10[%c0_18, %c0_19], %27 {strides = array<i32>} : memref<8x1xf32, #tpu.memory_space<vmem>>, vector<8x1xf32>,
    %c0_20 = arith.constant 0 : index
    %c0_21 = arith.constant 0 : index
    %29 = vector.load %arg11[%c0_20, %c0_21] : memref<8x8xf32, #tpu.memory_space<vmem>>, vector<8x8xf32>
    %30 = vector.broadcast %19 : vector<8x1xf32> to vector<8x8xf32>
    %31 = arith.mulf %30, %29 : vector<8x8xf32>
    %32 = arith.truncf %22 : vector<8x8xf32> to vector<8x8xbf16>
    %c0_22 = arith.constant 0 : index
    %c0_23 = arith.constant 0 : index
    %c0_24 = arith.constant 0 : index
    %c0_25 = arith.constant 0 : index
    %33 = vector.load %arg6[%c0_22, %c0_23, %c0_24, %c0_25] : memref<1x1x8x8xbf16, #tpu.memory_space<vmem>>, vector<1x1x8x8xbf16>
    %34 = vector.shape_cast %33 : vector<1x1x8x8xbf16> to vector<8x8xbf16>
    %cst_26 = arith.constant dense<0.000000e+00> : vector<8x8xf32>
    %35 = tpu.matmul %32, %34, %cst_26 {dimension_numbers = #tpu.dot_dimension_numbers<[1], [0], [0], [1], [0, 0, 1, 1], [], []>} : vector<8x8xbf16>, vector<8x8xbf16>, vector<8x8xf32> -> vector<8x8xf32>
    %36 = arith.addf %31, %35 : vector<8x8xf32>
    %c0_27 = arith.constant 0 : index
    %c0_28 = arith.constant 0 : index
    %37 = vector.load %arg11[%c0_27, %c0_28] : memref<8x8xf32, #tpu.memory_space<vmem>>, vector<8x8xf32>
    tpu.vector_store %arg11[%c0_27, %c0_28], %36 {strides = array<i32>} : memref<8x8xf32, #tpu.memory_space<vmem>>, vector<8x8xf32>,
    %c0_29 = arith.constant 0 : index
    %c0_30 = arith.constant 0 : index
    %38 = vector.load %arg9[%c0_29, %c0_30] : memref<8x1xf32, #tpu.memory_space<vmem>>, vector<8x1xf32>
    tpu.vector_store %arg9[%c0_29, %c0_30], %17 {strides = array<i32>} : memref<8x1xf32, #tpu.memory_space<vmem>>, vector<8x1xf32>,
    %c0_i32_31 = arith.constant 0 : i32
    %39 = arith.cmpi eq, %arg3, %c0_i32_31 : i32
    %40 = arith.extui %39 : i1 to i32
    %c0_i32_32 = arith.constant 0 : i32
    %41 = arith.cmpi ne, %40, %c0_i32_32 : i32
    scf.if %41 {
      %c0_33 = arith.constant 0 : index
      %c0_34 = arith.constant 0 : index
      %42 = vector.load %arg11[%c0_33, %c0_34] : memref<8x8xf32, #tpu.memory_space<vmem>>, vector<8x8xf32>
      %c0_35 = arith.constant 0 : index
      %c0_36 = arith.constant 0 : index
      %43 = vector.load %arg10[%c0_35, %c0_36] : memref<8x1xf32, #tpu.memory_space<vmem>>, vector<8x1xf32>
      %44 = tpu.reciprocal %43 {approx = true} : vector<8x1xf32> -> vector<8x1xf32>
      %45 = vector.broadcast %44 : vector<8x1xf32> to vector<8x8xf32>
      %46 = arith.mulf %42, %45 : vector<8x8xf32>
      %47 = arith.truncf %46 : vector<8x8xf32> to vector<8x8xbf16>
      %c0_37 = arith.constant 0 : index
      %c0_38 = arith.constant 0 : index
      %c0_39 = arith.constant 0 : index
      %c0_40 = arith.constant 0 : index
      %48 = vector.load %arg8[%c0_37, %c0_38, %c0_39, %c0_40] : memref<1x1x8x8xbf16, #tpu.memory_space<vmem>>, vector<1x1x8x8xbf16>
      %49 = vector.shape_cast %48 : vector<1x1x8x8xbf16> to vector<8x8xbf16>
      %50 = vector.shape_cast %47 : vector<8x8xbf16> to vector<1x1x8x8xbf16>
      tpu.vector_store %arg8[%c0_37, %c0_38, %c0_39, %c0_40], %50 {strides = array<i32>} : memref<1x1x8x8xbf16, #tpu.memory_space<vmem>>, vector<1x1x8x8xbf16>,
    } else {
    }
    return
  }
  func.func @transform_0(%arg0: i32, %arg1: i32, %arg2: i32, %arg3: i32) -> (i32, i32, i32, i32) {
    %c0_i32 = arith.constant 0 : i32
    %c0_i32_0 = arith.constant 0 : i32
    return %arg0, %arg1, %arg2, %c0_i32 : i32, i32, i32, i32
  }
  func.func @transform_1(%arg0: i32, %arg1: i32, %arg2: i32, %arg3: i32) -> (i32, i32, i32, i32) {
    %c0_i32 = arith.constant 0 : i32
    %c0_i32_0 = arith.constant 0 : i32
    return %arg0, %arg1, %arg3, %c0_i32 : i32, i32, i32, i32
  }
  func.func @transform_2(%arg0: i32, %arg1: i32, %arg2: i32, %arg3: i32) -> (i32, i32, i32, i32) {
    %c0_i32 = arith.constant 0 : i32
    %c0_i32_0 = arith.constant 0 : i32
    return %arg0, %arg1, %arg3, %c0_i32 : i32, i32, i32, i32
  }
  func.func @transform_3(%arg0: i32, %arg1: i32, %arg2: i32, %arg3: i32) -> (i32, i32, i32) {
    %c0_i32 = arith.constant 0 : i32
    return %arg0, %arg2, %arg3 : i32, i32, i32
  }
  func.func @transform_4(%arg0: i32, %arg1: i32, %arg2: i32, %arg3: i32) -> (i32, i32, i32, i32) {
    %c0_i32 = arith.constant 0 : i32
    %c0_i32_0 = arith.constant 0 : i32
    return %arg0, %arg1, %arg2, %c0_i32 : i32, i32, i32, i32
  }
}

module attributes {stable_mosaic.version = 11 : i64} {
  func.func @kernel(%arg0: i32, %arg1: i32, %arg2: i32, %arg3: memref<16x32xbf16, #tpu.memory_space<vmem>>, %arg4: memref<32x128xbf16, #tpu.memory_space<vmem>>, %arg5: memref<1x128xf32, #tpu.memory_space<vmem>>, %arg6: memref<16x128xbf16, #tpu.memory_space<vmem>>, %arg7: memref<16x128xf32, #tpu.memory_space<vmem>>) attributes {dimension_semantics = [#tpu.dimension_semantics<parallel>, #tpu.dimension_semantics<parallel>, #tpu.dimension_semantics<arbitrary>], iteration_bounds = array<i64: 1, 1, 1>, scalar_prefetch = 0 : i64, scratch_operands = 1 : i64, tpu.core_type = #tpu.core_type<tc>, window_params = [{transform_indices = @transform_0, window_bounds = array<i64: 16, 32>}, {transform_indices = @transform_1, window_bounds = array<i64: 32, 128>}, {transform_indices = @transform_2, window_bounds = array<i64: 1, 128>}, {transform_indices = @transform_3, window_bounds = array<i64: 16, 128>}]} {
    %c0_i32 = arith.constant 0 : i32
    %0 = arith.cmpi eq, %arg2, %c0_i32 : i32
    %1 = arith.extui %0 : i1 to i32
    %c0_i32_0 = arith.constant 0 : i32
    %2 = arith.cmpi ne, %1, %c0_i32_0 : i32
    scf.if %2 {
      %cst_10 = arith.constant 0.000000e+00 : f32
      %12 = vector.broadcast %cst_10 : f32 to vector<16x128xf32>
      %c0_11 = arith.constant 0 : index
      %c0_12 = arith.constant 0 : index
      %13 = vector.load %arg7[%c0_11, %c0_12] : memref<16x128xf32, #tpu.memory_space<vmem>>, vector<16x128xf32>
      tpu.vector_store %arg7[%c0_11, %c0_12], %12 {strides = array<i32>} : memref<16x128xf32, #tpu.memory_space<vmem>>, vector<16x128xf32>,
    } else {
    }
    %c0 = arith.constant 0 : index
    %c0_1 = arith.constant 0 : index
    %3 = vector.load %arg7[%c0, %c0_1] : memref<16x128xf32, #tpu.memory_space<vmem>>, vector<16x128xf32>
    %c0_2 = arith.constant 0 : index
    %c0_3 = arith.constant 0 : index
    %4 = vector.load %arg3[%c0_2, %c0_3] : memref<16x32xbf16, #tpu.memory_space<vmem>>, vector<16x32xbf16>
    %c0_4 = arith.constant 0 : index
    %c0_5 = arith.constant 0 : index
    %5 = vector.load %arg4[%c0_4, %c0_5] : memref<32x128xbf16, #tpu.memory_space<vmem>>, vector<32x128xbf16>
    %cst = arith.constant dense<0.000000e+00> : vector<16x128xf32>
    %6 = tpu.matmul %4, %5, %cst {dimension_numbers = #tpu.dot_dimension_numbers<[1], [0], [0], [1], [0, 0, 1, 1], [], []>} : vector<16x32xbf16>, vector<32x128xbf16>, vector<16x128xf32> -> vector<16x128xf32>
    %7 = arith.addf %3, %6 : vector<16x128xf32>
    %c0_6 = arith.constant 0 : index
    %c0_7 = arith.constant 0 : index
    %8 = vector.load %arg7[%c0_6, %c0_7] : memref<16x128xf32, #tpu.memory_space<vmem>>, vector<16x128xf32>
    tpu.vector_store %arg7[%c0_6, %c0_7], %7 {strides = array<i32>} : memref<16x128xf32, #tpu.memory_space<vmem>>, vector<16x128xf32>,
    %c0_i32_8 = arith.constant 0 : i32
    %9 = arith.cmpi eq, %arg2, %c0_i32_8 : i32
    %10 = arith.extui %9 : i1 to i32
    %c0_i32_9 = arith.constant 0 : i32
    %11 = arith.cmpi ne, %10, %c0_i32_9 : i32
    scf.if %11 {
      %c0_10 = arith.constant 0 : index
      %c0_11 = arith.constant 0 : index
      %12 = vector.load %arg7[%c0_10, %c0_11] : memref<16x128xf32, #tpu.memory_space<vmem>>, vector<16x128xf32>
      %c0_12 = arith.constant 0 : index
      %c0_13 = arith.constant 0 : index
      %13 = vector.load %arg5[%c0_12, %c0_13] : memref<1x128xf32, #tpu.memory_space<vmem>>, vector<1x128xf32>
      %14 = vector.broadcast %13 : vector<1x128xf32> to vector<16x128xf32>
      %15 = arith.addf %12, %14 : vector<16x128xf32>
      %cst_14 = arith.constant 5.000000e-01 : f32
      %16 = vector.broadcast %cst_14 : f32 to vector<16x128xf32>
      %17 = arith.mulf %16, %15 : vector<16x128xf32>
      %cst_15 = arith.constant 4.471500e-02 : f32
      %18 = vector.broadcast %cst_15 : f32 to vector<16x128xf32>
      %19 = arith.mulf %18, %15 : vector<16x128xf32>
      %20 = arith.mulf %19, %15 : vector<16x128xf32>
      %21 = arith.mulf %20, %15 : vector<16x128xf32>
      %22 = arith.addf %15, %21 : vector<16x128xf32>
      %cst_16 = arith.constant 0.797884583 : f32
      %23 = vector.broadcast %cst_16 : f32 to vector<16x128xf32>
      %24 = arith.mulf %23, %22 : vector<16x128xf32>
      %25 = math.tanh %24 : vector<16x128xf32>
      %cst_17 = arith.constant 1.000000e+00 : f32
      %26 = vector.broadcast %cst_17 : f32 to vector<16x128xf32>
      %27 = arith.addf %26, %25 : vector<16x128xf32>
      %28 = arith.mulf %17, %27 : vector<16x128xf32>
      %29 = arith.truncf %28 : vector<16x128xf32> to vector<16x128xbf16>
      %c0_18 = arith.constant 0 : index
      %c0_19 = arith.constant 0 : index
      %30 = vector.load %arg6[%c0_18, %c0_19] : memref<16x128xbf16, #tpu.memory_space<vmem>>, vector<16x128xbf16>
      tpu.vector_store %arg6[%c0_18, %c0_19], %29 {strides = array<i32>} : memref<16x128xbf16, #tpu.memory_space<vmem>>, vector<16x128xbf16>,
    } else {
    }
    return
  }
  func.func @transform_0(%arg0: i32, %arg1: i32, %arg2: i32) -> (i32, i32) {
    %c0_i32 = arith.constant 0 : i32
    return %arg0, %arg2 : i32, i32
  }
  func.func @transform_1(%arg0: i32, %arg1: i32, %arg2: i32) -> (i32, i32) {
    %c0_i32 = arith.constant 0 : i32
    return %arg2, %arg1 : i32, i32
  }
  func.func @transform_2(%arg0: i32, %arg1: i32, %arg2: i32) -> (i32, i32) {
    %c0_i32 = arith.constant 0 : i32
    %c0_i32_0 = arith.constant 0 : i32
    return %c0_i32, %arg1 : i32, i32
  }
  func.func @transform_3(%arg0: i32, %arg1: i32, %arg2: i32) -> (i32, i32) {
    %c0_i32 = arith.constant 0 : i32
    return %arg0, %arg1 : i32, i32
  }
}

module attributes {stable_mosaic.version = 11 : i64} {
  func.func @kernel(%arg0: i32, %arg1: i32, %arg2: i32, %arg3: memref<16x128xbf16, #tpu.memory_space<vmem>>, %arg4: memref<128x32xbf16, #tpu.memory_space<vmem>>, %arg5: memref<1x32xf32, #tpu.memory_space<vmem>>, %arg6: memref<16x32xbf16, #tpu.memory_space<vmem>>, %arg7: memref<16x32xf32, #tpu.memory_space<vmem>>, %arg8: memref<16x32xf32, #tpu.memory_space<vmem>>) attributes {dimension_semantics = [#tpu.dimension_semantics<parallel>, #tpu.dimension_semantics<parallel>, #tpu.dimension_semantics<arbitrary>], iteration_bounds = array<i64: 1, 1, 1>, scalar_prefetch = 0 : i64, scratch_operands = 1 : i64, tpu.core_type = #tpu.core_type<tc>, window_params = [{transform_indices = @transform_0, window_bounds = array<i64: 16, 128>}, {transform_indices = @transform_1, window_bounds = array<i64: 128, 32>}, {transform_indices = @transform_2, window_bounds = array<i64: 1, 32>}, {transform_indices = @transform_3, window_bounds = array<i64: 16, 32>}, {transform_indices = @transform_4, window_bounds = array<i64: 16, 32>}]} {
    %c0_i32 = arith.constant 0 : i32
    %0 = arith.cmpi eq, %arg2, %c0_i32 : i32
    %1 = arith.extui %0 : i1 to i32
    %c0_i32_0 = arith.constant 0 : i32
    %2 = arith.cmpi ne, %1, %c0_i32_0 : i32
    scf.if %2 {
      %cst_10 = arith.constant 0.000000e+00 : f32
      %12 = vector.broadcast %cst_10 : f32 to vector<16x32xf32>
      %c0_11 = arith.constant 0 : index
      %c0_12 = arith.constant 0 : index
      %13 = vector.load %arg8[%c0_11, %c0_12] : memref<16x32xf32, #tpu.memory_space<vmem>>, vector<16x32xf32>
      tpu.vector_store %arg8[%c0_11, %c0_12], %12 {strides = array<i32>} : memref<16x32xf32, #tpu.memory_space<vmem>>, vector<16x32xf32>,
    } else {
    }
    %c0 = arith.constant 0 : index
    %c0_1 = arith.constant 0 : index
    %3 = vector.load %arg8[%c0, %c0_1] : memref<16x32xf32, #tpu.memory_space<vmem>>, vector<16x32xf32>
    %c0_2 = arith.constant 0 : index
    %c0_3 = arith.constant 0 : index
    %4 = vector.load %arg3[%c0_2, %c0_3] : memref<16x128xbf16, #tpu.memory_space<vmem>>, vector<16x128xbf16>
    %c0_4 = arith.constant 0 : index
    %c0_5 = arith.constant 0 : index
    %5 = vector.load %arg4[%c0_4, %c0_5] : memref<128x32xbf16, #tpu.memory_space<vmem>>, vector<128x32xbf16>
    %cst = arith.constant dense<0.000000e+00> : vector<16x32xf32>
    %6 = tpu.matmul %4, %5, %cst {dimension_numbers = #tpu.dot_dimension_numbers<[1], [0], [0], [1], [0, 0, 1, 1], [], []>} : vector<16x128xbf16>, vector<128x32xbf16>, vector<16x32xf32> -> vector<16x32xf32>
    %7 = arith.addf %3, %6 : vector<16x32xf32>
    %c0_6 = arith.constant 0 : index
    %c0_7 = arith.constant 0 : index
    %8 = vector.load %arg8[%c0_6, %c0_7] : memref<16x32xf32, #tpu.memory_space<vmem>>, vector<16x32xf32>
    tpu.vector_store %arg8[%c0_6, %c0_7], %7 {strides = array<i32>} : memref<16x32xf32, #tpu.memory_space<vmem>>, vector<16x32xf32>,
    %c0_i32_8 = arith.constant 0 : i32
    %9 = arith.cmpi eq, %arg2, %c0_i32_8 : i32
    %10 = arith.extui %9 : i1 to i32
    %c0_i32_9 = arith.constant 0 : i32
    %11 = arith.cmpi ne, %10, %c0_i32_9 : i32
    scf.if %11 {
      %c0_10 = arith.constant 0 : index
      %c0_11 = arith.constant 0 : index
      %12 = vector.load %arg8[%c0_10, %c0_11] : memref<16x32xf32, #tpu.memory_space<vmem>>, vector<16x32xf32>
      %c0_12 = arith.constant 0 : index
      %c0_13 = arith.constant 0 : index
      %13 = vector.load %arg5[%c0_12, %c0_13] : memref<1x32xf32, #tpu.memory_space<vmem>>, vector<1x32xf32>
      %14 = vector.broadcast %13 : vector<1x32xf32> to vector<16x32xf32>
      %15 = arith.addf %12, %14 : vector<16x32xf32>
      %c0_14 = arith.constant 0 : index
      %c0_15 = arith.constant 0 : index
      %16 = vector.load %arg6[%c0_14, %c0_15] : memref<16x32xbf16, #tpu.memory_space<vmem>>, vector<16x32xbf16>
      %17 = arith.extf %16 : vector<16x32xbf16> to vector<16x32xf32>
      %cst_16 = arith.constant 7.48331499 : f32
      %18 = vector.broadcast %cst_16 : f32 to vector<16x32xf32>
      %19 = arith.mulf %17, %18 : vector<16x32xf32>
      %20 = arith.addf %19, %15 : vector<16x32xf32>
      %c0_17 = arith.constant 0 : index
      %c0_18 = arith.constant 0 : index
      %21 = vector.load %arg7[%c0_17, %c0_18] : memref<16x32xf32, #tpu.memory_space<vmem>>, vector<16x32xf32>
      tpu.vector_store %arg7[%c0_17, %c0_18], %20 {strides = array<i32>} : memref<16x32xf32, #tpu.memory_space<vmem>>, vector<16x32xf32>,
    } else {
    }
    return
  }
  func.func @transform_0(%arg0: i32, %arg1: i32, %arg2: i32) -> (i32, i32) {
    %c0_i32 = arith.constant 0 : i32
    return %arg0, %arg2 : i32, i32
  }
  func.func @transform_1(%arg0: i32, %arg1: i32, %arg2: i32) -> (i32, i32) {
    %c0_i32 = arith.constant 0 : i32
    return %arg2, %arg1 : i32, i32
  }
  func.func @transform_2(%arg0: i32, %arg1: i32, %arg2: i32) -> (i32, i32) {
    %c0_i32 = arith.constant 0 : i32
    %c0_i32_0 = arith.constant 0 : i32
    return %c0_i32, %arg1 : i32, i32
  }
  func.func @transform_3(%arg0: i32, %arg1: i32, %arg2: i32) -> (i32, i32) {
    %c0_i32 = arith.constant 0 : i32
    return %arg0, %arg1 : i32, i32
  }
  func.func @transform_4(%arg0: i32, %arg1: i32, %arg2: i32) -> (i32, i32) {
    %c0_i32 = arith.constant 0 : i32
    return %arg0, %arg1 : i32, i32
  }
}

</mosaic_0001>

<llo_original>
// kernel: squeeze.1
$region0: #{squeeze.1}
  %s0 = inlined_call_operand.vmem [shape: bf16[16,1,4,8], index: 0, kind: input, shape index: {}]
  %s1 = inlined_call_operand.vmem [shape: bf16[2,8,4,8], index: 1, kind: output, shape index: {}]
  $region1: #{squeeze.1} parent=0
    #allocation0 [shape = 'u8[131072]{0}', space=vmem, size = 0x20000, scoped, tag = 'scoped mem for output reshape']
    #allocation1 [shape = 'u8[16384]{0}', space=vmem, size = 0x4000, scoped, tag = 'scoped mem for input reshape']
    %s3 = smul.u32 4, 2
    %s4 = sshllo.u32 0, %s3
    %s5 = smul.addr 4, 3
    %s6 = scalar_lea.vmem %s0, %s5
    %s7 = sshrl.u32 %s4, 1
    %s8 = sor.u32 %s4, %s7
    %s9 = sand.u32 %s8, 85
    %s10 = sshrl.u32 %s9, 1
    %s11 = sor.u32 %s9, %s10
    %s12 = sand.u32 51, %s11
    %s13 = sshrl.u32 %s12, 2
    %s14 = sor.u32 %s12, %s13
    %s15 = sand.u32 15, %s14
    %v16 = vld [vmem:[%s6] sm:%s15]
    %v17 = vunpack.c.l.bf16 %v16
    %v18 = vunpack.c.h.bf16 %v16
    %s19 = scalar_lea.vmem [#allocation1], 24
    %20 = vst [vmem:[%s19] sm:%s4] %v17
    %s21 = smul.addr 4, 2
    %s22 = scalar_lea.vmem %s0, %s21
    %s23 = sshrl.u32 %s4, 1
    %s24 = sor.u32 %s4, %s23
    %s25 = sand.u32 %s24, 85
    %s26 = sshrl.u32 %s25, 1
    %s27 = sor.u32 %s25, %s26
    %s28 = sand.u32 51, %s27
    %s29 = sshrl.u32 %s28, 2
    %s30 = sor.u32 %s28, %s29
    %s31 = sand.u32 15, %s30
    %v32 = vld [vmem:[%s22] sm:%s31]
    %v33 = vunpack.c.l.bf16 %v32
    %v34 = vunpack.c.h.bf16 %v32
    %s35 = scalar_lea.vmem [#allocation1], 16
    %36 = vst [vmem:[%s35] sm:%s4] %v33
    %s37 = scalar_lea.vmem %s0, 4
    %s38 = sshrl.u32 %s4, 1
    %s39 = sor.u32 %s4, %s38
    %s40 = sand.u32 %s39, 85
    %s41 = sshrl.u32 %s40, 1
    %s42 = sor.u32 %s40, %s41
    %s43 = sand.u32 51, %s42
    %s44 = sshrl.u32 %s43, 2
    %s45 = sor.u32 %s43, %s44
    %s46 = sand.u32 15, %s45
    %v47 = vld [vmem:[%s37] sm:%s46]
    %v48 = vunpack.c.l.bf16 %v47
    %v49 = vunpack.c.h.bf16 %v47
    %s50 = scalar_lea.vmem [#allocation1], 8
    %51 = vst [vmem:[%s50] sm:%s4] %v48
    %s52 = sshrl.u32 %s4, 1
    %s53 = sor.u32 %s4, %s52
    %s54 = sand.u32 %s53, 85
    %s55 = sshrl.u32 %s54, 1
    %s56 = sor.u32 %s54, %s55
    %s57 = sand.u32 51, %s56
    %s58 = sshrl.u32 %s57, 2
    %s59 = sor.u32 %s57, %s58
    %s60 = sand.u32 15, %s59
    %v61 = vld [vmem:[%s0] sm:%s60]
    %v62 = vunpack.c.l.bf16 %v61
    %v63 = vunpack.c.h.bf16 %v61
    %64 = vst [vmem:[#allocation1] sm:%s4] %v62
    %v65 = vld [vmem:[#allocation1] sm:$0xff]
    %vm66 = vcmask 64512
    %67 = vst.msk [vmem:[#allocation0] ss:$8 sm:$0xf] %vm66, %v65
    %68 = vst.msk [vmem:[#allocation0] ss:$8 sm:$0xf0] %vm66, %v65
    %s69 = scalar_lea.vmem [#allocation1], 8
    %v70 = vld [vmem:[%s69] sm:$0xff]
    %vm71 = vcmask 64512
    %s72 = scalar_lea.vmem [#allocation0], 64
    %73 = vst.msk [vmem:[%s72] ss:$8 sm:$0xf] %vm71, %v70
    %s74 = scalar_lea.vmem [#allocation0], 64
    %75 = vst.msk [vmem:[%s74] ss:$8 sm:$0xf0] %vm71, %v70
    %s76 = scalar_lea.vmem [#allocation1], 16
    %v77 = vld [vmem:[%s76] sm:$0xff]
    %vm78 = vcmask 64512
    %s79 = scalar_lea.vmem [#allocation0], 128
    %80 = vst.msk [vmem:[%s79] ss:$8 sm:$0xf] %vm78, %v77
    %s81 = scalar_lea.vmem [#allocation0], 128
    %82 = vst.msk [vmem:[%s81] ss:$8 sm:$0xf0] %vm78, %v77
    %s83 = scalar_lea.vmem [#allocation1], 24
    %v84 = vld [vmem:[%s83] sm:$0xff]
    %vm85 = vcmask 64512
    %s86 = scalar_lea.vmem [#allocation0], 192
    %87 = vst.msk [vmem:[%s86] ss:$8 sm:$0xf] %vm85, %v84
    %s88 = scalar_lea.vmem [#allocation0], 192
    %89 = vst.msk [vmem:[%s88] ss:$8 sm:$0xf0] %vm85, %v84
    %v90 = vld [vmem:[#allocation1] sm:$0xff]
    %91 = vrot.lane.b32.xlu0 %v90, 120
    %v92 = vpop.permute.xlu0 %91
    %vm93 = vcmask 64512
    %s94 = scalar_lea.vmem [#allocation0], 1
    %95 = vst.msk [vmem:[%s94] ss:$8 sm:$0xf] %vm93, %v92
    %s96 = scalar_lea.vmem [#allocation0], 1
    %97 = vst.msk [vmem:[%s96] ss:$8 sm:$0xf0] %vm93, %v92
    %s98 = scalar_lea.vmem [#allocation1], 8
    %v99 = vld [vmem:[%s98] sm:$0xff]
    %100 = vrot.lane.b32.xlu0 %v99, 120
    %v101 = vpop.permute.xlu0 %100
    %vm102 = vcmask 64512
    %s103 = scalar_lea.vmem [#allocation0], 65
    %104 = vst.msk [vmem:[%s103] ss:$8 sm:$0xf] %vm102, %v101
    %s105 = scalar_lea.vmem [#allocation0], 65
    %106 = vst.msk [vmem:[%s105] ss:$8 sm:$0xf0] %vm102, %v101
    %s107 = scalar_lea.vmem [#allocation1], 16
    %v108 = vld [vmem:[%s107] sm:$0xff]
    %109 = vrot.lane.b32.xlu0 %v108, 120
    %v110 = vpop.permute.xlu0 %109
    %vm111 = vcmask 64512
    %s112 = scalar_lea.vmem [#allocation0], 129
    %113 = vst.msk [vmem:[%s112] ss:$8 sm:$0xf] %vm111, %v110
    %s114 = scalar_lea.vmem [#allocation0], 129
    %115 = vst.msk [vmem:[%s114] ss:$8 sm:$0xf0] %vm111, %v110
    %s116 = scalar_lea.vmem [#allocation1], 24
    %v117 = vld [vmem:[%s116] sm:$0xff]
    %118 = vrot.lane.b32.xlu0 %v117, 120
    %v119 = vpop.permute.xlu0 %118
    %vm120 = vcmask 64512
    %s121 = scalar_lea.vmem [#allocation0], 193
    %122 = vst.msk [vmem:[%s121] ss:$8 sm:$0xf] %vm120, %v119
    %s123 = scalar_lea.vmem [#allocation0], 193
    %124 = vst.msk [vmem:[%s123] ss:$8 sm:$0xf0] %vm120, %v119
    %s126 = smul.u32 1, 2
    %s127 = sshllo.u32 0, %s126
    %s128 = sshrl.u32 %s126, 1
    %v129 = vld [vmem:[#allocation0] sm:%s127]
    %v130 = vpack.c.bf16 0.0, %v129
    %s131 = sshllo.u32 0, %s128
    %132 = vst [vmem:[%s1] sm:%s131] %v130
    %s133 = scalar_lea.vmem [#allocation0], 8
    %v134 = vld [vmem:[%s133] sm:%s127]
    %v135 = vpack.c.bf16 0.0, %v134
    %s136 = sshllo.u32 0, %s128
    %s137 = scalar_lea.vmem %s1, 1
    %138 = vst [vmem:[%s137] sm:%s136] %v135
    %s139 = scalar_lea.vmem [#allocation0], 16
    %v140 = vld [vmem:[%s139] sm:%s127]
    %v141 = vpack.c.bf16 0.0, %v140
    %s142 = sshllo.u32 0, %s128
    %s143 = smul.addr 1, 2
    %s144 = scalar_lea.vmem %s1, %s143
    %145 = vst [vmem:[%s144] sm:%s142] %v141
    %s146 = scalar_lea.vmem [#allocation0], 24
    %v147 = vld [vmem:[%s146] sm:%s127]
    %v148 = vpack.c.bf16 0.0, %v147
    %s149 = sshllo.u32 0, %s128
    %s150 = smul.addr 1, 3
    %s151 = scalar_lea.vmem %s1, %s150
    %152 = vst [vmem:[%s151] sm:%s149] %v148
    %s153 = scalar_lea.vmem [#allocation0], 32
    %v154 = vld [vmem:[%s153] sm:%s127]
    %v155 = vpack.c.bf16 0.0, %v154
    %s156 = sshllo.u32 0, %s128
    %s157 = smul.addr 1, 4
    %s158 = scalar_lea.vmem %s1, %s157
    %159 = vst [vmem:[%s158] sm:%s156] %v155
    %s160 = scalar_lea.vmem [#allocation0], 40
    %v161 = vld [vmem:[%s160] sm:%s127]
    %v162 = vpack.c.bf16 0.0, %v161
    %s163 = sshllo.u32 0, %s128
    %s164 = smul.addr 1, 5
    %s165 = scalar_lea.vmem %s1, %s164
    %166 = vst [vmem:[%s165] sm:%s163] %v162
    %s167 = scalar_lea.vmem [#allocation0], 48
    %v168 = vld [vmem:[%s167] sm:%s127]
    %v169 = vpack.c.bf16 0.0, %v168
    %s170 = sshllo.u32 0, %s128
    %s171 = smul.addr 1, 6
    %s172 = scalar_lea.vmem %s1, %s171
    %173 = vst [vmem:[%s172] sm:%s170] %v169
    %s174 = scalar_lea.vmem [#allocation0], 56
    %v175 = vld [vmem:[%s174] sm:%s127]
    %v176 = vpack.c.bf16 0.0, %v175
    %s177 = sshllo.u32 0, %s128
    %s178 = smul.addr 1, 7
    %s179 = scalar_lea.vmem %s1, %s178
    %180 = vst [vmem:[%s179] sm:%s177] %v176
    %s181 = scalar_lea.vmem [#allocation0], 64
    %v182 = vld [vmem:[%s181] sm:%s127]
    %v183 = vpack.c.bf16 0.0, %v182
    %s184 = sshllo.u32 0, %s128
    %s185 = smul.addr 1, 8
    %s186 = scalar_lea.vmem %s1, %s185
    %187 = vst [vmem:[%s186] sm:%s184] %v183
    %s188 = scalar_lea.vmem [#allocation0], 72
    %v189 = vld [vmem:[%s188] sm:%s127]
    %v190 = vpack.c.bf16 0.0, %v189
    %s191 = sshllo.u32 0, %s128
    %s192 = smul.addr 1, 9
    %s193 = scalar_lea.vmem %s1, %s192
    %194 = vst [vmem:[%s193] sm:%s191] %v190
    %s195 = scalar_lea.vmem [#allocation0], 80
    %v196 = vld [vmem:[%s195] sm:%s127]
    %v197 = vpack.c.bf16 0.0, %v196
    %s198 = sshllo.u32 0, %s128
    %s199 = smul.addr 1, 10
    %s200 = scalar_lea.vmem %s1, %s199
    %201 = vst [vmem:[%s200] sm:%s198] %v197
    %s202 = scalar_lea.vmem [#allocation0], 88
    %v203 = vld [vmem:[%s202] sm:%s127]
    %v204 = vpack.c.bf16 0.0, %v203
    %s205 = sshllo.u32 0, %s128
    %s206 = smul.addr 1, 11
    %s207 = scalar_lea.vmem %s1, %s206
    %208 = vst [vmem:[%s207] sm:%s205] %v204
    %s209 = scalar_lea.vmem [#allocation0], 96
    %v210 = vld [vmem:[%s209] sm:%s127]
    %v211 = vpack.c.bf16 0.0, %v210
    %s212 = sshllo.u32 0, %s128
    %s213 = smul.addr 1, 12
    %s214 = scalar_lea.vmem %s1, %s213
    %215 = vst [vmem:[%s214] sm:%s212] %v211
    %s216 = scalar_lea.vmem [#allocation0], 104
    %v217 = vld [vmem:[%s216] sm:%s127]
    %v218 = vpack.c.bf16 0.0, %v217
    %s219 = sshllo.u32 0, %s128
    %s220 = smul.addr 1, 13
    %s221 = scalar_lea.vmem %s1, %s220
    %222 = vst [vmem:[%s221] sm:%s219] %v218
    %s223 = scalar_lea.vmem [#allocation0], 112
    %v224 = vld [vmem:[%s223] sm:%s127]
    %v225 = vpack.c.bf16 0.0, %v224
    %s226 = sshllo.u32 0, %s128
    %s227 = smul.addr 1, 14
    %s228 = scalar_lea.vmem %s1, %s227
    %229 = vst [vmem:[%s228] sm:%s226] %v225
    %s230 = scalar_lea.vmem [#allocation0], 120
    %v231 = vld [vmem:[%s230] sm:%s127]
    %v232 = vpack.c.bf16 0.0, %v231
    %s233 = sshllo.u32 0, %s128
    %s234 = smul.addr 1, 15
    %s235 = scalar_lea.vmem %s1, %s234
    %236 = vst [vmem:[%s235] sm:%s233] %v232
    %s237 = scalar_lea.vmem [#allocation0], 128
    %v238 = vld [vmem:[%s237] sm:%s127]
    %v239 = vpack.c.bf16 0.0, %v238
    %s240 = sshllo.u32 0, %s128
    %s241 = smul.addr 1, 16
    %s242 = scalar_lea.vmem %s1, %s241
    %243 = vst [vmem:[%s242] sm:%s240] %v239
    %s244 = scalar_lea.vmem [#allocation0], 136
    %v245 = vld [vmem:[%s244] sm:%s127]
    %v246 = vpack.c.bf16 0.0, %v245
    %s247 = sshllo.u32 0, %s128
    %s248 = smul.addr 1, 17
    %s249 = scalar_lea.vmem %s1, %s248
    %250 = vst [vmem:[%s249] sm:%s247] %v246
    %s251 = scalar_lea.vmem [#allocation0], 144
    %v252 = vld [vmem:[%s251] sm:%s127]
    %v253 = vpack.c.bf16 0.0, %v252
    %s254 = sshllo.u32 0, %s128
    %s255 = smul.addr 1, 18
    %s256 = scalar_lea.vmem %s1, %s255
    %257 = vst [vmem:[%s256] sm:%s254] %v253
    %s258 = scalar_lea.vmem [#allocation0], 152
    %v259 = vld [vmem:[%s258] sm:%s127]
    %v260 = vpack.c.bf16 0.0, %v259
    %s261 = sshllo.u32 0, %s128
    %s262 = smul.addr 1, 19
    %s263 = scalar_lea.vmem %s1, %s262
    %264 = vst [vmem:[%s263] sm:%s261] %v260
    %s265 = scalar_lea.vmem [#allocation0], 160
    %v266 = vld [vmem:[%s265] sm:%s127]
    %v267 = vpack.c.bf16 0.0, %v266
    %s268 = sshllo.u32 0, %s128
    %s269 = smul.addr 1, 20
    %s270 = scalar_lea.vmem %s1, %s269
    %271 = vst [vmem:[%s270] sm:%s268] %v267
    %s272 = scalar_lea.vmem [#allocation0], 168
    %v273 = vld [vmem:[%s272] sm:%s127]
    %v274 = vpack.c.bf16 0.0, %v273
    %s275 = sshllo.u32 0, %s128
    %s276 = smul.addr 1, 21
    %s277 = scalar_lea.vmem %s1, %s276
    %278 = vst [vmem:[%s277] sm:%s275] %v274
    %s279 = scalar_lea.vmem [#allocation0], 176
    %v280 = vld [vmem:[%s279] sm:%s127]
    %v281 = vpack.c.bf16 0.0, %v280
    %s282 = sshllo.u32 0, %s128
    %s283 = smul.addr 1, 22
    %s284 = scalar_lea.vmem %s1, %s283
    %285 = vst [vmem:[%s284] sm:%s282] %v281
    %s286 = scalar_lea.vmem [#allocation0], 184
    %v287 = vld [vmem:[%s286] sm:%s127]
    %v288 = vpack.c.bf16 0.0, %v287
    %s289 = sshllo.u32 0, %s128
    %s290 = smul.addr 1, 23
    %s291 = scalar_lea.vmem %s1, %s290
    %292 = vst [vmem:[%s291] sm:%s289] %v288
    %s293 = scalar_lea.vmem [#allocation0], 192
    %v294 = vld [vmem:[%s293] sm:%s127]
    %v295 = vpack.c.bf16 0.0, %v294
    %s296 = sshllo.u32 0, %s128
    %s297 = smul.addr 1, 24
    %s298 = scalar_lea.vmem %s1, %s297
    %299 = vst [vmem:[%s298] sm:%s296] %v295
    %s300 = scalar_lea.vmem [#allocation0], 200
    %v301 = vld [vmem:[%s300] sm:%s127]
    %v302 = vpack.c.bf16 0.0, %v301
    %s303 = sshllo.u32 0, %s128
    %s304 = smul.addr 1, 25
    %s305 = scalar_lea.vmem %s1, %s304
    %306 = vst [vmem:[%s305] sm:%s303] %v302
    %s307 = scalar_lea.vmem [#allocation0], 208
    %v308 = vld [vmem:[%s307] sm:%s127]
    %v309 = vpack.c.bf16 0.0, %v308
    %s310 = sshllo.u32 0, %s128
    %s311 = smul.addr 1, 26
    %s312 = scalar_lea.vmem %s1, %s311
    %313 = vst [vmem:[%s312] sm:%s310] %v309
    %s314 = scalar_lea.vmem [#allocation0], 216
    %v315 = vld [vmem:[%s314] sm:%s127]
    %v316 = vpack.c.bf16 0.0, %v315
    %s317 = sshllo.u32 0, %s128
    %s318 = smul.addr 1, 27
    %s319 = scalar_lea.vmem %s1, %s318
    %320 = vst [vmem:[%s319] sm:%s317] %v316
    %s321 = scalar_lea.vmem [#allocation0], 224
    %v322 = vld [vmem:[%s321] sm:%s127]
    %v323 = vpack.c.bf16 0.0, %v322
    %s324 = sshllo.u32 0, %s128
    %s325 = smul.addr 1, 28
    %s326 = scalar_lea.vmem %s1, %s325
    %327 = vst [vmem:[%s326] sm:%s324] %v323
    %s328 = scalar_lea.vmem [#allocation0], 232
    %v329 = vld [vmem:[%s328] sm:%s127]
    %v330 = vpack.c.bf16 0.0, %v329
    %s331 = sshllo.u32 0, %s128
    %s332 = smul.addr 1, 29
    %s333 = scalar_lea.vmem %s1, %s332
    %334 = vst [vmem:[%s333] sm:%s331] %v330
    %s335 = scalar_lea.vmem [#allocation0], 240
    %v336 = vld [vmem:[%s335] sm:%s127]
    %v337 = vpack.c.bf16 0.0, %v336
    %s338 = sshllo.u32 0, %s128
    %s339 = smul.addr 1, 30
    %s340 = scalar_lea.vmem %s1, %s339
    %341 = vst [vmem:[%s340] sm:%s338] %v337
    %s342 = scalar_lea.vmem [#allocation0], 248
    %v343 = vld [vmem:[%s342] sm:%s127]
    %v344 = vpack.c.bf16 0.0, %v343
    %s345 = sshllo.u32 0, %s128
    %s346 = smul.addr 1, 31
    %s347 = scalar_lea.vmem %s1, %s346
    %348 = vst [vmem:[%s347] sm:%s345] %v344

// kernel: glm_block_forward.8
$region0: #{glm_block_forward.8}
  #allocation0 [shape = 'u32[]', space=smem, size = 0x4, offset = 0x4, fixed_abs, tag = 'smem constant byte address 0x4 - core index']
  #allocation1 [shape = 'u32[144,128]{1,0:T(1,128)}', space=vmem, size = 0x12000, scoped, tag = 'internal scratch']
  #allocation2 [shape = 'f32[16,96]{1,0:T(8,128)}', space=vmem, size = 0x2000, scoped, tag = 'scratch operand']
  %s0 = inlined_call_operand.vmem [shape: bf16[16,32], index: 0, kind: input, shape index: {}]
  %s1 = inlined_call_operand.vmem [shape: bf16[32,96], index: 1, kind: input, shape index: {}]
  %s2 = inlined_call_operand.vmem [shape: f32[1,96], index: 2, kind: input, shape index: {}]
  %s3 = inlined_call_operand.vmem [shape: bf16[16,96], index: 3, kind: output, shape index: {}]
  %s4 = sld [smem:[#allocation0]]
  $region30: #{glm_block_forward.8} parent=0
    _
  %s6 = ssub.s32 1, %s4
  %s7 = scalar_select 0, %s6, %s4
  // Predicated region
  $region2: #{glm_block_forward.8} parent=0 // pred_check
    _
  $region3: #{glm_block_forward.8} parent=0 // pred_check_branch
    %9 = sbr.rel (0) target = $region5
  $region4: #{glm_block_forward.8} parent=0 // pred_region
    _
  $region5: #{glm_block_forward.8} parent=0 // pred_fallthru
    _
  // Predicated region
  $region6: #{glm_block_forward.8} parent=0 // pred_check
    _
  $region7: #{glm_block_forward.8} parent=0 // pred_check_branch
    %11 = sbr.rel (0) target = $region9
  $region8: #{glm_block_forward.8} parent=0 // pred_region
    _
  $region9: #{glm_block_forward.8} parent=0 // pred_fallthru
    _
  // Predicated region
  $region10: #{glm_block_forward.8} parent=0 // pred_check
    _
  $region11: #{glm_block_forward.8} parent=0 // pred_check_branch
    %13 = sbr.rel (0) target = $region13
  $region12: #{glm_block_forward.8} parent=0 // pred_region
    _
  $region13: #{glm_block_forward.8} parent=0 // pred_fallthru
    _
  %p15 = scmp.eq.s32.totalorder 0, 0
  // Predicated region
  $region14: #{glm_block_forward.8} parent=0 // pred_check
    %p16 = pneg %p15
  $region15: #{glm_block_forward.8} parent=0 // pred_check_branch
    %18 = sbr.rel (%p16) target = $region17
  $region16: #{glm_block_forward.8} parent=0 // pred_region
    %vm19 = vcmask 785408
    %20 = vst.msk [vmem:[#allocation2] sm:$0xff] %vm19, 0.0
    %21 = vst.msk [vmem:[#allocation2 + $0x8] sm:$0xff] %vm19, 0.0
  $region17: #{glm_block_forward.8} parent=0 // pred_fallthru
    _
  %v22 = vld [vmem:[#allocation2] sm:$0xff]
  %v23 = vld [vmem:[#allocation2 + $0x8] sm:$0xff]
  %v24 = vld [vmem:[%s0] sm:$0xf]
  %v25 = vld [vmem:[%s0 + $0x4] sm:$0xf]
  %v26 = vld [vmem:[%s1] sm:$0xf]
  %v27 = vld [vmem:[%s1 + $0x4] sm:$0xf]
  %v28 = vld [vmem:[%s1 + $0x8] sm:$0xf]
  %v29 = vld [vmem:[%s1 + $0xc] sm:$0xf]
  %v32 = vunpack.c.l.b16 %v24
  %v33 = vunpack.c.l.b16 %v25
  %v34 = vpack.c.b16 %v33, %v32
  %v39 = vunpack.c.l.b16 %v26
  %v40 = vunpack.c.l.b16 %v27
  %v41 = vunpack.c.l.b16 %v28
  %v42 = vunpack.c.l.b16 %v29
  %v43 = vpack.c.b16 %v40, %v39
  %v44 = vpack.c.b16 %v42, %v41
  %vm47 = vcmask 261120
  %v49 = vsel %vm47, %v34, 0
  %51 = vmatprep.subr.bf16.mxu0 0
  %52 = vmatpush1.bf16.msra.mxu0 %v43
  %53 = vmatprep.subr.bf16.mxu0 0
  %54 = vmatpush1.bf16.msra.mxu0 %v44
  %55 = vmatprep.subr.bf16.mxu0 0
  %56 = vmatpush1.bf16.msra.mxu0 0
  %57 = vmatprep.subr.bf16.mxu0 0
  %58 = vmatpush1.bf16.msra.mxu0 0
  %59 = vmatprep.subr.bf16.mxu0 0
  %60 = vmatpush1.bf16.msra.mxu0 0
  %61 = vmatprep.subr.bf16.mxu0 0
  %62 = vmatpush1.bf16.msra.mxu0 0
  %63 = vmatprep.subr.bf16.mxu0 0
  %64 = vmatpush1.bf16.msra.mxu0 0
  %65 = vmatprep.subr.bf16.mxu0 0
  %66 = vmatpush1.bf16.msra.mxu0 0
  %67 = vmatprep.subr.bf16.mxu0 0
  %68 = vmatpush1.bf16.msra.mxu0 0
  %69 = vmatprep.subr.bf16.mxu0 0
  %70 = vmatpush1.bf16.msra.mxu0 0
  %71 = vmatprep.subr.bf16.mxu0 0
  %72 = vmatpush1.bf16.msra.mxu0 0
  %73 = vmatprep.subr.bf16.mxu0 0
  %74 = vmatpush1.bf16.msra.mxu0 0
  %75 = vmatprep.subr.bf16.mxu0 0
  %76 = vmatpush1.bf16.msra.mxu0 0
  %77 = vmatprep.subr.bf16.mxu0 0
  %78 = vmatpush1.bf16.msra.mxu0 0
  %79 = vmatprep.subr.bf16.mxu0 0
  %80 = vmatpush1.bf16.msra.mxu0 0
  %81 = vmatprep.subr.bf16.mxu0 0
  %82 = vmatpush1.bf16.msra.mxu0 0
  %83 = vmatprep.mubr.bf16.mxu0 0
  %84 = vmatmul.mubr.bf16.gmra.mrb[0].mxu0 %v49
  %v85 = vpop.f32.mrb[0].mxu0
  %v86 = vadd.f32 0.0, %v85
  %v87 = vpop.f32.mrb[0].mxu0
  %v88 = vpop.f32.mrb[0].mxu0
  %v89 = vadd.f32 0.0, %v88
  %v90 = vpop.f32.mrb[0].mxu0
  %91 = vdwg.mxu0
  %v92 = vadd.f32 %v22, %v86
  %v93 = vadd.f32 %v23, %v89
  %vm94 = vcmask 785408
  %95 = vst.msk [vmem:[#allocation2] sm:$0xff] %vm94, %v92
  %96 = vst.msk [vmem:[#allocation2 + $0x8] sm:$0xff] %vm94, %v93
  // Predicated region
  $region18: #{glm_block_forward.8} parent=0 // pred_check
    %p97 = pneg %p15
  $region19: #{glm_block_forward.8} parent=0 // pred_check_branch
    %99 = sbr.rel (%p97) target = $region21
  $region20: #{glm_block_forward.8} parent=0 // pred_region
    %v100 = vld [vmem:[#allocation2] sm:$0xff]
    %v101 = vld [vmem:[#allocation2 + $0x8] sm:$0xff]
    %v102 = vld [vmem:[%s2] sm:$0x1]
    %v104 = vlaneseq
    %v105 = vshrl.u32 %v104, 7
    %v106 = vsub.s32 0, %v105
    %v107 = vrot.slane %v102, %v106
    %v109 = vadd.f32 %v100, %v107
    %v110 = vadd.f32 %v101, %v107
    %v111 = vpack.c.bf16 %v110, %v109
    %v113 = vunpack.c.l.b16 %v111
    %v114 = vunpack.c.h.b16 %v111
    %v115 = vpack.c.b16 %v113, %v113
    %v116 = vpack.c.b16 %v114, %v114
    %vm119 = vcmask 781312
    %120 = vst.msk [vmem:[%s3] sm:$0xf] %vm119, %v115
    %121 = vst.msk [vmem:[%s3 + $0x4] sm:$0xf] %vm119, %v116
  $region21: #{glm_block_forward.8} parent=0 // pred_fallthru
    _
  // Predicated region
  $region22: #{glm_block_forward.8} parent=0 // pred_check
    _
  $region23: #{glm_block_forward.8} parent=0 // pred_check_branch
    %123 = sbr.rel (0) target = $region25
  $region24: #{glm_block_forward.8} parent=0 // pred_region
    _
  $region25: #{glm_block_forward.8} parent=0 // pred_fallthru
    _
  // Predicated region
  $region26: #{glm_block_forward.8} parent=0 // pred_check
    _
  $region27: #{glm_block_forward.8} parent=0 // pred_check_branch
    %125 = sbr.rel (0) target = $region29
  $region28: #{glm_block_forward.8} parent=0 // pred_region
    _
  $region29: #{glm_block_forward.8} parent=0 // pred_fallthru
    _

// kernel: glm_block_forward.7
$region0: #{glm_block_forward.7}
  #allocation0 [shape = 'u32[]', space=smem, size = 0x4, offset = 0x4, fixed_abs, tag = 'smem constant byte address 0x4 - core index']
  #allocation1 [shape = 'u32[144,128]{1,0:T(1,128)}', space=vmem, size = 0x12000, scoped, tag = 'internal scratch']
  %s0 = inlined_call_operand.vmem [shape: f32[16,32], index: 0, kind: input, shape index: {}]
  %s1 = inlined_call_operand.vmem [shape: f32[1,32], index: 1, kind: input, shape index: {}]
  %s2 = inlined_call_operand.vmem [shape: f32[1,32], index: 2, kind: input, shape index: {}]
  %s3 = inlined_call_operand.vmem [shape: bf16[16,32], index: 3, kind: output, shape index: {}]
  %s4 = sld [smem:[#allocation0]]
  $region22: #{glm_block_forward.7} parent=0
    _
  %s6 = ssub.s32 1, %s4
  %s7 = scalar_select 0, %s6, %s4
  // Predicated region
  $region2: #{glm_block_forward.7} parent=0 // pred_check
    _
  $region3: #{glm_block_forward.7} parent=0 // pred_check_branch
    %9 = sbr.rel (0) target = $region5
  $region4: #{glm_block_forward.7} parent=0 // pred_region
    _
  $region5: #{glm_block_forward.7} parent=0 // pred_fallthru
    _
  // Predicated region
  $region6: #{glm_block_forward.7} parent=0 // pred_check
    _
  $region7: #{glm_block_forward.7} parent=0 // pred_check_branch
    %11 = sbr.rel (0) target = $region9
  $region8: #{glm_block_forward.7} parent=0 // pred_region
    _
  $region9: #{glm_block_forward.7} parent=0 // pred_fallthru
    _
  // Predicated region
  $region10: #{glm_block_forward.7} parent=0 // pred_check
    _
  $region11: #{glm_block_forward.7} parent=0 // pred_check_branch
    %13 = sbr.rel (0) target = $region13
  $region12: #{glm_block_forward.7} parent=0 // pred_region
    _
  $region13: #{glm_block_forward.7} parent=0 // pred_fallthru
    _
  %v14 = vld [vmem:[%s0] sm:$0xff]
  %v15 = vld [vmem:[%s0 + $0x8] sm:$0xff]
  %vm16 = vcmask 261120
  %v17 = vsel %vm16, %v14, 0.0
  %18 = vadd.xlane.f32.xlu0 %v17
  %v19 = vpop.xlane.xlu0 %18
  %v20 = vsel %vm16, %v15, 0.0
  %21 = vadd.xlane.f32.xlu0 %v20
  %v22 = vpop.xlane.xlu0 %21
  %v23 = vrcp.pop 32.0
  %v24 = vmul.f32 %v19, %v23
  %v25 = vmul.f32 %v22, %v23
  %v26 = vsub.f32 %v14, %v24
  %v27 = vsub.f32 %v15, %v25
  %v28 = vmul.f32 %v26, %v26
  %v29 = vmul.f32 %v27, %v27
  %v30 = vsel %vm16, %v28, 0.0
  %31 = vadd.xlane.f32.xlu0 %v30
  %v32 = vpop.xlane.xlu0 %31
  %v33 = vsel %vm16, %v29, 0.0
  %34 = vadd.xlane.f32.xlu0 %v33
  %v35 = vpop.xlane.xlu0 %34
  %v36 = vmul.f32 %v32, %v23
  %v37 = vmul.f32 %v35, %v23
  %v38 = vadd.f32 %v36, 1e-05
  %v39 = vadd.f32 %v37, 1e-05
  %v40 = vrsqrt.pop %v38
  %v41 = vrsqrt.pop %v39
  %v42 = vmul.f32 %v26, %v40
  %v43 = vmul.f32 %v27, %v41
  %v44 = vld [vmem:[%s1] sm:$0x1]
  %v46 = vlaneseq
  %v47 = vshrl.u32 %v46, 7
  %v48 = vsub.s32 0, %v47
  %v49 = vrot.slane %v44, %v48
  %v51 = vmul.f32 %v42, %v49
  %v52 = vmul.f32 %v43, %v49
  %v53 = vld [vmem:[%s2] sm:$0x1]
  %v55 = vlaneseq
  %v56 = vshrl.u32 %v55, 7
  %v57 = vsub.s32 0, %v56
  %v58 = vrot.slane %v53, %v57
  %v60 = vadd.f32 %v51, %v58
  %v61 = vadd.f32 %v52, %v58
  %v62 = vpack.c.bf16 %v61, %v60
  %v64 = vunpack.c.l.b16 %v62
  %v65 = vunpack.c.h.b16 %v62
  %v66 = vpack.c.b16 %v64, %v64
  %v67 = vpack.c.b16 %v65, %v65
  %vm70 = vcmask 257024
  %71 = vst.msk [vmem:[%s3] sm:$0xf] %vm70, %v66
  %72 = vst.msk [vmem:[%s3 + $0x4] sm:$0xf] %vm70, %v67
  // Predicated region
  $region14: #{glm_block_forward.7} parent=0 // pred_check
    _
  $region15: #{glm_block_forward.7} parent=0 // pred_check_branch
    %74 = sbr.rel (0) target = $region17
  $region16: #{glm_block_forward.7} parent=0 // pred_region
    _
  $region17: #{glm_block_forward.7} parent=0 // pred_fallthru
    _
  // Predicated region
  $region18: #{glm_block_forward.7} parent=0 // pred_check
    _
  $region19: #{glm_block_forward.7} parent=0 // pred_check_branch
    %76 = sbr.rel (0) target = $region21
  $region20: #{glm_block_forward.7} parent=0 // pred_region
    _
  $region21: #{glm_block_forward.7} parent=0 // pred_fallthru
    _

// kernel: glm_block_forward.11
$region0: #{glm_block_forward.11}
  #allocation0 [shape = 'u32[]', space=smem, size = 0x4, offset = 0x4, fixed_abs, tag = 'smem constant byte address 0x4 - core index']
  #allocation1 [shape = 'u32[144,128]{1,0:T(1,128)}', space=vmem, size = 0x12000, scoped, tag = 'internal scratch']
  #allocation2 [shape = 'f32[16,32]{1,0:T(8,128)}', space=vmem, size = 0x2000, scoped, tag = 'scratch operand']
  %s0 = inlined_call_operand.vmem [shape: bf16[16,32], index: 0, kind: input, shape index: {}]
  %s1 = inlined_call_operand.vmem [shape: bf16[32,32], index: 1, kind: input, shape index: {}]
  %s2 = inlined_call_operand.vmem [shape: f32[1,32], index: 2, kind: input, shape index: {}]
  %s3 = inlined_call_operand.vmem [shape: bf16[16,32], index: 3, kind: input, shape index: {}]
  %s4 = inlined_call_operand.vmem [shape: f32[1,32], index: 4, kind: input, shape index: {}]
  %s5 = inlined_call_operand.vmem [shape: f32[1,32], index: 5, kind: input, shape index: {}]
  %s6 = inlined_call_operand.vmem [shape: bf16[16,32], index: 6, kind: output, shape index: {}]
  %s7 = sld [smem:[#allocation0]]
  $region42: #{glm_block_forward.11} parent=0
    _
  %s9 = ssub.s32 1, %s7
  %s10 = scalar_select 0, %s9, %s7
  // Predicated region
  $region2: #{glm_block_forward.11} parent=0 // pred_check
    _
  $region3: #{glm_block_forward.11} parent=0 // pred_check_branch
    %12 = sbr.rel (0) target = $region5
  $region4: #{glm_block_forward.11} parent=0 // pred_region
    _
  $region5: #{glm_block_forward.11} parent=0 // pred_fallthru
    _
  // Predicated region
  $region6: #{glm_block_forward.11} parent=0 // pred_check
    _
  $region7: #{glm_block_forward.11} parent=0 // pred_check_branch
    %14 = sbr.rel (0) target = $region9
  $region8: #{glm_block_forward.11} parent=0 // pred_region
    _
  $region9: #{glm_block_forward.11} parent=0 // pred_fallthru
    _
  // Predicated region
  $region10: #{glm_block_forward.11} parent=0 // pred_check
    _
  $region11: #{glm_block_forward.11} parent=0 // pred_check_branch
    %16 = sbr.rel (0) target = $region13
  $region12: #{glm_block_forward.11} parent=0 // pred_region
    _
  $region13: #{glm_block_forward.11} parent=0 // pred_fallthru
    _
  // Predicated region
  $region14: #{glm_block_forward.11} parent=0 // pred_check
    _
  $region15: #{glm_block_forward.11} parent=0 // pred_check_branch
    %18 = sbr.rel (0) target = $region17
  $region16: #{glm_block_forward.11} parent=0 // pred_region
    _
  $region17: #{glm_block_forward.11} parent=0 // pred_fallthru
    _
  // Predicated region
  $region18: #{glm_block_forward.11} parent=0 // pred_check
    _
  $region19: #{glm_block_forward.11} parent=0 // pred_check_branch
    %20 = sbr.rel (0) target = $region21
  $region20: #{glm_block_forward.11} parent=0 // pred_region
    _
  $region21: #{glm_block_forward.11} parent=0 // pred_fallthru
    _
  // Predicated region
  $region22: #{glm_block_forward.11} parent=0 // pred_check
    _
  $region23: #{glm_block_forward.11} parent=0 // pred_check_branch
    %22 = sbr.rel (0) target = $region25
  $region24: #{glm_block_forward.11} parent=0 // pred_region
    _
  $region25: #{glm_block_forward.11} parent=0 // pred_fallthru
    _
  %p24 = scmp.eq.s32.totalorder 0, 0
  // Predicated region
  $region26: #{glm_block_forward.11} parent=0 // pred_check
    %p25 = pneg %p24
  $region27: #{glm_block_forward.11} parent=0 // pred_check_branch
    %27 = sbr.rel (%p25) target = $region29
  $region28: #{glm_block_forward.11} parent=0 // pred_region
    %vm28 = vcmask 261120
    %29 = vst.msk [vmem:[#allocation2] sm:$0xff] %vm28, 0.0
    %30 = vst.msk [vmem:[#allocation2 + $0x8] sm:$0xff] %vm28, 0.0
  $region29: #{glm_block_forward.11} parent=0 // pred_fallthru
    _
  %v31 = vld [vmem:[#allocation2] sm:$0xff]
  %v32 = vld [vmem:[#allocation2 + $0x8] sm:$0xff]
  %v33 = vld [vmem:[%s0] sm:$0xf]
  %v34 = vld [vmem:[%s0 + $0x4] sm:$0xf]
  %v35 = vld [vmem:[%s1] sm:$0xf]
  %v36 = vld [vmem:[%s1 + $0x4] sm:$0xf]
  %v37 = vld [vmem:[%s1 + $0x8] sm:$0xf]
  %v38 = vld [vmem:[%s1 + $0xc] sm:$0xf]
  %v41 = vunpack.c.l.b16 %v33
  %v42 = vunpack.c.l.b16 %v34
  %v43 = vpack.c.b16 %v42, %v41
  %v48 = vunpack.c.l.b16 %v35
  %v49 = vunpack.c.l.b16 %v36
  %v50 = vunpack.c.l.b16 %v37
  %v51 = vunpack.c.l.b16 %v38
  %v52 = vpack.c.b16 %v49, %v48
  %v53 = vpack.c.b16 %v51, %v50
  %vm56 = vcmask 261120
  %v58 = vsel %vm56, %v43, 0
  %60 = vmatprep.subr.bf16.mxu0 0
  %61 = vmatpush1.bf16.msra.mxu0 %v52
  %62 = vmatprep.subr.bf16.mxu0 0
  %63 = vmatpush1.bf16.msra.mxu0 %v53
  %64 = vmatprep.subr.bf16.mxu0 0
  %65 = vmatpush1.bf16.msra.mxu0 0
  %66 = vmatprep.subr.bf16.mxu0 0
  %67 = vmatpush1.bf16.msra.mxu0 0
  %68 = vmatprep.subr.bf16.mxu0 0
  %69 = vmatpush1.bf16.msra.mxu0 0
  %70 = vmatprep.subr.bf16.mxu0 0
  %71 = vmatpush1.bf16.msra.mxu0 0
  %72 = vmatprep.subr.bf16.mxu0 0
  %73 = vmatpush1.bf16.msra.mxu0 0
  %74 = vmatprep.subr.bf16.mxu0 0
  %75 = vmatpush1.bf16.msra.mxu0 0
  %76 = vmatprep.subr.bf16.mxu0 0
  %77 = vmatpush1.bf16.msra.mxu0 0
  %78 = vmatprep.subr.bf16.mxu0 0
  %79 = vmatpush1.bf16.msra.mxu0 0
  %80 = vmatprep.subr.bf16.mxu0 0
  %81 = vmatpush1.bf16.msra.mxu0 0
  %82 = vmatprep.subr.bf16.mxu0 0
  %83 = vmatpush1.bf16.msra.mxu0 0
  %84 = vmatprep.subr.bf16.mxu0 0
  %85 = vmatpush1.bf16.msra.mxu0 0
  %86 = vmatprep.subr.bf16.mxu0 0
  %87 = vmatpush1.bf16.msra.mxu0 0
  %88 = vmatprep.subr.bf16.mxu0 0
  %89 = vmatpush1.bf16.msra.mxu0 0
  %90 = vmatprep.subr.bf16.mxu0 0
  %91 = vmatpush1.bf16.msra.mxu0 0
  %92 = vmatprep.mubr.bf16.mxu0 0
  %93 = vmatmul.mubr.bf16.gmra.mrb[0].mxu0 %v58
  %v94 = vpop.f32.mrb[0].mxu0
  %v95 = vadd.f32 0.0, %v94
  %v96 = vpop.f32.mrb[0].mxu0
  %v97 = vpop.f32.mrb[0].mxu0
  %v98 = vadd.f32 0.0, %v97
  %v99 = vpop.f32.mrb[0].mxu0
  %100 = vdwg.mxu0
  %v101 = vadd.f32 %v31, %v95
  %v102 = vadd.f32 %v32, %v98
  %103 = vst.msk [vmem:[#allocation2] sm:$0xff] %vm56, %v101
  %104 = vst.msk [vmem:[#allocation2 + $0x8] sm:$0xff] %vm56, %v102
  // Predicated region
  $region30: #{glm_block_forward.11} parent=0 // pred_check
    %p105 = pneg %p24
  $region31: #{glm_block_forward.11} parent=0 // pred_check_branch
    %107 = sbr.rel (%p105) target = $region33
  $region32: #{glm_block_forward.11} parent=0 // pred_region
    %v108 = vld [vmem:[%s3] sm:$0xf]
    %v109 = vld [vmem:[%s3 + $0x4] sm:$0xf]
    %v110 = vunpack.c.l.bf16 %v108
    %v111 = vunpack.c.l.bf16 %v109
    %v112 = vmul.f32 %v110, 7.483315
    %v113 = vmul.f32 %v111, 7.483315
    %v114 = vld [vmem:[#allocation2] sm:$0xff]
    %v115 = vld [vmem:[#allocation2 + $0x8] sm:$0xff]
    %v116 = vadd.f32 %v112, %v114
    %v117 = vadd.f32 %v113, %v115
    %v118 = vld [vmem:[%s2] sm:$0x1]
    %v120 = vlaneseq
    %v121 = vshrl.u32 %v120, 7
    %v122 = vsub.s32 0, %v121
    %v123 = vrot.slane %v118, %v122
    %v125 = vadd.f32 %v116, %v123
    %v126 = vadd.f32 %v117, %v123
    %v127 = vsel %vm56, %v125, 0.0
    %128 = vadd.xlane.f32.xlu0 %v127
    %v129 = vpop.xlane.xlu0 %128
    %v130 = vsel %vm56, %v126, 0.0
    %131 = vadd.xlane.f32.xlu0 %v130
    %v132 = vpop.xlane.xlu0 %131
    %v133 = vrcp.pop 32.0
    %v134 = vmul.f32 %v129, %v133
    %v135 = vmul.f32 %v132, %v133
    %v136 = vsub.f32 %v125, %v134
    %v137 = vsub.f32 %v126, %v135
    %v138 = vmul.f32 %v136, %v136
    %v139 = vmul.f32 %v137, %v137
    %v140 = vsel %vm56, %v138, 0.0
    %141 = vadd.xlane.f32.xlu0 %v140
    %v142 = vpop.xlane.xlu0 %141
    %v143 = vsel %vm56, %v139, 0.0
    %144 = vadd.xlane.f32.xlu0 %v143
    %v145 = vpop.xlane.xlu0 %144
    %v146 = vmul.f32 %v142, %v133
    %v147 = vmul.f32 %v145, %v133
    %v148 = vadd.f32 %v146, 1e-05
    %v149 = vadd.f32 %v147, 1e-05
    %v150 = vrsqrt.pop %v148
    %v151 = vrsqrt.pop %v149
    %v152 = vmul.f32 %v136, %v150
    %v153 = vmul.f32 %v137, %v151
    %v154 = vld [vmem:[%s4] sm:$0x1]
    %v156 = vlaneseq
    %v157 = vshrl.u32 %v156, 7
    %v158 = vsub.s32 0, %v157
    %v159 = vrot.slane %v154, %v158
    %v161 = vmul.f32 %v152, %v159
    %v162 = vmul.f32 %v153, %v159
    %v163 = vld [vmem:[%s5] sm:$0x1]
    %v165 = vlaneseq
    %v166 = vshrl.u32 %v165, 7
    %v167 = vsub.s32 0, %v166
    %v168 = vrot.slane %v163, %v167
    %v170 = vadd.f32 %v161, %v168
    %v171 = vadd.f32 %v162, %v168
    %v172 = vpack.c.bf16 %v171, %v170
    %v174 = vunpack.c.l.b16 %v172
    %v175 = vunpack.c.h.b16 %v172
    %v176 = vpack.c.b16 %v174, %v174
    %v177 = vpack.c.b16 %v175, %v175
    %vm180 = vcmask 257024
    %181 = vst.msk [vmem:[%s6] sm:$0xf] %vm180, %v176
    %182 = vst.msk [vmem:[%s6 + $0x4] sm:$0xf] %vm180, %v177
  $region33: #{glm_block_forward.11} parent=0 // pred_fallthru
    _
  // Predicated region
  $region34: #{glm_block_forward.11} parent=0 // pred_check
    _
  $region35: #{glm_block_forward.11} parent=0 // pred_check_branch
    %184 = sbr.rel (0) target = $region37
  $region36: #{glm_block_forward.11} parent=0 // pred_region
    _
  $region37: #{glm_block_forward.11} parent=0 // pred_fallthru
    _
  // Predicated region
  $region38: #{glm_block_forward.11} parent=0 // pred_check
    _
  $region39: #{glm_block_forward.11} parent=0 // pred_check_branch
    %186 = sbr.rel (0) target = $region41
  $region40: #{glm_block_forward.11} parent=0 // pred_region
    _
  $region41: #{glm_block_forward.11} parent=0 // pred_fallthru
    _

// kernel: glm_block_forward.10
$region0: #{glm_block_forward.10}
  #allocation0 [shape = 'u32[]', space=smem, size = 0x4, offset = 0x4, fixed_abs, tag = 'smem constant byte address 0x4 - core index']
  #allocation1 [shape = 'u32[144,128]{1,0:T(1,128)}', space=vmem, size = 0x12000, scoped, tag = 'internal scratch']
  #allocation2 [shape = 'f32[8,1]{1,0:T(8,128)}', space=vmem, size = 0x1000, scoped, tag = 'scratch operand']
  #allocation3 [shape = 'f32[8,1]{1,0:T(8,128)}', space=vmem, size = 0x1000, scoped, tag = 'scratch operand']
  #allocation4 [shape = 'f32[8,8]{1,0:T(8,128)}', space=vmem, size = 0x1000, scoped, tag = 'scratch operand']
  %s0 = inlined_call_operand.vmem [shape: bf16[2,4,8,8], index: 0, kind: input, shape index: {}]
  %s1 = inlined_call_operand.vmem [shape: bf16[2,4,8,8], index: 1, kind: input, shape index: {}]
  %s2 = inlined_call_operand.vmem [shape: bf16[2,4,8,8], index: 2, kind: input, shape index: {}]
  %s3 = inlined_call_operand.vmem [shape: bf16[2,8,8], index: 3, kind: input, shape index: {}]
  %s4 = inlined_call_operand.vmem [shape: bf16[2,4,8,8], index: 4, kind: output, shape index: {}]
  %s5 = sld [smem:[#allocation0]]
  $region57: #{glm_block_forward.10} parent=0
    _
  %s7 = ssub.s32 1, %s5
  %s8 = scalar_select 0, %s7, %s5
  loop: start=0, step=1, limit=10
  $region2: #{glm_block_forward.10} parent=0 // loop_pre_header
    _
  $region3: #{glm_block_forward.10} parent=0 // loop_header
    %s10 = sphi 0, %s14
    %p11 = scmp.ge.s32.totalorder %s10, 10
    %s17 = sphi 0, %s43
    %s18 = sphi 0, %s39
    %s19 = sphi 0, %s35
    %s20 = sphi 0, %s31
    %s21 = sphi 0, %s17
    %s22 = sphi 0, %s18
    %s23 = sphi 0, %s19
    %s24 = sphi 0, %s20
    %s25 = sphi 0, %s21
    %s26 = sphi 0, %s22
    %s27 = sphi 0, %s23
    %s28 = sphi 0, %s24
    %s50 = sphi 0, %s52
    %s53 = sphi 0, %s50
    %s54 = sphi 0, %s53
    %s70 = sphi 0, %s54
    %s80 = sphi 0, %s82
    %s83 = sphi 0, %s80
    %s84 = sphi 0, %s83
    %s100 = sphi 0, %s84
    %s110 = sphi 0, %s112
    %s113 = sphi 0, %s110
    %s114 = sphi 0, %s113
    %s130 = sphi 0, %s114
    %s140 = sphi 0, %s142
    %s143 = sphi 0, %s140
    %s144 = sphi 0, %s143
    %s160 = sphi 0, %s144
    %s170 = sphi 0, %s172
    %s173 = sphi 0, %s170
    %s174 = sphi 0, %s173
    %s190 = sphi 0, %s174
  $region4: #{glm_block_forward.10} parent=0 // loop_header_branch
    %13 = sbr.rel (%p11) target = $region8
  $region5: #{glm_block_forward.10} parent=0 // loop_body
    %s15 = ssub.s32 %s10, 1
    %s16 = ssub.s32 %s10, 2
    %s29 = sadd.s32 1, %s20
    %p30 = scmp.ge.s32.totalorder %s29, 1
    %s31 = scalar_select %p30, 0, %s29
    %s32 = sadd.s32 1, %s19
    %s33 = scalar_select %p30, %s32, %s19
    %p34 = scmp.ge.s32.totalorder %s33, 1
    %s35 = scalar_select %p34, 0, %s33
    %s36 = sadd.s32 1, %s18
    %s37 = scalar_select %p34, %s36, %s18
    %p38 = scmp.ge.s32.totalorder %s37, 4
    %s39 = scalar_select %p38, 0, %s37
    %s40 = sadd.s32 1, %s17
    %s41 = scalar_select %p38, %s40, %s17
    %p42 = scmp.ge.s32.totalorder %s41, 2
    %s43 = scalar_select %p42, 0, %s41
    %s44 = ssub.s32 %s17, %s43
    %s45 = ssub.s32 %s18, %s39
    %s46 = sor.u32 %s44, %s45
    %s47 = ssub.s32 %s19, %s35
    %s48 = sor.u32 %s46, %s47
    %p49 = scmp.eq.s32.totalorder %s48, 0
    %s51 = sadd.s32 %s50, 1
    %s52 = scalar_select %p49, %s50, %s51
    %p55 = pneg %p49
    %p56 = scmp.eq.s32.totalorder %s10, 7
    %p57 = por %p55, %p56
    %p58 = scmp.ne.s32.totalorder %s50, %s53
    %p59 = scmp.eq.s32.totalorder %s10, 0
    %p60 = por %p58, %p59
    %p61 = scmp.ne.s32.totalorder %s50, %s53
    %p62 = scmp.eq.s32.totalorder %s15, 7
    %p63 = por %p61, %p62
    %p64 = scmp.ne.s32.totalorder %s53, %s54
    %p65 = scmp.eq.s32.totalorder %s15, 0
    %p66 = por %p64, %p65
    %p67 = scmp.ne.s32.totalorder %s53, %s54
    %p68 = scmp.eq.s32.totalorder %s16, 7
    %p69 = por %p67, %p68
    %p71 = scmp.ne.s32.totalorder %s54, %s70
    %p72 = scmp.eq.s32.totalorder %s16, 0
    %p73 = por %p71, %p72
    %s74 = ssub.s32 %s17, %s43
    %s75 = ssub.s32 %s18, %s39
    %s76 = sor.u32 %s74, %s75
    %s77 = ssub.s32 %s20, %s31
    %s78 = sor.u32 %s76, %s77
    %p79 = scmp.eq.s32.totalorder %s78, 0
    %s81 = sadd.s32 %s80, 1
    %s82 = scalar_select %p79, %s80, %s81
    %p85 = pneg %p79
    %p86 = scmp.eq.s32.totalorder %s10, 7
    %p87 = por %p85, %p86
    %p88 = scmp.ne.s32.totalorder %s80, %s83
    %p89 = scmp.eq.s32.totalorder %s10, 0
    %p90 = por %p88, %p89
    %p91 = scmp.ne.s32.totalorder %s80, %s83
    %p92 = scmp.eq.s32.totalorder %s15, 7
    %p93 = por %p91, %p92
    %p94 = scmp.ne.s32.totalorder %s83, %s84
    %p95 = scmp.eq.s32.totalorder %s15, 0
    %p96 = por %p94, %p95
    %p97 = scmp.ne.s32.totalorder %s83, %s84
    %p98 = scmp.eq.s32.totalorder %s16, 7
    %p99 = por %p97, %p98
    %p101 = scmp.ne.s32.totalorder %s84, %s100
    %p102 = scmp.eq.s32.totalorder %s16, 0
    %p103 = por %p101, %p102
    %s104 = ssub.s32 %s17, %s43
    %s105 = ssub.s32 %s18, %s39
    %s106 = sor.u32 %s104, %s105
    %s107 = ssub.s32 %s20, %s31
    %s108 = sor.u32 %s106, %s107
    %p109 = scmp.eq.s32.totalorder %s108, 0
    %s111 = sadd.s32 %s110, 1
    %s112 = scalar_select %p109, %s110, %s111
    %p115 = pneg %p109
    %p116 = scmp.eq.s32.totalorder %s10, 7
    %p117 = por %p115, %p116
    %p118 = scmp.ne.s32.totalorder %s110, %s113
    %p119 = scmp.eq.s32.totalorder %s10, 0
    %p120 = por %p118, %p119
    %p121 = scmp.ne.s32.totalorder %s110, %s113
    %p122 = scmp.eq.s32.totalorder %s15, 7
    %p123 = por %p121, %p122
    %p124 = scmp.ne.s32.totalorder %s113, %s114
    %p125 = scmp.eq.s32.totalorder %s15, 0
    %p126 = por %p124, %p125
    %p127 = scmp.ne.s32.totalorder %s113, %s114
    %p128 = scmp.eq.s32.totalorder %s16, 7
    %p129 = por %p127, %p128
    %p131 = scmp.ne.s32.totalorder %s114, %s130
    %p132 = scmp.eq.s32.totalorder %s16, 0
    %p133 = por %p131, %p132
    %s134 = ssub.s32 %s17, %s43
    %s135 = ssub.s32 %s19, %s35
    %s136 = sor.u32 %s134, %s135
    %s137 = ssub.s32 %s20, %s31
    %s138 = sor.u32 %s136, %s137
    %p139 = scmp.eq.s32.totalorder %s138, 0
    %s141 = sadd.s32 %s140, 1
    %s142 = scalar_select %p139, %s140, %s141
    %p145 = pneg %p139
    %p146 = scmp.eq.s32.totalorder %s10, 7
    %p147 = por %p145, %p146
    %p148 = scmp.ne.s32.totalorder %s140, %s143
    %p149 = scmp.eq.s32.totalorder %s10, 0
    %p150 = por %p148, %p149
    %p151 = scmp.ne.s32.totalorder %s140, %s143
    %p152 = scmp.eq.s32.totalorder %s15, 7
    %p153 = por %p151, %p152
    %p154 = scmp.ne.s32.totalorder %s143, %s144
    %p155 = scmp.eq.s32.totalorder %s15, 0
    %p156 = por %p154, %p155
    %p157 = scmp.ne.s32.totalorder %s143, %s144
    %p158 = scmp.eq.s32.totalorder %s16, 7
    %p159 = por %p157, %p158
    %p161 = scmp.ne.s32.totalorder %s144, %s160
    %p162 = scmp.eq.s32.totalorder %s16, 0
    %p163 = por %p161, %p162
    %s164 = ssub.s32 %s17, %s43
    %s165 = ssub.s32 %s18, %s39
    %s166 = sor.u32 %s164, %s165
    %s167 = ssub.s32 %s19, %s35
    %s168 = sor.u32 %s166, %s167
    %p169 = scmp.eq.s32.totalorder %s168, 0
    %s171 = sadd.s32 %s170, 1
    %s172 = scalar_select %p169, %s170, %s171
    %p175 = pneg %p169
    %p176 = scmp.eq.s32.totalorder %s10, 7
    %p177 = por %p175, %p176
    %p178 = scmp.ne.s32.totalorder %s170, %s173
    %p179 = scmp.eq.s32.totalorder %s10, 0
    %p180 = por %p178, %p179
    %p181 = scmp.ne.s32.totalorder %s170, %s173
    %p182 = scmp.eq.s32.totalorder %s15, 7
    %p183 = por %p181, %p182
    %p184 = scmp.ne.s32.totalorder %s173, %s174
    %p185 = scmp.eq.s32.totalorder %s15, 0
    %p186 = por %p184, %p185
    %p187 = scmp.ne.s32.totalorder %s173, %s174
    %p188 = scmp.eq.s32.totalorder %s16, 7
    %p189 = por %p187, %p188
    %p191 = scmp.ne.s32.totalorder %s174, %s190
    %p192 = scmp.eq.s32.totalorder %s16, 0
    %p193 = por %p191, %p192
    %p194 = scmp.le.s32.totalorder 1, %s10
    %p195 = scmp.lt.s32.totalorder %s10, 9
    %p196 = pnand %p194, %p195
    %p197 = pneg %p196
    // Predicated region
    $region9: #{glm_block_forward.10} parent=5 // pred_check
      _
    $region10: #{glm_block_forward.10} parent=5 // pred_check_branch
      %199 = sbr.rel (%p196) target = $region12
    $region11: #{glm_block_forward.10} parent=5 // pred_region
      %s200 = ssub.s32 %s10, 1
    $region12: #{glm_block_forward.10} parent=5 // pred_fallthru
      _
    %p201 = scmp.lt.s32.totalorder %s10, 8
    // Predicated region
    $region13: #{glm_block_forward.10} parent=5 // pred_check
      %p202 = pneg %p201
    $region14: #{glm_block_forward.10} parent=5 // pred_check_branch
      %204 = sbr.rel (%p202) target = $region16
    $region15: #{glm_block_forward.10} parent=5 // pred_region
      // Predicated region
      $region17: #{glm_block_forward.10} parent=15 // pred_check
        %p205 = pneg %p60
      $region18: #{glm_block_forward.10} parent=15 // pred_check_branch
        %207 = sbr.rel (%p205) target = $region20
      $region19: #{glm_block_forward.10} parent=15 // pred_region
        %p208 = scmp.lt.s32.totalorder %s17, 1
        %s209 = scalar_select %p208, %s17, 1
        %p210 = scmp.lt.s32.totalorder %s18, 3
        %s211 = scalar_select %p210, %s18, 3
        %p212 = scmp.lt.s32.totalorder %s19, 0
        %s213 = scalar_select %p212, %s19, 0
        %s214 = sadd.s32 %s213, %s211
        %s215 = smul.addr %s209, 4
        %s216 = sadd.s32 %s214, %s215
        %s217 = smul.addr %s216, 4
        %s218 = scalar_lea.vmem %s0, %s217
      $region20: #{glm_block_forward.10} parent=15 // pred_fallthru
        _
      // Predicated region
      $region21: #{glm_block_forward.10} parent=15 // pred_check
        %p219 = pneg %p90
      $region22: #{glm_block_forward.10} parent=15 // pred_check_branch
        %221 = sbr.rel (%p219) target = $region24
      $region23: #{glm_block_forward.10} parent=15 // pred_region
        %p222 = scmp.lt.s32.totalorder %s17, 1
        %s223 = scalar_select %p222, %s17, 1
        %p224 = scmp.lt.s32.totalorder %s18, 3
        %s225 = scalar_select %p224, %s18, 3
        %p226 = scmp.lt.s32.totalorder %s20, 0
        %s227 = scalar_select %p226, %s20, 0
        %s228 = sadd.s32 %s227, %s225
        %s229 = smul.addr %s223, 4
        %s230 = sadd.s32 %s228, %s229
        %s231 = smul.addr %s230, 4
        %s232 = scalar_lea.vmem %s1, %s231
      $region24: #{glm_block_forward.10} parent=15 // pred_fallthru
        _
      // Predicated region
      $region25: #{glm_block_forward.10} parent=15 // pred_check
        %p233 = pneg %p120
      $region26: #{glm_block_forward.10} parent=15 // pred_check_branch
        %235 = sbr.rel (%p233) target = $region28
      $region27: #{glm_block_forward.10} parent=15 // pred_region
        %p236 = scmp.lt.s32.totalorder %s17, 1
        %s237 = scalar_select %p236, %s17, 1
        %p238 = scmp.lt.s32.totalorder %s18, 3
        %s239 = scalar_select %p238, %s18, 3
        %p240 = scmp.lt.s32.totalorder %s20, 0
        %s241 = scalar_select %p240, %s20, 0
        %s242 = sadd.s32 %s241, %s239
        %s243 = smul.addr %s237, 4
        %s244 = sadd.s32 %s242, %s243
        %s245 = smul.addr %s244, 4
        %s246 = scalar_lea.vmem %s2, %s245
      $region28: #{glm_block_forward.10} parent=15 // pred_fallthru
        _
      // Predicated region
      $region29: #{glm_block_forward.10} parent=15 // pred_check
        %p247 = pneg %p150
      $region30: #{glm_block_forward.10} parent=15 // pred_check_branch
        %249 = sbr.rel (%p247) target = $region32
      $region31: #{glm_block_forward.10} parent=15 // pred_region
        %p250 = scmp.lt.s32.totalorder %s17, 1
        %s251 = scalar_select %p250, %s17, 1
        %p252 = scmp.lt.s32.totalorder %s19, 0
        %s253 = scalar_select %p252, %s19, 0
        %p254 = scmp.lt.s32.totalorder %s20, 0
        %s255 = scalar_select %p254, %s20, 0
        %s256 = sadd.s32 %s255, %s253
        %s257 = sadd.s32 %s256, %s251
        %s258 = smul.addr %s257, 4
        %s259 = scalar_lea.vmem %s3, %s258
      $region32: #{glm_block_forward.10} parent=15 // pred_fallthru
        _
    $region16: #{glm_block_forward.10} parent=5 // pred_fallthru
      _
    %p260 = scmp.le.s32.totalorder 1, %s10
    %p261 = scmp.lt.s32.totalorder %s10, 9
    %p262 = pnand %p260, %p261
    %p263 = pneg %p262
    // Predicated region
    $region33: #{glm_block_forward.10} parent=5 // pred_check
      _
    $region34: #{glm_block_forward.10} parent=5 // pred_check_branch
      %265 = sbr.rel (%p262) target = $region36
    $region35: #{glm_block_forward.10} parent=5 // pred_region
      %s266 = ssub.s32 %s10, 1
      %p267 = scmp.lt.s32.totalorder %s21, 1
      %s268 = scalar_select %p267, %s21, 1
      %p269 = scmp.lt.s32.totalorder %s22, 3
      %s270 = scalar_select %p269, %s22, 3
      %p271 = scmp.lt.s32.totalorder %s23, 0
      %s272 = scalar_select %p271, %s23, 0
      %s273 = sadd.s32 %s272, %s270
      %s274 = smul.addr %s268, 4
      %s275 = sadd.s32 %s273, %s274
      %s276 = smul.addr %s275, 4
      %s277 = scalar_lea.vmem %s0, %s276
      %p278 = pneg %p66
      %p279 = pneg %p63
      %p280 = scmp.lt.s32.totalorder %s21, 1
      %s281 = scalar_select %p280, %s21, 1
      %p282 = scmp.lt.s32.totalorder %s22, 3
      %s283 = scalar_select %p282, %s22, 3
      %p284 = scmp.lt.s32.totalorder %s24, 0
      %s285 = scalar_select %p284, %s24, 0
      %s286 = sadd.s32 %s285, %s283
      %s287 = smul.addr %s281, 4
      %s288 = sadd.s32 %s286, %s287
      %s289 = smul.addr %s288, 4
      %s290 = scalar_lea.vmem %s1, %s289
      %p291 = pneg %p96
      %p292 = pneg %p93
      %p293 = scmp.lt.s32.totalorder %s21, 1
      %s294 = scalar_select %p293, %s21, 1
      %p295 = scmp.lt.s32.totalorder %s22, 3
      %s296 = scalar_select %p295, %s22, 3
      %p297 = scmp.lt.s32.totalorder %s24, 0
      %s298 = scalar_select %p297, %s24, 0
      %s299 = sadd.s32 %s298, %s296
      %s300 = smul.addr %s294, 4
      %s301 = sadd.s32 %s299, %s300
      %s302 = smul.addr %s301, 4
      %s303 = scalar_lea.vmem %s2, %s302
      %p304 = pneg %p126
      %p305 = pneg %p123
      %p306 = scmp.lt.s32.totalorder %s21, 1
      %s307 = scalar_select %p306, %s21, 1
      %p308 = scmp.lt.s32.totalorder %s23, 0
      %s309 = scalar_select %p308, %s23, 0
      %p310 = scmp.lt.s32.totalorder %s24, 0
      %s311 = scalar_select %p310, %s24, 0
      %s312 = sadd.s32 %s311, %s309
      %s313 = sadd.s32 %s312, %s307
      %s314 = smul.addr %s313, 4
      %s315 = scalar_lea.vmem %s3, %s314
      %p316 = pneg %p156
      %p317 = pneg %p153
      %p318 = pneg %p186
      %p319 = pneg %p183
      %p320 = scmp.lt.s32.totalorder %s21, 1
      %s321 = scalar_select %p320, %s21, 1
      %p322 = scmp.lt.s32.totalorder %s22, 3
      %s323 = scalar_select %p322, %s22, 3
      %p324 = scmp.lt.s32.totalorder %s23, 0
      %s325 = scalar_select %p324, %s23, 0
      %s326 = sadd.s32 %s325, %s323
      %s327 = smul.addr %s321, 4
      %s328 = sadd.s32 %s326, %s327
      %s329 = smul.addr %s328, 4
      %s330 = scalar_lea.vmem %s4, %s329
      %p331 = scmp.lt.s32.totalorder %s21, 1
      %s332 = scalar_select %p331, %s21, 1
      %p333 = scmp.lt.s32.totalorder %s22, 3
      %s334 = scalar_select %p333, %s22, 3
      %p335 = scmp.lt.s32.totalorder %s23, 0
      %s336 = scalar_select %p335, %s23, 0
      %s337 = sadd.s32 %s336, %s334
      %s338 = smul.addr %s332, 4
      %s339 = sadd.s32 %s337, %s338
      %s340 = smul.addr %s339, 4
      %s341 = scalar_lea.vmem %s0, %s340
      %p342 = scmp.lt.s32.totalorder %s21, 1
      %s343 = scalar_select %p342, %s21, 1
      %p344 = scmp.lt.s32.totalorder %s22, 3
      %s345 = scalar_select %p344, %s22, 3
      %p346 = scmp.lt.s32.totalorder %s24, 0
      %s347 = scalar_select %p346, %s24, 0
      %s348 = sadd.s32 %s347, %s345
      %s349 = smul.addr %s343, 4
      %s350 = sadd.s32 %s348, %s349
      %s351 = smul.addr %s350, 4
      %s352 = scalar_lea.vmem %s1, %s351
      %p353 = scmp.lt.s32.totalorder %s21, 1
      %s354 = scalar_select %p353, %s21, 1
      %p355 = scmp.lt.s32.totalorder %s22, 3
      %s356 = scalar_select %p355, %s22, 3
      %p357 = scmp.lt.s32.totalorder %s24, 0
      %s358 = scalar_select %p357, %s24, 0
      %s359 = sadd.s32 %s358, %s356
      %s360 = smul.addr %s354, 4
      %s361 = sadd.s32 %s359, %s360
      %s362 = smul.addr %s361, 4
      %s363 = scalar_lea.vmem %s2, %s362
      %p364 = scmp.lt.s32.totalorder %s21, 1
      %s365 = scalar_select %p364, %s21, 1
      %p366 = scmp.lt.s32.totalorder %s23, 0
      %s367 = scalar_select %p366, %s23, 0
      %p368 = scmp.lt.s32.totalorder %s24, 0
      %s369 = scalar_select %p368, %s24, 0
      %s370 = sadd.s32 %s369, %s367
      %s371 = sadd.s32 %s370, %s365
      %s372 = smul.addr %s371, 4
      %s373 = scalar_lea.vmem %s3, %s372
      %p374 = scmp.lt.s32.totalorder %s21, 1
      %s375 = scalar_select %p374, %s21, 1
      %p376 = scmp.lt.s32.totalorder %s22, 3
      %s377 = scalar_select %p376, %s22, 3
      %p378 = scmp.lt.s32.totalorder %s23, 0
      %s379 = scalar_select %p378, %s23, 0
      %s380 = sadd.s32 %s379, %s377
      %s381 = smul.addr %s375, 4
      %s382 = sadd.s32 %s380, %s381
      %s383 = smul.addr %s382, 4
      %s384 = scalar_lea.vmem %s4, %s383
      %p386 = scmp.eq.s32.totalorder %s24, 0
      // Predicated region
      $region37: #{glm_block_forward.10} parent=35 // pred_check
        %p387 = pneg %p386
      $region38: #{glm_block_forward.10} parent=35 // pred_check_branch
        %389 = sbr.rel (%p387) target = $region40
      $region39: #{glm_block_forward.10} parent=35 // pred_region
        %vm390 = vcmask 7168
        %391 = vst.msk [vmem:[#allocation2] sm:$0xff] %vm390, -inf
        %392 = vst.msk [vmem:[#allocation3] sm:$0xff] %vm390, 0.0
        %vm393 = vcmask 64512
        %394 = vst.msk [vmem:[#allocation4] sm:$0xff] %vm393, 0.0
      $region40: #{glm_block_forward.10} parent=35 // pred_fallthru
        _
      %v395 = vld [vmem:[%s341] sm:$0xf]
      %v396 = vld [vmem:[%s352] sm:$0xf]
      %vm397 = vcmask 64512
      %v399 = vsel %vm397, %v395, 0
      %v402 = vsel %vm397, %v396, 0
      %404 = vmatprep.subr.bf16.mxu0 0
      %405 = vmatpush1.bf16.xpose.msra.mxu0 %v402
      %406 = vmatprep.subr.bf16.mxu0 0
      %407 = vmatpush1.bf16.xpose.msra.mxu0 0
      %408 = vmatprep.subr.bf16.mxu0 0
      %409 = vmatpush1.bf16.xpose.msra.mxu0 0
      %410 = vmatprep.subr.bf16.mxu0 0
      %411 = vmatpush1.bf16.xpose.msra.mxu0 0
      %412 = vmatprep.subr.bf16.mxu0 0
      %413 = vmatpush1.bf16.xpose.msra.mxu0 0
      %414 = vmatprep.subr.bf16.mxu0 0
      %415 = vmatpush1.bf16.xpose.msra.mxu0 0
      %416 = vmatprep.subr.bf16.mxu0 0
      %417 = vmatpush1.bf16.xpose.msra.mxu0 0
      %418 = vmatprep.subr.bf16.mxu0 0
      %419 = vmatpush1.bf16.xpose.msra.mxu0 0
      %420 = vmatprep.subr.bf16.mxu0 0
      %421 = vmatpush1.bf16.xpose.msra.mxu0 0
      %422 = vmatprep.subr.bf16.mxu0 0
      %423 = vmatpush1.bf16.xpose.msra.mxu0 0
      %424 = vmatprep.subr.bf16.mxu0 0
      %425 = vmatpush1.bf16.xpose.msra.mxu0 0
      %426 = vmatprep.subr.bf16.mxu0 0
      %427 = vmatpush1.bf16.xpose.msra.mxu0 0
      %428 = vmatprep.subr.bf16.mxu0 0
      %429 = vmatpush1.bf16.xpose.msra.mxu0 0
      %430 = vmatprep.subr.bf16.mxu0 0
      %431 = vmatpush1.bf16.xpose.msra.mxu0 0
      %432 = vmatprep.subr.bf16.mxu0 0
      %433 = vmatpush1.bf16.xpose.msra.mxu0 0
      %434 = vmatprep.subr.bf16.mxu0 0
      %435 = vmatpush1.bf16.xpose.msra.mxu0 0
      %436 = vmatprep.mubr.bf16.mxu0 0
      %437 = vmatmul.mubr.bf16.gmra.mrb[0].mxu0 %v399
      %v438 = vpop.f32.mrb[0].mxu0
      %v439 = vadd.f32 0.0, %v438
      %v440 = vpop.f32.mrb[0].mxu0
      %v441 = vpop.f32.mrb[0].mxu0
      %v442 = vpop.f32.mrb[0].mxu0
      %443 = vdwg.mxu0
      %v444 = vmul.f32 %v439, 0.35355338
      %v445 = vld [vmem:[%s373] sm:$0xf]
      %v446 = vunpack.c.l.bf16 %v445
      %v447 = vadd.f32 %v444, %v446
      %v448 = vld [vmem:[#allocation2] sm:$0xff]
      %v449 = vsel %vm397, %v447, -inf
      %450 = vmax.xlane.f32.xlu0 %v449
      %v451 = vpop.xlane.xlu0 %450
      %v452 = vmax.f32 %v448, %v451
      %v453 = vsub.f32 %v448, %v452
      %v454 = vmul.f32 %v453, 1.442695
      %v455 = vpow.pop %v454
      %457 = vset.pattern.permute.xlu0 0
      %458 = vperm.xlu0 %457, %v452
      %v459 = vpop.permute.xlu0 %458
      %v461 = vsub.f32 %v447, %v459
      %v462 = vmul.f32 %v461, 1.442695
      %v463 = vpow.pop %v462
      %v464 = vld [vmem:[#allocation3] sm:$0xff]
      %v465 = vmul.f32 %v455, %v464
      %v466 = vsel %vm397, %v463, 0.0
      %467 = vadd.xlane.f32.xlu0 %v466
      %v468 = vpop.xlane.xlu0 %467
      %v469 = vadd.f32 %v465, %v468
      %vm470 = vcmask 7168
      %471 = vst.msk [vmem:[#allocation3] sm:$0xff] %vm470, %v469
      %v472 = vld [vmem:[#allocation4] sm:$0xff]
      %474 = vset.pattern.permute.xlu0 0
      %475 = vperm.xlu0 %474, %v455
      %v476 = vpop.permute.xlu0 %475
      %v478 = vmul.f32 %v476, %v472
      %v479 = vpack.c.bf16 %v463, %v463
      %v480 = vld [vmem:[%s363] sm:$0xf]
      %v482 = vsel %vm397, %v479, 0
      %vm484 = vcmask 1043456
      %v486 = vsel %vm484, %v480, 0
      %488 = vmatprep.subr.bf16.mxu0 0
      %489 = vmatpush1.bf16.msra.mxu0 %v486
      %490 = vmatprep.subr.bf16.mxu0 0
      %491 = vmatpush1.bf16.msra.mxu0 0
      %492 = vmatprep.subr.bf16.mxu0 0
      %493 = vmatpush1.bf16.msra.mxu0 0
      %494 = vmatprep.subr.bf16.mxu0 0
      %495 = vmatpush1.bf16.msra.mxu0 0
      %496 = vmatprep.subr.bf16.mxu0 0
      %497 = vmatpush1.bf16.msra.mxu0 0
      %498 = vmatprep.subr.bf16.mxu0 0
      %499 = vmatpush1.bf16.msra.mxu0 0
      %500 = vmatprep.subr.bf16.mxu0 0
      %501 = vmatpush1.bf16.msra.mxu0 0
      %502 = vmatprep.subr.bf16.mxu0 0
      %503 = vmatpush1.bf16.msra.mxu0 0
      %504 = vmatprep.subr.bf16.mxu0 0
      %505 = vmatpush1.bf16.msra.mxu0 0
      %506 = vmatprep.subr.bf16.mxu0 0
      %507 = vmatpush1.bf16.msra.mxu0 0
      %508 = vmatprep.subr.bf16.mxu0 0
      %509 = vmatpush1.bf16.msra.mxu0 0
      %510 = vmatprep.subr.bf16.mxu0 0
      %511 = vmatpush1.bf16.msra.mxu0 0
      %512 = vmatprep.subr.bf16.mxu0 0
      %513 = vmatpush1.bf16.msra.mxu0 0
      %514 = vmatprep.subr.bf16.mxu0 0
      %515 = vmatpush1.bf16.msra.mxu0 0
      %516 = vmatprep.subr.bf16.mxu0 0
      %517 = vmatpush1.bf16.msra.mxu0 0
      %518 = vmatprep.subr.bf16.mxu0 0
      %519 = vmatpush1.bf16.msra.mxu0 0
      %520 = vmatprep.mubr.bf16.mxu0 0
      %521 = vmatmul.mubr.bf16.gmra.mrb[0].mxu0 %v482
      %v522 = vpop.f32.mrb[0].mxu0
      %v523 = vadd.f32 0.0, %v522
      %v524 = vpop.f32.mrb[0].mxu0
      %v525 = vpop.f32.mrb[0].mxu0
      %v526 = vpop.f32.mrb[0].mxu0
      %527 = vdwg.mxu0
      %v528 = vadd.f32 %v478, %v523
      %529 = vst.msk [vmem:[#allocation4] sm:$0xff] %vm397, %v528
      %530 = vst.msk [vmem:[#allocation2] sm:$0xff] %vm470, %v452
      // Predicated region
      $region41: #{glm_block_forward.10} parent=35 // pred_check
        %p531 = pneg %p386
      $region42: #{glm_block_forward.10} parent=35 // pred_check_branch
        %533 = sbr.rel (%p531) target = $region44
      $region43: #{glm_block_forward.10} parent=35 // pred_region
        %v534 = vld [vmem:[#allocation4] sm:$0xff]
        %v535 = vld [vmem:[#allocation3] sm:$0xff]
        %v536 = vrcp.pop %v535
        %538 = vset.pattern.permute.xlu0 0
        %539 = vperm.xlu0 %538, %v536
        %v540 = vpop.permute.xlu0 %539
        %v542 = vmul.f32 %v534, %v540
        %v543 = vpack.c.bf16 %v542, %v542
        %vm544 = vcmask 60416
        %545 = vst.msk [vmem:[%s384] sm:$0xf] %vm544, %v543
      $region44: #{glm_block_forward.10} parent=35 // pred_fallthru
        _
      %p546 = scmp.lt.s32.totalorder %s21, 1
      %s547 = scalar_select %p546, %s21, 1
      %p548 = scmp.lt.s32.totalorder %s22, 3
      %s549 = scalar_select %p548, %s22, 3
      %p550 = scmp.lt.s32.totalorder %s23, 0
      %s551 = scalar_select %p550, %s23, 0
      %s552 = sadd.s32 %s551, %s549
      %s553 = smul.addr %s547, 4
      %s554 = sadd.s32 %s552, %s553
      %s555 = smul.addr %s554, 4
      %s556 = scalar_lea.vmem %s4, %s555
      // Predicated region
      $region45: #{glm_block_forward.10} parent=35 // pred_check
        %p557 = pneg %p183
      $region46: #{glm_block_forward.10} parent=35 // pred_check_branch
        %559 = sbr.rel (%p557) target = $region48
      $region47: #{glm_block_forward.10} parent=35 // pred_region
        _
      $region48: #{glm_block_forward.10} parent=35 // pred_fallthru
        _
    $region36: #{glm_block_forward.10} parent=5 // pred_fallthru
      _
    %p560 = scmp.le.s32.totalorder 2, %s10
    // Predicated region
    $region49: #{glm_block_forward.10} parent=5 // pred_check
      %p561 = pneg %p560
    $region50: #{glm_block_forward.10} parent=5 // pred_check_branch
      %563 = sbr.rel (%p561) target = $region52
    $region51: #{glm_block_forward.10} parent=5 // pred_region
      %s564 = ssub.s32 %s10, 2
      // Predicated region
      $region53: #{glm_block_forward.10} parent=51 // pred_check
        %p565 = pneg %p189
      $region54: #{glm_block_forward.10} parent=51 // pred_check_branch
        %567 = sbr.rel (%p565) target = $region56
      $region55: #{glm_block_forward.10} parent=51 // pred_region
        %p568 = scmp.lt.s32.totalorder %s25, 1
        %s569 = scalar_select %p568, %s25, 1
        %p570 = scmp.lt.s32.totalorder %s26, 3
        %s571 = scalar_select %p570, %s26, 3
        %p572 = scmp.lt.s32.totalorder %s27, 0
        %s573 = scalar_select %p572, %s27, 0
        %s574 = sadd.s32 %s573, %s571
        %s575 = smul.addr %s569, 4
        %s576 = sadd.s32 %s574, %s575
        %s577 = smul.addr %s576, 4
        %s578 = scalar_lea.vmem %s4, %s577
      $region56: #{glm_block_forward.10} parent=51 // pred_fallthru
        _
    $region52: #{glm_block_forward.10} parent=5 // pred_fallthru
      _
  $region6: #{glm_block_forward.10} parent=0 // loop_footer
    %s14 = sadd.s32 1, %s10
  $region7: #{glm_block_forward.10} parent=0 // loop_footer_branch
    %9 = sbr.rel target = $region3
  $region8: #{glm_block_forward.10} parent=0 // loop_exit
    _

// kernel: glm_block_forward.12
$region0: #{glm_block_forward.12}
  #allocation0 [shape = 'u32[]', space=smem, size = 0x4, offset = 0x4, fixed_abs, tag = 'smem constant byte address 0x4 - core index']
  #allocation1 [shape = 'u32[144,128]{1,0:T(1,128)}', space=vmem, size = 0x12000, scoped, tag = 'internal scratch']
  #allocation2 [shape = 'f32[16,128]{1,0:T(8,128)}', space=vmem, size = 0x2000, scoped, tag = 'scratch operand']
  %s0 = inlined_call_operand.vmem [shape: bf16[16,32], index: 0, kind: input, shape index: {}]
  %s1 = inlined_call_operand.vmem [shape: bf16[32,128], index: 1, kind: input, shape index: {}]
  %s2 = inlined_call_operand.vmem [shape: f32[1,128], index: 2, kind: input, shape index: {}]
  %s3 = inlined_call_operand.vmem [shape: bf16[16,128], index: 3, kind: output, shape index: {}]
  %s4 = sld [smem:[#allocation0]]
  $region30: #{glm_block_forward.12} parent=0
    _
  %s6 = ssub.s32 1, %s4
  %s7 = scalar_select 0, %s6, %s4
  // Predicated region
  $region2: #{glm_block_forward.12} parent=0 // pred_check
    _
  $region3: #{glm_block_forward.12} parent=0 // pred_check_branch
    %9 = sbr.rel (0) target = $region5
  $region4: #{glm_block_forward.12} parent=0 // pred_region
    _
  $region5: #{glm_block_forward.12} parent=0 // pred_fallthru
    _
  // Predicated region
  $region6: #{glm_block_forward.12} parent=0 // pred_check
    _
  $region7: #{glm_block_forward.12} parent=0 // pred_check_branch
    %11 = sbr.rel (0) target = $region9
  $region8: #{glm_block_forward.12} parent=0 // pred_region
    _
  $region9: #{glm_block_forward.12} parent=0 // pred_fallthru
    _
  // Predicated region
  $region10: #{glm_block_forward.12} parent=0 // pred_check
    _
  $region11: #{glm_block_forward.12} parent=0 // pred_check_branch
    %13 = sbr.rel (0) target = $region13
  $region12: #{glm_block_forward.12} parent=0 // pred_region
    _
  $region13: #{glm_block_forward.12} parent=0 // pred_fallthru
    _
  %p15 = scmp.eq.s32.totalorder 0, 0
  // Predicated region
  $region14: #{glm_block_forward.12} parent=0 // pred_check
    %p16 = pneg %p15
  $region15: #{glm_block_forward.12} parent=0 // pred_check_branch
    %18 = sbr.rel (%p16) target = $region17
  $region16: #{glm_block_forward.12} parent=0 // pred_region
    %19 = vst [vmem:[#allocation2] sm:$0xff] 0.0
    %20 = vst [vmem:[#allocation2 + $0x8] sm:$0xff] 0.0
  $region17: #{glm_block_forward.12} parent=0 // pred_fallthru
    _
  %v21 = vld [vmem:[#allocation2] sm:$0xff]
  %v22 = vld [vmem:[#allocation2 + $0x8] sm:$0xff]
  %v23 = vld [vmem:[%s0] sm:$0xf]
  %v24 = vld [vmem:[%s0 + $0x4] sm:$0xf]
  %v25 = vld [vmem:[%s1] sm:$0xf]
  %v26 = vld [vmem:[%s1 + $0x4] sm:$0xf]
  %v27 = vld [vmem:[%s1 + $0x8] sm:$0xf]
  %v28 = vld [vmem:[%s1 + $0xc] sm:$0xf]
  %v31 = vunpack.c.l.b16 %v23
  %v32 = vunpack.c.l.b16 %v24
  %v33 = vpack.c.b16 %v32, %v31
  %v38 = vunpack.c.l.b16 %v25
  %v39 = vunpack.c.l.b16 %v26
  %v40 = vunpack.c.l.b16 %v27
  %v41 = vunpack.c.l.b16 %v28
  %v42 = vpack.c.b16 %v39, %v38
  %v43 = vpack.c.b16 %v41, %v40
  %vm46 = vcmask 261120
  %v48 = vsel %vm46, %v33, 0
  %50 = vmatprep.subr.bf16.mxu0 0
  %51 = vmatpush1.bf16.msra.mxu0 %v42
  %52 = vmatprep.subr.bf16.mxu0 0
  %53 = vmatpush1.bf16.msra.mxu0 %v43
  %54 = vmatprep.subr.bf16.mxu0 0
  %55 = vmatpush1.bf16.msra.mxu0 0
  %56 = vmatprep.subr.bf16.mxu0 0
  %57 = vmatpush1.bf16.msra.mxu0 0
  %58 = vmatprep.subr.bf16.mxu0 0
  %59 = vmatpush1.bf16.msra.mxu0 0
  %60 = vmatprep.subr.bf16.mxu0 0
  %61 = vmatpush1.bf16.msra.mxu0 0
  %62 = vmatprep.subr.bf16.mxu0 0
  %63 = vmatpush1.bf16.msra.mxu0 0
  %64 = vmatprep.subr.bf16.mxu0 0
  %65 = vmatpush1.bf16.msra.mxu0 0
  %66 = vmatprep.subr.bf16.mxu0 0
  %67 = vmatpush1.bf16.msra.mxu0 0
  %68 = vmatprep.subr.bf16.mxu0 0
  %69 = vmatpush1.bf16.msra.mxu0 0
  %70 = vmatprep.subr.bf16.mxu0 0
  %71 = vmatpush1.bf16.msra.mxu0 0
  %72 = vmatprep.subr.bf16.mxu0 0
  %73 = vmatpush1.bf16.msra.mxu0 0
  %74 = vmatprep.subr.bf16.mxu0 0
  %75 = vmatpush1.bf16.msra.mxu0 0
  %76 = vmatprep.subr.bf16.mxu0 0
  %77 = vmatpush1.bf16.msra.mxu0 0
  %78 = vmatprep.subr.bf16.mxu0 0
  %79 = vmatpush1.bf16.msra.mxu0 0
  %80 = vmatprep.subr.bf16.mxu0 0
  %81 = vmatpush1.bf16.msra.mxu0 0
  %82 = vmatprep.mubr.bf16.mxu0 0
  %83 = vmatmul.mubr.bf16.gmra.mrb[0].mxu0 %v48
  %v84 = vpop.f32.mrb[0].mxu0
  %v85 = vadd.f32 0.0, %v84
  %v86 = vpop.f32.mrb[0].mxu0
  %v87 = vpop.f32.mrb[0].mxu0
  %v88 = vadd.f32 0.0, %v87
  %v89 = vpop.f32.mrb[0].mxu0
  %90 = vdwg.mxu0
  %v91 = vadd.f32 %v21, %v85
  %v92 = vadd.f32 %v22, %v88
  %93 = vst [vmem:[#allocation2] sm:$0xff] %v91
  %94 = vst [vmem:[#allocation2 + $0x8] sm:$0xff] %v92
  // Predicated region
  $region18: #{glm_block_forward.12} parent=0 // pred_check
    %p95 = pneg %p15
  $region19: #{glm_block_forward.12} parent=0 // pred_check_branch
    %97 = sbr.rel (%p95) target = $region21
  $region20: #{glm_block_forward.12} parent=0 // pred_region
    %v98 = vld [vmem:[#allocation2] sm:$0xff]
    %v99 = vld [vmem:[#allocation2 + $0x8] sm:$0xff]
    %v100 = vld [vmem:[%s2] sm:$0x1]
    %v102 = vlaneseq
    %v103 = vshrl.u32 %v102, 7
    %v104 = vsub.s32 0, %v103
    %v105 = vrot.slane %v100, %v104
    %v107 = vadd.f32 %v98, %v105
    %v108 = vadd.f32 %v99, %v105
    %v109 = vmul.f32 %v107, 0.5
    %v110 = vmul.f32 %v108, 0.5
    %v111 = vmul.f32 %v107, 0.044715
    %v112 = vmul.f32 %v108, 0.044715
    %v113 = vmul.f32 %v111, %v107
    %v114 = vmul.f32 %v112, %v108
    %v115 = vmul.f32 %v113, %v107
    %v116 = vmul.f32 %v114, %v108
    %v117 = vadd.f32 %v107, %v115
    %v118 = vadd.f32 %v108, %v116
    %v119 = vmul.f32 %v117, 0.7978846
    %v120 = vmul.f32 %v118, 0.7978846
    %v121 = vtanh.pop %v119
    %v122 = vtanh.pop %v120
    %v123 = vadd.f32 %v121, 1.0
    %v124 = vadd.f32 %v122, 1.0
    %v125 = vmul.f32 %v109, %v123
    %v126 = vmul.f32 %v110, %v124
    %v127 = vpack.c.bf16 %v126, %v125
    %v129 = vunpack.c.l.b16 %v127
    %v130 = vunpack.c.h.b16 %v127
    %v131 = vpack.c.b16 %v129, %v129
    %v132 = vpack.c.b16 %v130, %v130
    %135 = vst [vmem:[%s3] sm:$0xf] %v131
    %136 = vst [vmem:[%s3 + $0x4] sm:$0xf] %v132
  $region21: #{glm_block_forward.12} parent=0 // pred_fallthru
    _
  // Predicated region
  $region22: #{glm_block_forward.12} parent=0 // pred_check
    _
  $region23: #{glm_block_forward.12} parent=0 // pred_check_branch
    %138 = sbr.rel (0) target = $region25
  $region24: #{glm_block_forward.12} parent=0 // pred_region
    _
  $region25: #{glm_block_forward.12} parent=0 // pred_fallthru
    _
  // Predicated region
  $region26: #{glm_block_forward.12} parent=0 // pred_check
    _
  $region27: #{glm_block_forward.12} parent=0 // pred_check_branch
    %140 = sbr.rel (0) target = $region29
  $region28: #{glm_block_forward.12} parent=0 // pred_region
    _
  $region29: #{glm_block_forward.12} parent=0 // pred_fallthru
    _

// kernel: glm_block_forward.9
$region0: #{glm_block_forward.9}
  #allocation0 [shape = 'u32[]', space=smem, size = 0x4, offset = 0x4, fixed_abs, tag = 'smem constant byte address 0x4 - core index']
  #allocation1 [shape = 'u32[144,128]{1,0:T(1,128)}', space=vmem, size = 0x12000, scoped, tag = 'internal scratch']
  %s0 = inlined_call_operand.vmem [shape: bf16[16,3,4,8], index: 0, kind: input, shape index: {}, may-alias: {0,1}]
  %s1 = inlined_call_operand.vmem [shape: bf16[16,3,4,8], index: 1, kind: input, shape index: {}, may-alias: {0,1}]
  %s2 = inlined_call_operand.vmem [shape: f32[16,2], index: 2, kind: input, shape index: {}]
  %s3 = inlined_call_operand.vmem [shape: f32[16,2], index: 3, kind: input, shape index: {}]
  %s4 = inlined_call_operand.vmem [shape: f32[16,2], index: 4, kind: input, shape index: {}]
  %s5 = inlined_call_operand.vmem [shape: f32[16,2], index: 5, kind: input, shape index: {}]
  %s6 = inlined_call_operand.vmem [shape: bf16[16,4,8], index: 6, kind: output, shape index: {0}]
  %s7 = inlined_call_operand.vmem [shape: bf16[16,4,8], index: 7, kind: output, shape index: {1}]
  %8 = xla_tuple %s6, %s7
  %s9 = sld [smem:[#allocation0]]
  $region124: #{glm_block_forward.9} parent=0
    _
  %s11 = ssub.s32 1, %s9
  %s12 = scalar_select 0, %s11, %s9
  $region1: #{glm_block_forward.9} parent=0
    #allocation2 [shape = 'u8[16384]{0}', space=vmem, size = 0x4000, scoped, tag = 'input window, operand 0, single buffered']
    #allocation3 [shape = 'u8[16384]{0}', space=vmem, size = 0x4000, scoped, tag = 'input window, operand 1, single buffered']
    // Predicated region
    $region2: #{glm_block_forward.9} parent=1 // pred_check
      _
    $region3: #{glm_block_forward.9} parent=1 // pred_check_branch
      %14 = sbr.rel (0) target = $region5
    $region4: #{glm_block_forward.9} parent=1 // pred_region
      // Predicated region
      $region6: #{glm_block_forward.9} parent=4 // pred_check
        _
      $region7: #{glm_block_forward.9} parent=4 // pred_check_branch
        %16 = sbr.rel (0) target = $region9
      $region8: #{glm_block_forward.9} parent=4 // pred_region
        // Predicated region
        $region10: #{glm_block_forward.9} parent=8 // pred_check
          _
        $region11: #{glm_block_forward.9} parent=8 // pred_check_branch
          %18 = sbr.rel target = $region13
        $region12: #{glm_block_forward.9} parent=8 // pred_region
          // Predicated region
          $region25: #{glm_block_forward.9} parent=12 // pred_check
            _
          $region26: #{glm_block_forward.9} parent=12 // pred_check_branch
            %63 = sbr.rel (0) target = $region28
          $region27: #{glm_block_forward.9} parent=12 // pred_region
            loop: start=0, step=1, limit=1
            $region29: #{glm_block_forward.9} parent=27 // loop_pre_header
              _
            $region30: #{glm_block_forward.9} parent=27 // loop_header
              %s65 = sphi 0, %s69
              %p66 = scmp.ge.s32.totalorder %s65, 1
              %s70 = sphi %s0, %s0
              %s71 = sphi [#allocation2], [#allocation2]
            $region31: #{glm_block_forward.9} parent=27 // loop_header_branch
              %68 = sbr.rel (%p66) target = $region35
            $region32: #{glm_block_forward.9} parent=27 // loop_body
              _
            $region33: #{glm_block_forward.9} parent=27 // loop_footer
              %s69 = sadd.s32 1, %s65
            $region34: #{glm_block_forward.9} parent=27 // loop_footer_branch
              %64 = sbr.rel target = $region30
            $region35: #{glm_block_forward.9} parent=27 // loop_exit
              _
            loop: start=0, step=1, limit=1
            $region36: #{glm_block_forward.9} parent=27 // loop_pre_header
              _
            $region37: #{glm_block_forward.9} parent=27 // loop_header
              %s74 = sphi 0, %s78
              %p75 = scmp.ge.s32.totalorder %s74, 1
              %s79 = sphi %s0, %s0
              %s80 = sphi [#allocation2], [#allocation2]
            $region38: #{glm_block_forward.9} parent=27 // loop_header_branch
              %77 = sbr.rel (%p75) target = $region42
            $region39: #{glm_block_forward.9} parent=27 // loop_body
              %v81 = vld [vmem:[%s79] sm:$0x3]
              %82 = vst [vmem:[%s80] sm:$0x3] %v81
              %v83 = vld [vmem:[%s79 + $0x6] sm:$0x3]
              %84 = vst [vmem:[%s80 + $0x2] sm:$0x3] %v83
              %v85 = vld [vmem:[%s79 + $0xc] sm:$0x3]
              %86 = vst [vmem:[%s80 + $0x4] sm:$0x3] %v85
              %v87 = vld [vmem:[%s79 + $0x12] sm:$0x3]
              %88 = vst [vmem:[%s80 + $0x6] sm:$0x3] %v87
              %v89 = vld [vmem:[%s79 + $0x18] sm:$0x3]
              %90 = vst [vmem:[%s80 + $0x8] sm:$0x3] %v89
              %v91 = vld [vmem:[%s79 + $0x1e] sm:$0x3]
              %92 = vst [vmem:[%s80 + $0xa] sm:$0x3] %v91
              %v93 = vld [vmem:[%s79 + $0x24] sm:$0x3]
              %94 = vst [vmem:[%s80 + $0xc] sm:$0x3] %v93
              %v95 = vld [vmem:[%s79 + $0x2a] sm:$0x3]
              %96 = vst [vmem:[%s80 + $0xe] sm:$0x3] %v95
              %v97 = vld [vmem:[%s79 + $0x30] sm:$0x3]
              %98 = vst [vmem:[%s80 + $0x10] sm:$0x3] %v97
              %v99 = vld [vmem:[%s79 + $0x36] sm:$0x3]
              %100 = vst [vmem:[%s80 + $0x12] sm:$0x3] %v99
              %v101 = vld [vmem:[%s79 + $0x3c] sm:$0x3]
              %102 = vst [vmem:[%s80 + $0x14] sm:$0x3] %v101
              %v103 = vld [vmem:[%s79 + $0x42] sm:$0x3]
              %104 = vst [vmem:[%s80 + $0x16] sm:$0x3] %v103
              %v105 = vld [vmem:[%s79 + $0x48] sm:$0x3]
              %106 = vst [vmem:[%s80 + $0x18] sm:$0x3] %v105
              %v107 = vld [vmem:[%s79 + $0x4e] sm:$0x3]
              %108 = vst [vmem:[%s80 + $0x1a] sm:$0x3] %v107
              %v109 = vld [vmem:[%s79 + $0x54] sm:$0x3]
              %110 = vst [vmem:[%s80 + $0x1c] sm:$0x3] %v109
              %v111 = vld [vmem:[%s79 + $0x5a] sm:$0x3]
              %112 = vst [vmem:[%s80 + $0x1e] sm:$0x3] %v111
            $region40: #{glm_block_forward.9} parent=27 // loop_footer
              %s78 = sadd.s32 1, %s74
            $region41: #{glm_block_forward.9} parent=27 // loop_footer_branch
              %73 = sbr.rel target = $region37
            $region42: #{glm_block_forward.9} parent=27 // loop_exit
              _
          $region28: #{glm_block_forward.9} parent=12 // pred_fallthru
            _
        $region13: #{glm_block_forward.9} parent=8 // pred_fallthru
          _
        // Predicated region
        $region14: #{glm_block_forward.9} parent=8 // pred_check
          _
        $region15: #{glm_block_forward.9} parent=8 // pred_check_branch
          %20 = sbr.rel (0) target = $region17
        $region16: #{glm_block_forward.9} parent=8 // pred_region
          loop: start=0, step=1, limit=1
          $region18: #{glm_block_forward.9} parent=16 // loop_pre_header
            _
          $region19: #{glm_block_forward.9} parent=16 // loop_header
            %s23 = sphi 0, %s27
            %p24 = scmp.ge.s32.totalorder %s23, 1
            %s28 = sphi %s0, %s0
            %s29 = sphi [#allocation2], [#allocation2]
          $region20: #{glm_block_forward.9} parent=16 // loop_header_branch
            %26 = sbr.rel (%p24) target = $region24
          $region21: #{glm_block_forward.9} parent=16 // loop_body
            %v30 = vld [vmem:[%s28] sm:$0x3]
            %31 = vst [vmem:[%s29] sm:$0x3] %v30
            %v32 = vld [vmem:[%s28 + $0x6] sm:$0x3]
            %33 = vst [vmem:[%s29 + $0x2] sm:$0x3] %v32
            %v34 = vld [vmem:[%s28 + $0xc] sm:$0x3]
            %35 = vst [vmem:[%s29 + $0x4] sm:$0x3] %v34
            %v36 = vld [vmem:[%s28 + $0x12] sm:$0x3]
            %37 = vst [vmem:[%s29 + $0x6] sm:$0x3] %v36
            %v38 = vld [vmem:[%s28 + $0x18] sm:$0x3]
            %39 = vst [vmem:[%s29 + $0x8] sm:$0x3] %v38
            %v40 = vld [vmem:[%s28 + $0x1e] sm:$0x3]
            %41 = vst [vmem:[%s29 + $0xa] sm:$0x3] %v40
            %v42 = vld [vmem:[%s28 + $0x24] sm:$0x3]
            %43 = vst [vmem:[%s29 + $0xc] sm:$0x3] %v42
            %v44 = vld [vmem:[%s28 + $0x2a] sm:$0x3]
            %45 = vst [vmem:[%s29 + $0xe] sm:$0x3] %v44
            %v46 = vld [vmem:[%s28 + $0x30] sm:$0x3]
            %47 = vst [vmem:[%s29 + $0x10] sm:$0x3] %v46
            %v48 = vld [vmem:[%s28 + $0x36] sm:$0x3]
            %49 = vst [vmem:[%s29 + $0x12] sm:$0x3] %v48
            %v50 = vld [vmem:[%s28 + $0x3c] sm:$0x3]
            %51 = vst [vmem:[%s29 + $0x14] sm:$0x3] %v50
            %v52 = vld [vmem:[%s28 + $0x42] sm:$0x3]
            %53 = vst [vmem:[%s29 + $0x16] sm:$0x3] %v52
            %v54 = vld [vmem:[%s28 + $0x48] sm:$0x3]
            %55 = vst [vmem:[%s29 + $0x18] sm:$0x3] %v54
            %v56 = vld [vmem:[%s28 + $0x4e] sm:$0x3]
            %57 = vst [vmem:[%s29 + $0x1a] sm:$0x3] %v56
            %v58 = vld [vmem:[%s28 + $0x54] sm:$0x3]
            %59 = vst [vmem:[%s29 + $0x1c] sm:$0x3] %v58
            %v60 = vld [vmem:[%s28 + $0x5a] sm:$0x3]
            %61 = vst [vmem:[%s29 + $0x1e] sm:$0x3] %v60
          $region22: #{glm_block_forward.9} parent=16 // loop_footer
            %s27 = sadd.s32 1, %s23
          $region23: #{glm_block_forward.9} parent=16 // loop_footer_branch
            %22 = sbr.rel target = $region19
          $region24: #{glm_block_forward.9} parent=16 // loop_exit
            _
        $region17: #{glm_block_forward.9} parent=8 // pred_fallthru
          _
      $region9: #{glm_block_forward.9} parent=4 // pred_fallthru
        _
      %113 = vnop
    $region5: #{glm_block_forward.9} parent=1 // pred_fallthru
      _
    // Predicated region
    $region43: #{glm_block_forward.9} parent=1 // pred_check
      _
    $region44: #{glm_block_forward.9} parent=1 // pred_check_branch
      %115 = sbr.rel (0) target = $region46
    $region45: #{glm_block_forward.9} parent=1 // pred_region
      %s116 = scalar_lea.vmem %s1, 2
      // Predicated region
      $region47: #{glm_block_forward.9} parent=45 // pred_check
        _
      $region48: #{glm_block_forward.9} parent=45 // pred_check_branch
        %118 = sbr.rel (0) target = $region50
      $region49: #{glm_block_forward.9} parent=45 // pred_region
        // Predicated region
        $region51: #{glm_block_forward.9} parent=49 // pred_check
          _
        $region52: #{glm_block_forward.9} parent=49 // pred_check_branch
          %120 = sbr.rel target = $region54
        $region53: #{glm_block_forward.9} parent=49 // pred_region
          // Predicated region
          $region66: #{glm_block_forward.9} parent=53 // pred_check
            _
          $region67: #{glm_block_forward.9} parent=53 // pred_check_branch
            %165 = sbr.rel (0) target = $region69
          $region68: #{glm_block_forward.9} parent=53 // pred_region
            loop: start=0, step=1, limit=1
            $region70: #{glm_block_forward.9} parent=68 // loop_pre_header
              _
            $region71: #{glm_block_forward.9} parent=68 // loop_header
              %s167 = sphi 0, %s171
              %p168 = scmp.ge.s32.totalorder %s167, 1
              %s172 = sphi %s116, %s116
              %s173 = sphi [#allocation3], [#allocation3]
            $region72: #{glm_block_forward.9} parent=68 // loop_header_branch
              %170 = sbr.rel (%p168) target = $region76
            $region73: #{glm_block_forward.9} parent=68 // loop_body
              _
            $region74: #{glm_block_forward.9} parent=68 // loop_footer
              %s171 = sadd.s32 1, %s167
            $region75: #{glm_block_forward.9} parent=68 // loop_footer_branch
              %166 = sbr.rel target = $region71
            $region76: #{glm_block_forward.9} parent=68 // loop_exit
              _
            loop: start=0, step=1, limit=1
            $region77: #{glm_block_forward.9} parent=68 // loop_pre_header
              _
            $region78: #{glm_block_forward.9} parent=68 // loop_header
              %s176 = sphi 0, %s180
              %p177 = scmp.ge.s32.totalorder %s176, 1
              %s181 = sphi %s116, %s116
              %s182 = sphi [#allocation3], [#allocation3]
            $region79: #{glm_block_forward.9} parent=68 // loop_header_branch
              %179 = sbr.rel (%p177) target = $region83
            $region80: #{glm_block_forward.9} parent=68 // loop_body
              %v183 = vld [vmem:[%s181] sm:$0x3]
              %184 = vst [vmem:[%s182] sm:$0x3] %v183
              %v185 = vld [vmem:[%s181 + $0x6] sm:$0x3]
              %186 = vst [vmem:[%s182 + $0x2] sm:$0x3] %v185
              %v187 = vld [vmem:[%s181 + $0xc] sm:$0x3]
              %188 = vst [vmem:[%s182 + $0x4] sm:$0x3] %v187
              %v189 = vld [vmem:[%s181 + $0x12] sm:$0x3]
              %190 = vst [vmem:[%s182 + $0x6] sm:$0x3] %v189
              %v191 = vld [vmem:[%s181 + $0x18] sm:$0x3]
              %192 = vst [vmem:[%s182 + $0x8] sm:$0x3] %v191
              %v193 = vld [vmem:[%s181 + $0x1e] sm:$0x3]
              %194 = vst [vmem:[%s182 + $0xa] sm:$0x3] %v193
              %v195 = vld [vmem:[%s181 + $0x24] sm:$0x3]
              %196 = vst [vmem:[%s182 + $0xc] sm:$0x3] %v195
              %v197 = vld [vmem:[%s181 + $0x2a] sm:$0x3]
              %198 = vst [vmem:[%s182 + $0xe] sm:$0x3] %v197
              %v199 = vld [vmem:[%s181 + $0x30] sm:$0x3]
              %200 = vst [vmem:[%s182 + $0x10] sm:$0x3] %v199
              %v201 = vld [vmem:[%s181 + $0x36] sm:$0x3]
              %202 = vst [vmem:[%s182 + $0x12] sm:$0x3] %v201
              %v203 = vld [vmem:[%s181 + $0x3c] sm:$0x3]
              %204 = vst [vmem:[%s182 + $0x14] sm:$0x3] %v203
              %v205 = vld [vmem:[%s181 + $0x42] sm:$0x3]
              %206 = vst [vmem:[%s182 + $0x16] sm:$0x3] %v205
              %v207 = vld [vmem:[%s181 + $0x48] sm:$0x3]
              %208 = vst [vmem:[%s182 + $0x18] sm:$0x3] %v207
              %v209 = vld [vmem:[%s181 + $0x4e] sm:$0x3]
              %210 = vst [vmem:[%s182 + $0x1a] sm:$0x3] %v209
              %v211 = vld [vmem:[%s181 + $0x54] sm:$0x3]
              %212 = vst [vmem:[%s182 + $0x1c] sm:$0x3] %v211
              %v213 = vld [vmem:[%s181 + $0x5a] sm:$0x3]
              %214 = vst [vmem:[%s182 + $0x1e] sm:$0x3] %v213
            $region81: #{glm_block_forward.9} parent=68 // loop_footer
              %s180 = sadd.s32 1, %s176
            $region82: #{glm_block_forward.9} parent=68 // loop_footer_branch
              %175 = sbr.rel target = $region78
            $region83: #{glm_block_forward.9} parent=68 // loop_exit
              _
          $region69: #{glm_block_forward.9} parent=53 // pred_fallthru
            _
        $region54: #{glm_block_forward.9} parent=49 // pred_fallthru
          _
        // Predicated region
        $region55: #{glm_block_forward.9} parent=49 // pred_check
          _
        $region56: #{glm_block_forward.9} parent=49 // pred_check_branch
          %122 = sbr.rel (0) target = $region58
        $region57: #{glm_block_forward.9} parent=49 // pred_region
          loop: start=0, step=1, limit=1
          $region59: #{glm_block_forward.9} parent=57 // loop_pre_header
            _
          $region60: #{glm_block_forward.9} parent=57 // loop_header
            %s125 = sphi 0, %s129
            %p126 = scmp.ge.s32.totalorder %s125, 1
            %s130 = sphi %s116, %s116
            %s131 = sphi [#allocation3], [#allocation3]
          $region61: #{glm_block_forward.9} parent=57 // loop_header_branch
            %128 = sbr.rel (%p126) target = $region65
          $region62: #{glm_block_forward.9} parent=57 // loop_body
            %v132 = vld [vmem:[%s130] sm:$0x3]
            %133 = vst [vmem:[%s131] sm:$0x3] %v132
            %v134 = vld [vmem:[%s130 + $0x6] sm:$0x3]
            %135 = vst [vmem:[%s131 + $0x2] sm:$0x3] %v134
            %v136 = vld [vmem:[%s130 + $0xc] sm:$0x3]
            %137 = vst [vmem:[%s131 + $0x4] sm:$0x3] %v136
            %v138 = vld [vmem:[%s130 + $0x12] sm:$0x3]
            %139 = vst [vmem:[%s131 + $0x6] sm:$0x3] %v138
            %v140 = vld [vmem:[%s130 + $0x18] sm:$0x3]
            %141 = vst [vmem:[%s131 + $0x8] sm:$0x3] %v140
            %v142 = vld [vmem:[%s130 + $0x1e] sm:$0x3]
            %143 = vst [vmem:[%s131 + $0xa] sm:$0x3] %v142
            %v144 = vld [vmem:[%s130 + $0x24] sm:$0x3]
            %145 = vst [vmem:[%s131 + $0xc] sm:$0x3] %v144
            %v146 = vld [vmem:[%s130 + $0x2a] sm:$0x3]
            %147 = vst [vmem:[%s131 + $0xe] sm:$0x3] %v146
            %v148 = vld [vmem:[%s130 + $0x30] sm:$0x3]
            %149 = vst [vmem:[%s131 + $0x10] sm:$0x3] %v148
            %v150 = vld [vmem:[%s130 + $0x36] sm:$0x3]
            %151 = vst [vmem:[%s131 + $0x12] sm:$0x3] %v150
            %v152 = vld [vmem:[%s130 + $0x3c] sm:$0x3]
            %153 = vst [vmem:[%s131 + $0x14] sm:$0x3] %v152
            %v154 = vld [vmem:[%s130 + $0x42] sm:$0x3]
            %155 = vst [vmem:[%s131 + $0x16] sm:$0x3] %v154
            %v156 = vld [vmem:[%s130 + $0x48] sm:$0x3]
            %157 = vst [vmem:[%s131 + $0x18] sm:$0x3] %v156
            %v158 = vld [vmem:[%s130 + $0x4e] sm:$0x3]
            %159 = vst [vmem:[%s131 + $0x1a] sm:$0x3] %v158
            %v160 = vld [vmem:[%s130 + $0x54] sm:$0x3]
            %161 = vst [vmem:[%s131 + $0x1c] sm:$0x3] %v160
            %v162 = vld [vmem:[%s130 + $0x5a] sm:$0x3]
            %163 = vst [vmem:[%s131 + $0x1e] sm:$0x3] %v162
          $region63: #{glm_block_forward.9} parent=57 // loop_footer
            %s129 = sadd.s32 1, %s125
          $region64: #{glm_block_forward.9} parent=57 // loop_footer_branch
            %124 = sbr.rel target = $region60
          $region65: #{glm_block_forward.9} parent=57 // loop_exit
            _
        $region58: #{glm_block_forward.9} parent=49 // pred_fallthru
          _
      $region50: #{glm_block_forward.9} parent=45 // pred_fallthru
        _
      %215 = vnop
    $region46: #{glm_block_forward.9} parent=1 // pred_fallthru
      _
    // Predicated region
    $region84: #{glm_block_forward.9} parent=1 // pred_check
      _
    $region85: #{glm_block_forward.9} parent=1 // pred_check_branch
      %217 = sbr.rel (0) target = $region87
    $region86: #{glm_block_forward.9} parent=1 // pred_region
      _
    $region87: #{glm_block_forward.9} parent=1 // pred_fallthru
      _
    // Predicated region
    $region88: #{glm_block_forward.9} parent=1 // pred_check
      _
    $region89: #{glm_block_forward.9} parent=1 // pred_check_branch
      %219 = sbr.rel (0) target = $region91
    $region90: #{glm_block_forward.9} parent=1 // pred_region
      _
    $region91: #{glm_block_forward.9} parent=1 // pred_fallthru
      _
    // Predicated region
    $region92: #{glm_block_forward.9} parent=1 // pred_check
      _
    $region93: #{glm_block_forward.9} parent=1 // pred_check_branch
      %221 = sbr.rel (0) target = $region95
    $region94: #{glm_block_forward.9} parent=1 // pred_region
      _
    $region95: #{glm_block_forward.9} parent=1 // pred_fallthru
      _
    // Predicated region
    $region96: #{glm_block_forward.9} parent=1 // pred_check
      _
    $region97: #{glm_block_forward.9} parent=1 // pred_check_branch
      %223 = sbr.rel (0) target = $region99
    $region98: #{glm_block_forward.9} parent=1 // pred_region
      _
    $region99: #{glm_block_forward.9} parent=1 // pred_fallthru
      _
    // Predicated region
    $region100: #{glm_block_forward.9} parent=1 // pred_check
      _
    $region101: #{glm_block_forward.9} parent=1 // pred_check_branch
      %225 = sbr.rel (0) target = $region103
    $region102: #{glm_block_forward.9} parent=1 // pred_region
      _
    $region103: #{glm_block_forward.9} parent=1 // pred_fallthru
      _
    // Predicated region
    $region104: #{glm_block_forward.9} parent=1 // pred_check
      _
    $region105: #{glm_block_forward.9} parent=1 // pred_check_branch
      %227 = sbr.rel (0) target = $region107
    $region106: #{glm_block_forward.9} parent=1 // pred_region
      _
    $region107: #{glm_block_forward.9} parent=1 // pred_fallthru
      _
    %v228 = vld [vmem:[%s2] sm:$0xff]
    %v229 = vld [vmem:[%s2 + $0x8] sm:$0xff]
    %v232 = vcombine.high %v228, %v228
    %v234 = vunpack.c.l.s4 1966171168
    %v235 = vunpack.c.0.s8 %v234
    %v236 = vlaneseq
    %v237 = vshrl.u32 %v236, 7
    %v238 = vsub.s32 %v235, %v237
    %v239 = vrot.slane %v228, %v238
    %v241 = vunpack.c.l.s4 1966171168
    %v242 = vunpack.c.0.s8 %v241
    %v243 = vlaneseq
    %v244 = vshrl.u32 %v243, 7
    %v245 = vsub.s32 %v242, %v244
    %v246 = vrot.slane %v232, %v245
    %v247 = vcombine.high %v239, %v239
    %v248 = vcombine.high %v246, %v246
    %v250 = vunpack.c.l.s4 1966171168
    %v251 = vunpack.c.0.s8 %v250
    %v252 = vlaneseq
    %v253 = vshrl.u32 %v252, 7
    %v254 = vsub.s32 %v251, %v253
    %v255 = vrot.slane %v239, %v254
    %v257 = vunpack.c.l.s4 1966171168
    %v258 = vunpack.c.0.s8 %v257
    %v259 = vlaneseq
    %v260 = vshrl.u32 %v259, 7
    %v261 = vsub.s32 %v258, %v260
    %v262 = vrot.slane %v246, %v261
    %v264 = vunpack.c.l.s4 1966171168
    %v265 = vunpack.c.0.s8 %v264
    %v266 = vlaneseq
    %v267 = vshrl.u32 %v266, 7
    %v268 = vsub.s32 %v265, %v267
    %v269 = vrot.slane %v247, %v268
    %v271 = vunpack.c.l.s4 1966171168
    %v272 = vunpack.c.0.s8 %v271
    %v273 = vlaneseq
    %v274 = vshrl.u32 %v273, 7
    %v275 = vsub.s32 %v272, %v274
    %v276 = vrot.slane %v248, %v275
    %v277 = vcombine.high %v255, %v255
    %v278 = vcombine.high %v262, %v262
    %v279 = vcombine.high %v269, %v269
    %v280 = vcombine.high %v276, %v276
    %v281 = vcombine.high %v229, %v229
    %v283 = vunpack.c.l.s4 1966171168
    %v284 = vunpack.c.0.s8 %v283
    %v285 = vlaneseq
    %v286 = vshrl.u32 %v285, 7
    %v287 = vsub.s32 %v284, %v286
    %v288 = vrot.slane %v229, %v287
    %v290 = vunpack.c.l.s4 1966171168
    %v291 = vunpack.c.0.s8 %v290
    %v292 = vlaneseq
    %v293 = vshrl.u32 %v292, 7
    %v294 = vsub.s32 %v291, %v293
    %v295 = vrot.slane %v281, %v294
    %v296 = vcombine.high %v288, %v288
    %v297 = vcombine.high %v295, %v295
    %v299 = vunpack.c.l.s4 1966171168
    %v300 = vunpack.c.0.s8 %v299
    %v301 = vlaneseq
    %v302 = vshrl.u32 %v301, 7
    %v303 = vsub.s32 %v300, %v302
    %v304 = vrot.slane %v288, %v303
    %v306 = vunpack.c.l.s4 1966171168
    %v307 = vunpack.c.0.s8 %v306
    %v308 = vlaneseq
    %v309 = vshrl.u32 %v308, 7
    %v310 = vsub.s32 %v307, %v309
    %v311 = vrot.slane %v295, %v310
    %v313 = vunpack.c.l.s4 1966171168
    %v314 = vunpack.c.0.s8 %v313
    %v315 = vlaneseq
    %v316 = vshrl.u32 %v315, 7
    %v317 = vsub.s32 %v314, %v316
    %v318 = vrot.slane %v296, %v317
    %v320 = vunpack.c.l.s4 1966171168
    %v321 = vunpack.c.0.s8 %v320
    %v322 = vlaneseq
    %v323 = vshrl.u32 %v322, 7
    %v324 = vsub.s32 %v321, %v323
    %v325 = vrot.slane %v297, %v324
    %v326 = vcombine.high %v304, %v304
    %v327 = vcombine.high %v311, %v311
    %v328 = vcombine.high %v318, %v318
    %v329 = vcombine.high %v325, %v325
    %v330 = vld [vmem:[%s3] sm:$0xff]
    %v331 = vld [vmem:[%s3 + $0x8] sm:$0xff]
    %v334 = vcombine.high %v330, %v330
    %v336 = vunpack.c.l.s4 1966171168
    %v337 = vunpack.c.0.s8 %v336
    %v338 = vlaneseq
    %v339 = vshrl.u32 %v338, 7
    %v340 = vsub.s32 %v337, %v339
    %v341 = vrot.slane %v330, %v340
    %v343 = vunpack.c.l.s4 1966171168
    %v344 = vunpack.c.0.s8 %v343
    %v345 = vlaneseq
    %v346 = vshrl.u32 %v345, 7
    %v347 = vsub.s32 %v344, %v346
    %v348 = vrot.slane %v334, %v347
    %v349 = vcombine.high %v341, %v341
    %v350 = vcombine.high %v348, %v348
    %v352 = vunpack.c.l.s4 1966171168
    %v353 = vunpack.c.0.s8 %v352
    %v354 = vlaneseq
    %v355 = vshrl.u32 %v354, 7
    %v356 = vsub.s32 %v353, %v355
    %v357 = vrot.slane %v341, %v356
    %v359 = vunpack.c.l.s4 1966171168
    %v360 = vunpack.c.0.s8 %v359
    %v361 = vlaneseq
    %v362 = vshrl.u32 %v361, 7
    %v363 = vsub.s32 %v360, %v362
    %v364 = vrot.slane %v348, %v363
    %v366 = vunpack.c.l.s4 1966171168
    %v367 = vunpack.c.0.s8 %v366
    %v368 = vlaneseq
    %v369 = vshrl.u32 %v368, 7
    %v370 = vsub.s32 %v367, %v369
    %v371 = vrot.slane %v349, %v370
    %v373 = vunpack.c.l.s4 1966171168
    %v374 = vunpack.c.0.s8 %v373
    %v375 = vlaneseq
    %v376 = vshrl.u32 %v375, 7
    %v377 = vsub.s32 %v374, %v376
    %v378 = vrot.slane %v350, %v377
    %v379 = vcombine.high %v357, %v357
    %v380 = vcombine.high %v364, %v364
    %v381 = vcombine.high %v371, %v371
    %v382 = vcombine.high %v378, %v378
    %v383 = vcombine.high %v331, %v331
    %v385 = vunpack.c.l.s4 1966171168
    %v386 = vunpack.c.0.s8 %v385
    %v387 = vlaneseq
    %v388 = vshrl.u32 %v387, 7
    %v389 = vsub.s32 %v386, %v388
    %v390 = vrot.slane %v331, %v389
    %v392 = vunpack.c.l.s4 1966171168
    %v393 = vunpack.c.0.s8 %v392
    %v394 = vlaneseq
    %v395 = vshrl.u32 %v394, 7
    %v396 = vsub.s32 %v393, %v395
    %v397 = vrot.slane %v383, %v396
    %v398 = vcombine.high %v390, %v390
    %v399 = vcombine.high %v397, %v397
    %v401 = vunpack.c.l.s4 1966171168
    %v402 = vunpack.c.0.s8 %v401
    %v403 = vlaneseq
    %v404 = vshrl.u32 %v403, 7
    %v405 = vsub.s32 %v402, %v404
    %v406 = vrot.slane %v390, %v405
    %v408 = vunpack.c.l.s4 1966171168
    %v409 = vunpack.c.0.s8 %v408
    %v410 = vlaneseq
    %v411 = vshrl.u32 %v410, 7
    %v412 = vsub.s32 %v409, %v411
    %v413 = vrot.slane %v397, %v412
    %v415 = vunpack.c.l.s4 1966171168
    %v416 = vunpack.c.0.s8 %v415
    %v417 = vlaneseq
    %v418 = vshrl.u32 %v417, 7
    %v419 = vsub.s32 %v416, %v418
    %v420 = vrot.slane %v398, %v419
    %v422 = vunpack.c.l.s4 1966171168
    %v423 = vunpack.c.0.s8 %v422
    %v424 = vlaneseq
    %v425 = vshrl.u32 %v424, 7
    %v426 = vsub.s32 %v423, %v425
    %v427 = vrot.slane %v399, %v426
    %v428 = vcombine.high %v406, %v406
    %v429 = vcombine.high %v413, %v413
    %v430 = vcombine.high %v420, %v420
    %v431 = vcombine.high %v427, %v427
    %v432 = vld [vmem:[%s4] sm:$0xff]
    %v433 = vld [vmem:[%s4 + $0x8] sm:$0xff]
    %v436 = vcombine.high %v432, %v432
    %v438 = vunpack.c.l.s4 1966171168
    %v439 = vunpack.c.0.s8 %v438
    %v440 = vlaneseq
    %v441 = vshrl.u32 %v440, 7
    %v442 = vsub.s32 %v439, %v441
    %v443 = vrot.slane %v432, %v442
    %v445 = vunpack.c.l.s4 1966171168
    %v446 = vunpack.c.0.s8 %v445
    %v447 = vlaneseq
    %v448 = vshrl.u32 %v447, 7
    %v449 = vsub.s32 %v446, %v448
    %v450 = vrot.slane %v436, %v449
    %v451 = vcombine.high %v443, %v443
    %v452 = vcombine.high %v450, %v450
    %v454 = vunpack.c.l.s4 1966171168
    %v455 = vunpack.c.0.s8 %v454
    %v456 = vlaneseq
    %v457 = vshrl.u32 %v456, 7
    %v458 = vsub.s32 %v455, %v457
    %v459 = vrot.slane %v443, %v458
    %v461 = vunpack.c.l.s4 1966171168
    %v462 = vunpack.c.0.s8 %v461
    %v463 = vlaneseq
    %v464 = vshrl.u32 %v463, 7
    %v465 = vsub.s32 %v462, %v464
    %v466 = vrot.slane %v450, %v465
    %v468 = vunpack.c.l.s4 1966171168
    %v469 = vunpack.c.0.s8 %v468
    %v470 = vlaneseq
    %v471 = vshrl.u32 %v470, 7
    %v472 = vsub.s32 %v469, %v471
    %v473 = vrot.slane %v451, %v472
    %v475 = vunpack.c.l.s4 1966171168
    %v476 = vunpack.c.0.s8 %v475
    %v477 = vlaneseq
    %v478 = vshrl.u32 %v477, 7
    %v479 = vsub.s32 %v476, %v478
    %v480 = vrot.slane %v452, %v479
    %v481 = vcombine.high %v459, %v459
    %v482 = vcombine.high %v466, %v466
    %v483 = vcombine.high %v473, %v473
    %v484 = vcombine.high %v480, %v480
    %v485 = vcombine.high %v433, %v433
    %v487 = vunpack.c.l.s4 1966171168
    %v488 = vunpack.c.0.s8 %v487
    %v489 = vlaneseq
    %v490 = vshrl.u32 %v489, 7
    %v491 = vsub.s32 %v488, %v490
    %v492 = vrot.slane %v433, %v491
    %v494 = vunpack.c.l.s4 1966171168
    %v495 = vunpack.c.0.s8 %v494
    %v496 = vlaneseq
    %v497 = vshrl.u32 %v496, 7
    %v498 = vsub.s32 %v495, %v497
    %v499 = vrot.slane %v485, %v498
    %v500 = vcombine.high %v492, %v492
    %v501 = vcombine.high %v499, %v499
    %v503 = vunpack.c.l.s4 1966171168
    %v504 = vunpack.c.0.s8 %v503
    %v505 = vlaneseq
    %v506 = vshrl.u32 %v505, 7
    %v507 = vsub.s32 %v504, %v506
    %v508 = vrot.slane %v492, %v507
    %v510 = vunpack.c.l.s4 1966171168
    %v511 = vunpack.c.0.s8 %v510
    %v512 = vlaneseq
    %v513 = vshrl.u32 %v512, 7
    %v514 = vsub.s32 %v511, %v513
    %v515 = vrot.slane %v499, %v514
    %v517 = vunpack.c.l.s4 1966171168
    %v518 = vunpack.c.0.s8 %v517
    %v519 = vlaneseq
    %v520 = vshrl.u32 %v519, 7
    %v521 = vsub.s32 %v518, %v520
    %v522 = vrot.slane %v500, %v521
    %v524 = vunpack.c.l.s4 1966171168
    %v525 = vunpack.c.0.s8 %v524
    %v526 = vlaneseq
    %v527 = vshrl.u32 %v526, 7
    %v528 = vsub.s32 %v525, %v527
    %v529 = vrot.slane %v501, %v528
    %v530 = vcombine.high %v508, %v508
    %v531 = vcombine.high %v515, %v515
    %v532 = vcombine.high %v522, %v522
    %v533 = vcombine.high %v529, %v529
    %v534 = vld [vmem:[%s5] sm:$0xff]
    %v535 = vld [vmem:[%s5 + $0x8] sm:$0xff]
    %v538 = vcombine.high %v534, %v534
    %v540 = vunpack.c.l.s4 1966171168
    %v541 = vunpack.c.0.s8 %v540
    %v542 = vlaneseq
    %v543 = vshrl.u32 %v542, 7
    %v544 = vsub.s32 %v541, %v543
    %v545 = vrot.slane %v534, %v544
    %v547 = vunpack.c.l.s4 1966171168
    %v548 = vunpack.c.0.s8 %v547
    %v549 = vlaneseq
    %v550 = vshrl.u32 %v549, 7
    %v551 = vsub.s32 %v548, %v550
    %v552 = vrot.slane %v538, %v551
    %v553 = vcombine.high %v545, %v545
    %v554 = vcombine.high %v552, %v552
    %v556 = vunpack.c.l.s4 1966171168
    %v557 = vunpack.c.0.s8 %v556
    %v558 = vlaneseq
    %v559 = vshrl.u32 %v558, 7
    %v560 = vsub.s32 %v557, %v559
    %v561 = vrot.slane %v545, %v560
    %v563 = vunpack.c.l.s4 1966171168
    %v564 = vunpack.c.0.s8 %v563
    %v565 = vlaneseq
    %v566 = vshrl.u32 %v565, 7
    %v567 = vsub.s32 %v564, %v566
    %v568 = vrot.slane %v552, %v567
    %v570 = vunpack.c.l.s4 1966171168
    %v571 = vunpack.c.0.s8 %v570
    %v572 = vlaneseq
    %v573 = vshrl.u32 %v572, 7
    %v574 = vsub.s32 %v571, %v573
    %v575 = vrot.slane %v553, %v574
    %v577 = vunpack.c.l.s4 1966171168
    %v578 = vunpack.c.0.s8 %v577
    %v579 = vlaneseq
    %v580 = vshrl.u32 %v579, 7
    %v581 = vsub.s32 %v578, %v580
    %v582 = vrot.slane %v554, %v581
    %v583 = vcombine.high %v561, %v561
    %v584 = vcombine.high %v568, %v568
    %v585 = vcombine.high %v575, %v575
    %v586 = vcombine.high %v582, %v582
    %v587 = vcombine.high %v535, %v535
    %v589 = vunpack.c.l.s4 1966171168
    %v590 = vunpack.c.0.s8 %v589
    %v591 = vlaneseq
    %v592 = vshrl.u32 %v591, 7
    %v593 = vsub.s32 %v590, %v592
    %v594 = vrot.slane %v535, %v593
    %v596 = vunpack.c.l.s4 1966171168
    %v597 = vunpack.c.0.s8 %v596
    %v598 = vlaneseq
    %v599 = vshrl.u32 %v598, 7
    %v600 = vsub.s32 %v597, %v599
    %v601 = vrot.slane %v587, %v600
    %v602 = vcombine.high %v594, %v594
    %v603 = vcombine.high %v601, %v601
    %v605 = vunpack.c.l.s4 1966171168
    %v606 = vunpack.c.0.s8 %v605
    %v607 = vlaneseq
    %v608 = vshrl.u32 %v607, 7
    %v609 = vsub.s32 %v606, %v608
    %v610 = vrot.slane %v594, %v609
    %v612 = vunpack.c.l.s4 1966171168
    %v613 = vunpack.c.0.s8 %v612
    %v614 = vlaneseq
    %v615 = vshrl.u32 %v614, 7
    %v616 = vsub.s32 %v613, %v615
    %v617 = vrot.slane %v601, %v616
    %v619 = vunpack.c.l.s4 1966171168
    %v620 = vunpack.c.0.s8 %v619
    %v621 = vlaneseq
    %v622 = vshrl.u32 %v621, 7
    %v623 = vsub.s32 %v620, %v622
    %v624 = vrot.slane %v602, %v623
    %v626 = vunpack.c.l.s4 1966171168
    %v627 = vunpack.c.0.s8 %v626
    %v628 = vlaneseq
    %v629 = vshrl.u32 %v628, 7
    %v630 = vsub.s32 %v627, %v629
    %v631 = vrot.slane %v603, %v630
    %v632 = vcombine.high %v610, %v610
    %v633 = vcombine.high %v617, %v617
    %v634 = vcombine.high %v624, %v624
    %v635 = vcombine.high %v631, %v631
    %v636 = vld [vmem:[#allocation2] sm:$0x3]
    %v637 = vld [vmem:[#allocation2 + $0x2] sm:$0x3]
    %v638 = vld [vmem:[#allocation2 + $0x4] sm:$0x3]
    %v639 = vld [vmem:[#allocation2 + $0x6] sm:$0x3]
    %v640 = vld [vmem:[#allocation2 + $0x8] sm:$0x3]
    %v641 = vld [vmem:[#allocation2 + $0xa] sm:$0x3]
    %v642 = vld [vmem:[#allocation2 + $0xc] sm:$0x3]
    %v643 = vld [vmem:[#allocation2 + $0xe] sm:$0x3]
    %v644 = vld [vmem:[#allocation2 + $0x10] sm:$0x3]
    %v645 = vld [vmem:[#allocation2 + $0x12] sm:$0x3]
    %v646 = vld [vmem:[#allocation2 + $0x14] sm:$0x3]
    %v647 = vld [vmem:[#allocation2 + $0x16] sm:$0x3]
    %v648 = vld [vmem:[#allocation2 + $0x18] sm:$0x3]
    %v649 = vld [vmem:[#allocation2 + $0x1a] sm:$0x3]
    %v650 = vld [vmem:[#allocation2 + $0x1c] sm:$0x3]
    %v651 = vld [vmem:[#allocation2 + $0x1e] sm:$0x3]
    %v652 = vunpack.c.l.bf16 %v636
    %v653 = vunpack.c.l.bf16 %v637
    %v654 = vunpack.c.l.bf16 %v638
    %v655 = vunpack.c.l.bf16 %v639
    %v656 = vunpack.c.l.bf16 %v640
    %v657 = vunpack.c.l.bf16 %v641
    %v658 = vunpack.c.l.bf16 %v642
    %v659 = vunpack.c.l.bf16 %v643
    %v660 = vunpack.c.l.bf16 %v644
    %v661 = vunpack.c.l.bf16 %v645
    %v662 = vunpack.c.l.bf16 %v646
    %v663 = vunpack.c.l.bf16 %v647
    %v664 = vunpack.c.l.bf16 %v648
    %v665 = vunpack.c.l.bf16 %v649
    %v666 = vunpack.c.l.bf16 %v650
    %v667 = vunpack.c.l.bf16 %v651
    %v668 = vlaneseq
    %v669 = vshrl.u32 %v668, 7
    %v670 = vsub.s32 0, %v669
    %v671 = vrot.slane %v255, %v670
    %v672 = vlaneseq
    %v673 = vshrl.u32 %v672, 7
    %v674 = vsub.s32 0, %v673
    %v675 = vrot.slane %v269, %v674
    %v676 = vlaneseq
    %v677 = vshrl.u32 %v676, 7
    %v678 = vsub.s32 0, %v677
    %v679 = vrot.slane %v277, %v678
    %v680 = vlaneseq
    %v681 = vshrl.u32 %v680, 7
    %v682 = vsub.s32 0, %v681
    %v683 = vrot.slane %v279, %v682
    %v684 = vlaneseq
    %v685 = vshrl.u32 %v684, 7
    %v686 = vsub.s32 0, %v685
    %v687 = vrot.slane %v262, %v686
    %v688 = vlaneseq
    %v689 = vshrl.u32 %v688, 7
    %v690 = vsub.s32 0, %v689
    %v691 = vrot.slane %v276, %v690
    %v692 = vlaneseq
    %v693 = vshrl.u32 %v692, 7
    %v694 = vsub.s32 0, %v693
    %v695 = vrot.slane %v278, %v694
    %v696 = vlaneseq
    %v697 = vshrl.u32 %v696, 7
    %v698 = vsub.s32 0, %v697
    %v699 = vrot.slane %v280, %v698
    %v700 = vlaneseq
    %v701 = vshrl.u32 %v700, 7
    %v702 = vsub.s32 0, %v701
    %v703 = vrot.slane %v304, %v702
    %v704 = vlaneseq
    %v705 = vshrl.u32 %v704, 7
    %v706 = vsub.s32 0, %v705
    %v707 = vrot.slane %v318, %v706
    %v708 = vlaneseq
    %v709 = vshrl.u32 %v708, 7
    %v710 = vsub.s32 0, %v709
    %v711 = vrot.slane %v326, %v710
    %v712 = vlaneseq
    %v713 = vshrl.u32 %v712, 7
    %v714 = vsub.s32 0, %v713
    %v715 = vrot.slane %v328, %v714
    %v716 = vlaneseq
    %v717 = vshrl.u32 %v716, 7
    %v718 = vsub.s32 0, %v717
    %v719 = vrot.slane %v311, %v718
    %v720 = vlaneseq
    %v721 = vshrl.u32 %v720, 7
    %v722 = vsub.s32 0, %v721
    %v723 = vrot.slane %v325, %v722
    %v724 = vlaneseq
    %v725 = vshrl.u32 %v724, 7
    %v726 = vsub.s32 0, %v725
    %v727 = vrot.slane %v327, %v726
    %v728 = vlaneseq
    %v729 = vshrl.u32 %v728, 7
    %v730 = vsub.s32 0, %v729
    %v731 = vrot.slane %v329, %v730
    %v748 = vmul.f32 %v652, %v671
    %v749 = vmul.f32 %v653, %v675
    %v750 = vmul.f32 %v654, %v679
    %v751 = vmul.f32 %v655, %v683
    %v752 = vmul.f32 %v656, %v687
    %v753 = vmul.f32 %v657, %v691
    %v754 = vmul.f32 %v658, %v695
    %v755 = vmul.f32 %v659, %v699
    %v756 = vmul.f32 %v660, %v703
    %v757 = vmul.f32 %v661, %v707
    %v758 = vmul.f32 %v662, %v711
    %v759 = vmul.f32 %v663, %v715
    %v760 = vmul.f32 %v664, %v719
    %v761 = vmul.f32 %v665, %v723
    %v762 = vmul.f32 %v666, %v727
    %v763 = vmul.f32 %v667, %v731
    %v764 = vlaneseq
    %v765 = vshrl.u32 %v764, 7
    %v766 = vsub.s32 0, %v765
    %v767 = vrot.slane %v357, %v766
    %v768 = vlaneseq
    %v769 = vshrl.u32 %v768, 7
    %v770 = vsub.s32 0, %v769
    %v771 = vrot.slane %v371, %v770
    %v772 = vlaneseq
    %v773 = vshrl.u32 %v772, 7
    %v774 = vsub.s32 0, %v773
    %v775 = vrot.slane %v379, %v774
    %v776 = vlaneseq
    %v777 = vshrl.u32 %v776, 7
    %v778 = vsub.s32 0, %v777
    %v779 = vrot.slane %v381, %v778
    %v780 = vlaneseq
    %v781 = vshrl.u32 %v780, 7
    %v782 = vsub.s32 0, %v781
    %v783 = vrot.slane %v364, %v782
    %v784 = vlaneseq
    %v785 = vshrl.u32 %v784, 7
    %v786 = vsub.s32 0, %v785
    %v787 = vrot.slane %v378, %v786
    %v788 = vlaneseq
    %v789 = vshrl.u32 %v788, 7
    %v790 = vsub.s32 0, %v789
    %v791 = vrot.slane %v380, %v790
    %v792 = vlaneseq
    %v793 = vshrl.u32 %v792, 7
    %v794 = vsub.s32 0, %v793
    %v795 = vrot.slane %v382, %v794
    %v796 = vlaneseq
    %v797 = vshrl.u32 %v796, 7
    %v798 = vsub.s32 0, %v797
    %v799 = vrot.slane %v406, %v798
    %v800 = vlaneseq
    %v801 = vshrl.u32 %v800, 7
    %v802 = vsub.s32 0, %v801
    %v803 = vrot.slane %v420, %v802
    %v804 = vlaneseq
    %v805 = vshrl.u32 %v804, 7
    %v806 = vsub.s32 0, %v805
    %v807 = vrot.slane %v428, %v806
    %v808 = vlaneseq
    %v809 = vshrl.u32 %v808, 7
    %v810 = vsub.s32 0, %v809
    %v811 = vrot.slane %v430, %v810
    %v812 = vlaneseq
    %v813 = vshrl.u32 %v812, 7
    %v814 = vsub.s32 0, %v813
    %v815 = vrot.slane %v413, %v814
    %v816 = vlaneseq
    %v817 = vshrl.u32 %v816, 7
    %v818 = vsub.s32 0, %v817
    %v819 = vrot.slane %v427, %v818
    %v820 = vlaneseq
    %v821 = vshrl.u32 %v820, 7
    %v822 = vsub.s32 0, %v821
    %v823 = vrot.slane %v429, %v822
    %v824 = vlaneseq
    %v825 = vshrl.u32 %v824, 7
    %v826 = vsub.s32 0, %v825
    %v827 = vrot.slane %v431, %v826
    %844 = vrot.lane.b32.xlu0 %v767, 2
    %v845 = vpop.permute.xlu0 %844
    %846 = vrot.lane.b32.xlu0 %v771, 2
    %v847 = vpop.permute.xlu0 %846
    %848 = vrot.lane.b32.xlu0 %v775, 2
    %v849 = vpop.permute.xlu0 %848
    %850 = vrot.lane.b32.xlu0 %v779, 2
    %v851 = vpop.permute.xlu0 %850
    %852 = vrot.lane.b32.xlu0 %v783, 2
    %v853 = vpop.permute.xlu0 %852
    %854 = vrot.lane.b32.xlu0 %v787, 2
    %v855 = vpop.permute.xlu0 %854
    %856 = vrot.lane.b32.xlu0 %v791, 2
    %v857 = vpop.permute.xlu0 %856
    %858 = vrot.lane.b32.xlu0 %v795, 2
    %v859 = vpop.permute.xlu0 %858
    %860 = vrot.lane.b32.xlu0 %v799, 2
    %v861 = vpop.permute.xlu0 %860
    %862 = vrot.lane.b32.xlu0 %v803, 2
    %v863 = vpop.permute.xlu0 %862
    %864 = vrot.lane.b32.xlu0 %v807, 2
    %v865 = vpop.permute.xlu0 %864
    %866 = vrot.lane.b32.xlu0 %v811, 2
    %v867 = vpop.permute.xlu0 %866
    %868 = vrot.lane.b32.xlu0 %v815, 2
    %v869 = vpop.permute.xlu0 %868
    %870 = vrot.lane.b32.xlu0 %v819, 2
    %v871 = vpop.permute.xlu0 %870
    %872 = vrot.lane.b32.xlu0 %v823, 2
    %v873 = vpop.permute.xlu0 %872
    %874 = vrot.lane.b32.xlu0 %v827, 2
    %v875 = vpop.permute.xlu0 %874
    %v892 = vmul.f32 %v652, %v845
    %v893 = vmul.f32 %v653, %v847
    %v894 = vmul.f32 %v654, %v849
    %v895 = vmul.f32 %v655, %v851
    %v896 = vmul.f32 %v656, %v853
    %v897 = vmul.f32 %v657, %v855
    %v898 = vmul.f32 %v658, %v857
    %v899 = vmul.f32 %v659, %v859
    %v900 = vmul.f32 %v660, %v861
    %v901 = vmul.f32 %v661, %v863
    %v902 = vmul.f32 %v662, %v865
    %v903 = vmul.f32 %v663, %v867
    %v904 = vmul.f32 %v664, %v869
    %v905 = vmul.f32 %v665, %v871
    %v906 = vmul.f32 %v666, %v873
    %v907 = vmul.f32 %v667, %v875
    %924 = vrot.lane.b32.xlu0 %v892, 126
    %v925 = vpop.permute.xlu0 %924
    %926 = vrot.lane.b32.xlu0 %v893, 126
    %v927 = vpop.permute.xlu0 %926
    %928 = vrot.lane.b32.xlu0 %v894, 126
    %v929 = vpop.permute.xlu0 %928
    %930 = vrot.lane.b32.xlu0 %v895, 126
    %v931 = vpop.permute.xlu0 %930
    %932 = vrot.lane.b32.xlu0 %v896, 126
    %v933 = vpop.permute.xlu0 %932
    %934 = vrot.lane.b32.xlu0 %v897, 126
    %v935 = vpop.permute.xlu0 %934
    %936 = vrot.lane.b32.xlu0 %v898, 126
    %v937 = vpop.permute.xlu0 %936
    %938 = vrot.lane.b32.xlu0 %v899, 126
    %v939 = vpop.permute.xlu0 %938
    %940 = vrot.lane.b32.xlu0 %v900, 126
    %v941 = vpop.permute.xlu0 %940
    %942 = vrot.lane.b32.xlu0 %v901, 126
    %v943 = vpop.permute.xlu0 %942
    %944 = vrot.lane.b32.xlu0 %v902, 126
    %v945 = vpop.permute.xlu0 %944
    %946 = vrot.lane.b32.xlu0 %v903, 126
    %v947 = vpop.permute.xlu0 %946
    %948 = vrot.lane.b32.xlu0 %v904, 126
    %v949 = vpop.permute.xlu0 %948
    %950 = vrot.lane.b32.xlu0 %v905, 126
    %v951 = vpop.permute.xlu0 %950
    %952 = vrot.lane.b32.xlu0 %v906, 126
    %v953 = vpop.permute.xlu0 %952
    %954 = vrot.lane.b32.xlu0 %v907, 126
    %v955 = vpop.permute.xlu0 %954
    %v972 = vsub.f32 %v748, %v925
    %v973 = vsub.f32 %v749, %v927
    %v974 = vsub.f32 %v750, %v929
    %v975 = vsub.f32 %v751, %v931
    %v976 = vsub.f32 %v752, %v933
    %v977 = vsub.f32 %v753, %v935
    %v978 = vsub.f32 %v754, %v937
    %v979 = vsub.f32 %v755, %v939
    %v980 = vsub.f32 %v756, %v941
    %v981 = vsub.f32 %v757, %v943
    %v982 = vsub.f32 %v758, %v945
    %v983 = vsub.f32 %v759, %v947
    %v984 = vsub.f32 %v760, %v949
    %v985 = vsub.f32 %v761, %v951
    %v986 = vsub.f32 %v762, %v953
    %v987 = vsub.f32 %v763, %v955
    %v988 = vmul.f32 %v652, %v767
    %v989 = vmul.f32 %v653, %v771
    %v990 = vmul.f32 %v654, %v775
    %v991 = vmul.f32 %v655, %v779
    %v992 = vmul.f32 %v656, %v783
    %v993 = vmul.f32 %v657, %v787
    %v994 = vmul.f32 %v658, %v791
    %v995 = vmul.f32 %v659, %v795
    %v996 = vmul.f32 %v660, %v799
    %v997 = vmul.f32 %v661, %v803
    %v998 = vmul.f32 %v662, %v807
    %v999 = vmul.f32 %v663, %v811
    %v1000 = vmul.f32 %v664, %v815
    %v1001 = vmul.f32 %v665, %v819
    %v1002 = vmul.f32 %v666, %v823
    %v1003 = vmul.f32 %v667, %v827
    %1004 = vrot.lane.b32.xlu0 %v671, 2
    %v1005 = vpop.permute.xlu0 %1004
    %1006 = vrot.lane.b32.xlu0 %v675, 2
    %v1007 = vpop.permute.xlu0 %1006
    %1008 = vrot.lane.b32.xlu0 %v679, 2
    %v1009 = vpop.permute.xlu0 %1008
    %1010 = vrot.lane.b32.xlu0 %v683, 2
    %v1011 = vpop.permute.xlu0 %1010
    %1012 = vrot.lane.b32.xlu0 %v687, 2
    %v1013 = vpop.permute.xlu0 %1012
    %1014 = vrot.lane.b32.xlu0 %v691, 2
    %v1015 = vpop.permute.xlu0 %1014
    %1016 = vrot.lane.b32.xlu0 %v695, 2
    %v1017 = vpop.permute.xlu0 %1016
    %1018 = vrot.lane.b32.xlu0 %v699, 2
    %v1019 = vpop.permute.xlu0 %1018
    %1020 = vrot.lane.b32.xlu0 %v703, 2
    %v1021 = vpop.permute.xlu0 %1020
    %1022 = vrot.lane.b32.xlu0 %v707, 2
    %v1023 = vpop.permute.xlu0 %1022
    %1024 = vrot.lane.b32.xlu0 %v711, 2
    %v1025 = vpop.permute.xlu0 %1024
    %1026 = vrot.lane.b32.xlu0 %v715, 2
    %v1027 = vpop.permute.xlu0 %1026
    %1028 = vrot.lane.b32.xlu0 %v719, 2
    %v1029 = vpop.permute.xlu0 %1028
    %1030 = vrot.lane.b32.xlu0 %v723, 2
    %v1031 = vpop.permute.xlu0 %1030
    %1032 = vrot.lane.b32.xlu0 %v727, 2
    %v1033 = vpop.permute.xlu0 %1032
    %1034 = vrot.lane.b32.xlu0 %v731, 2
    %v1035 = vpop.permute.xlu0 %1034
    %v1052 = vmul.f32 %v652, %v1005
    %v1053 = vmul.f32 %v653, %v1007
    %v1054 = vmul.f32 %v654, %v1009
    %v1055 = vmul.f32 %v655, %v1011
    %v1056 = vmul.f32 %v656, %v1013
    %v1057 = vmul.f32 %v657, %v1015
    %v1058 = vmul.f32 %v658, %v1017
    %v1059 = vmul.f32 %v659, %v1019
    %v1060 = vmul.f32 %v660, %v1021
    %v1061 = vmul.f32 %v661, %v1023
    %v1062 = vmul.f32 %v662, %v1025
    %v1063 = vmul.f32 %v663, %v1027
    %v1064 = vmul.f32 %v664, %v1029
    %v1065 = vmul.f32 %v665, %v1031
    %v1066 = vmul.f32 %v666, %v1033
    %v1067 = vmul.f32 %v667, %v1035
    %1084 = vrot.lane.b32.xlu0 %v1052, 126
    %v1085 = vpop.permute.xlu0 %1084
    %1086 = vrot.lane.b32.xlu0 %v1053, 126
    %v1087 = vpop.permute.xlu0 %1086
    %1088 = vrot.lane.b32.xlu0 %v1054, 126
    %v1089 = vpop.permute.xlu0 %1088
    %1090 = vrot.lane.b32.xlu0 %v1055, 126
    %v1091 = vpop.permute.xlu0 %1090
    %1092 = vrot.lane.b32.xlu0 %v1056, 126
    %v1093 = vpop.permute.xlu0 %1092
    %1094 = vrot.lane.b32.xlu0 %v1057, 126
    %v1095 = vpop.permute.xlu0 %1094
    %1096 = vrot.lane.b32.xlu0 %v1058, 126
    %v1097 = vpop.permute.xlu0 %1096
    %1098 = vrot.lane.b32.xlu0 %v1059, 126
    %v1099 = vpop.permute.xlu0 %1098
    %1100 = vrot.lane.b32.xlu0 %v1060, 126
    %v1101 = vpop.permute.xlu0 %1100
    %1102 = vrot.lane.b32.xlu0 %v1061, 126
    %v1103 = vpop.permute.xlu0 %1102
    %1104 = vrot.lane.b32.xlu0 %v1062, 126
    %v1105 = vpop.permute.xlu0 %1104
    %1106 = vrot.lane.b32.xlu0 %v1063, 126
    %v1107 = vpop.permute.xlu0 %1106
    %1108 = vrot.lane.b32.xlu0 %v1064, 126
    %v1109 = vpop.permute.xlu0 %1108
    %1110 = vrot.lane.b32.xlu0 %v1065, 126
    %v1111 = vpop.permute.xlu0 %1110
    %1112 = vrot.lane.b32.xlu0 %v1066, 126
    %v1113 = vpop.permute.xlu0 %1112
    %1114 = vrot.lane.b32.xlu0 %v1067, 126
    %v1115 = vpop.permute.xlu0 %1114
    %v1132 = vadd.f32 %v988, %v1085
    %v1133 = vadd.f32 %v989, %v1087
    %v1134 = vadd.f32 %v990, %v1089
    %v1135 = vadd.f32 %v991, %v1091
    %v1136 = vadd.f32 %v992, %v1093
    %v1137 = vadd.f32 %v993, %v1095
    %v1138 = vadd.f32 %v994, %v1097
    %v1139 = vadd.f32 %v995, %v1099
    %v1140 = vadd.f32 %v996, %v1101
    %v1141 = vadd.f32 %v997, %v1103
    %v1142 = vadd.f32 %v998, %v1105
    %v1143 = vadd.f32 %v999, %v1107
    %v1144 = vadd.f32 %v1000, %v1109
    %v1145 = vadd.f32 %v1001, %v1111
    %v1146 = vadd.f32 %v1002, %v1113
    %v1147 = vadd.f32 %v1003, %v1115
    %v1148 = vlaneseq
    %v1149 = vshrl.u32 %v1148, 7
    %v1150 = vsub.s32 0, %v1149
    %v1151 = vrot.slane %v459, %v1150
    %v1152 = vlaneseq
    %v1153 = vshrl.u32 %v1152, 7
    %v1154 = vsub.s32 0, %v1153
    %v1155 = vrot.slane %v473, %v1154
    %v1156 = vlaneseq
    %v1157 = vshrl.u32 %v1156, 7
    %v1158 = vsub.s32 0, %v1157
    %v1159 = vrot.slane %v481, %v1158
    %v1160 = vlaneseq
    %v1161 = vshrl.u32 %v1160, 7
    %v1162 = vsub.s32 0, %v1161
    %v1163 = vrot.slane %v483, %v1162
    %v1164 = vlaneseq
    %v1165 = vshrl.u32 %v1164, 7
    %v1166 = vsub.s32 0, %v1165
    %v1167 = vrot.slane %v466, %v1166
    %v1168 = vlaneseq
    %v1169 = vshrl.u32 %v1168, 7
    %v1170 = vsub.s32 0, %v1169
    %v1171 = vrot.slane %v480, %v1170
    %v1172 = vlaneseq
    %v1173 = vshrl.u32 %v1172, 7
    %v1174 = vsub.s32 0, %v1173
    %v1175 = vrot.slane %v482, %v1174
    %v1176 = vlaneseq
    %v1177 = vshrl.u32 %v1176, 7
    %v1178 = vsub.s32 0, %v1177
    %v1179 = vrot.slane %v484, %v1178
    %v1180 = vlaneseq
    %v1181 = vshrl.u32 %v1180, 7
    %v1182 = vsub.s32 0, %v1181
    %v1183 = vrot.slane %v508, %v1182
    %v1184 = vlaneseq
    %v1185 = vshrl.u32 %v1184, 7
    %v1186 = vsub.s32 0, %v1185
    %v1187 = vrot.slane %v522, %v1186
    %v1188 = vlaneseq
    %v1189 = vshrl.u32 %v1188, 7
    %v1190 = vsub.s32 0, %v1189
    %v1191 = vrot.slane %v530, %v1190
    %v1192 = vlaneseq
    %v1193 = vshrl.u32 %v1192, 7
    %v1194 = vsub.s32 0, %v1193
    %v1195 = vrot.slane %v532, %v1194
    %v1196 = vlaneseq
    %v1197 = vshrl.u32 %v1196, 7
    %v1198 = vsub.s32 0, %v1197
    %v1199 = vrot.slane %v515, %v1198
    %v1200 = vlaneseq
    %v1201 = vshrl.u32 %v1200, 7
    %v1202 = vsub.s32 0, %v1201
    %v1203 = vrot.slane %v529, %v1202
    %v1204 = vlaneseq
    %v1205 = vshrl.u32 %v1204, 7
    %v1206 = vsub.s32 0, %v1205
    %v1207 = vrot.slane %v531, %v1206
    %v1208 = vlaneseq
    %v1209 = vshrl.u32 %v1208, 7
    %v1210 = vsub.s32 0, %v1209
    %v1211 = vrot.slane %v533, %v1210
    %1212 = vrot.lane.b32.xlu0 %v1151, 4
    %v1213 = vpop.permute.xlu0 %1212
    %1214 = vrot.lane.b32.xlu0 %v1155, 4
    %v1215 = vpop.permute.xlu0 %1214
    %1216 = vrot.lane.b32.xlu0 %v1159, 4
    %v1217 = vpop.permute.xlu0 %1216
    %1218 = vrot.lane.b32.xlu0 %v1163, 4
    %v1219 = vpop.permute.xlu0 %1218
    %1220 = vrot.lane.b32.xlu0 %v1167, 4
    %v1221 = vpop.permute.xlu0 %1220
    %1222 = vrot.lane.b32.xlu0 %v1171, 4
    %v1223 = vpop.permute.xlu0 %1222
    %1224 = vrot.lane.b32.xlu0 %v1175, 4
    %v1225 = vpop.permute.xlu0 %1224
    %1226 = vrot.lane.b32.xlu0 %v1179, 4
    %v1227 = vpop.permute.xlu0 %1226
    %1228 = vrot.lane.b32.xlu0 %v1183, 4
    %v1229 = vpop.permute.xlu0 %1228
    %1230 = vrot.lane.b32.xlu0 %v1187, 4
    %v1231 = vpop.permute.xlu0 %1230
    %1232 = vrot.lane.b32.xlu0 %v1191, 4
    %v1233 = vpop.permute.xlu0 %1232
    %1234 = vrot.lane.b32.xlu0 %v1195, 4
    %v1235 = vpop.permute.xlu0 %1234
    %1236 = vrot.lane.b32.xlu0 %v1199, 4
    %v1237 = vpop.permute.xlu0 %1236
    %1238 = vrot.lane.b32.xlu0 %v1203, 4
    %v1239 = vpop.permute.xlu0 %1238
    %1240 = vrot.lane.b32.xlu0 %v1207, 4
    %v1241 = vpop.permute.xlu0 %1240
    %1242 = vrot.lane.b32.xlu0 %v1211, 4
    %v1243 = vpop.permute.xlu0 %1242
    %v1260 = vmul.f32 %v652, %v1213
    %v1261 = vmul.f32 %v653, %v1215
    %v1262 = vmul.f32 %v654, %v1217
    %v1263 = vmul.f32 %v655, %v1219
    %v1264 = vmul.f32 %v656, %v1221
    %v1265 = vmul.f32 %v657, %v1223
    %v1266 = vmul.f32 %v658, %v1225
    %v1267 = vmul.f32 %v659, %v1227
    %v1268 = vmul.f32 %v660, %v1229
    %v1269 = vmul.f32 %v661, %v1231
    %v1270 = vmul.f32 %v662, %v1233
    %v1271 = vmul.f32 %v663, %v1235
    %v1272 = vmul.f32 %v664, %v1237
    %v1273 = vmul.f32 %v665, %v1239
    %v1274 = vmul.f32 %v666, %v1241
    %v1275 = vmul.f32 %v667, %v1243
    %v1276 = vlaneseq
    %v1277 = vshrl.u32 %v1276, 7
    %v1278 = vsub.s32 0, %v1277
    %v1279 = vrot.slane %v561, %v1278
    %v1280 = vlaneseq
    %v1281 = vshrl.u32 %v1280, 7
    %v1282 = vsub.s32 0, %v1281
    %v1283 = vrot.slane %v575, %v1282
    %v1284 = vlaneseq
    %v1285 = vshrl.u32 %v1284, 7
    %v1286 = vsub.s32 0, %v1285
    %v1287 = vrot.slane %v583, %v1286
    %v1288 = vlaneseq
    %v1289 = vshrl.u32 %v1288, 7
    %v1290 = vsub.s32 0, %v1289
    %v1291 = vrot.slane %v585, %v1290
    %v1292 = vlaneseq
    %v1293 = vshrl.u32 %v1292, 7
    %v1294 = vsub.s32 0, %v1293
    %v1295 = vrot.slane %v568, %v1294
    %v1296 = vlaneseq
    %v1297 = vshrl.u32 %v1296, 7
    %v1298 = vsub.s32 0, %v1297
    %v1299 = vrot.slane %v582, %v1298
    %v1300 = vlaneseq
    %v1301 = vshrl.u32 %v1300, 7
    %v1302 = vsub.s32 0, %v1301
    %v1303 = vrot.slane %v584, %v1302
    %v1304 = vlaneseq
    %v1305 = vshrl.u32 %v1304, 7
    %v1306 = vsub.s32 0, %v1305
    %v1307 = vrot.slane %v586, %v1306
    %v1308 = vlaneseq
    %v1309 = vshrl.u32 %v1308, 7
    %v1310 = vsub.s32 0, %v1309
    %v1311 = vrot.slane %v610, %v1310
    %v1312 = vlaneseq
    %v1313 = vshrl.u32 %v1312, 7
    %v1314 = vsub.s32 0, %v1313
    %v1315 = vrot.slane %v624, %v1314
    %v1316 = vlaneseq
    %v1317 = vshrl.u32 %v1316, 7
    %v1318 = vsub.s32 0, %v1317
    %v1319 = vrot.slane %v632, %v1318
    %v1320 = vlaneseq
    %v1321 = vshrl.u32 %v1320, 7
    %v1322 = vsub.s32 0, %v1321
    %v1323 = vrot.slane %v634, %v1322
    %v1324 = vlaneseq
    %v1325 = vshrl.u32 %v1324, 7
    %v1326 = vsub.s32 0, %v1325
    %v1327 = vrot.slane %v617, %v1326
    %v1328 = vlaneseq
    %v1329 = vshrl.u32 %v1328, 7
    %v1330 = vsub.s32 0, %v1329
    %v1331 = vrot.slane %v631, %v1330
    %v1332 = vlaneseq
    %v1333 = vshrl.u32 %v1332, 7
    %v1334 = vsub.s32 0, %v1333
    %v1335 = vrot.slane %v633, %v1334
    %v1336 = vlaneseq
    %v1337 = vshrl.u32 %v1336, 7
    %v1338 = vsub.s32 0, %v1337
    %v1339 = vrot.slane %v635, %v1338
    %1340 = vrot.lane.b32.xlu0 %v1279, 6
    %v1341 = vpop.permute.xlu0 %1340
    %1342 = vrot.lane.b32.xlu0 %v1283, 6
    %v1343 = vpop.permute.xlu0 %1342
    %1344 = vrot.lane.b32.xlu0 %v1287, 6
    %v1345 = vpop.permute.xlu0 %1344
    %1346 = vrot.lane.b32.xlu0 %v1291, 6
    %v1347 = vpop.permute.xlu0 %1346
    %1348 = vrot.lane.b32.xlu0 %v1295, 6
    %v1349 = vpop.permute.xlu0 %1348
    %1350 = vrot.lane.b32.xlu0 %v1299, 6
    %v1351 = vpop.permute.xlu0 %1350
    %1352 = vrot.lane.b32.xlu0 %v1303, 6
    %v1353 = vpop.permute.xlu0 %1352
    %1354 = vrot.lane.b32.xlu0 %v1307, 6
    %v1355 = vpop.permute.xlu0 %1354
    %1356 = vrot.lane.b32.xlu0 %v1311, 6
    %v1357 = vpop.permute.xlu0 %1356
    %1358 = vrot.lane.b32.xlu0 %v1315, 6
    %v1359 = vpop.permute.xlu0 %1358
    %1360 = vrot.lane.b32.xlu0 %v1319, 6
    %v1361 = vpop.permute.xlu0 %1360
    %1362 = vrot.lane.b32.xlu0 %v1323, 6
    %v1363 = vpop.permute.xlu0 %1362
    %1364 = vrot.lane.b32.xlu0 %v1327, 6
    %v1365 = vpop.permute.xlu0 %1364
    %1366 = vrot.lane.b32.xlu0 %v1331, 6
    %v1367 = vpop.permute.xlu0 %1366
    %1368 = vrot.lane.b32.xlu0 %v1335, 6
    %v1369 = vpop.permute.xlu0 %1368
    %1370 = vrot.lane.b32.xlu0 %v1339, 6
    %v1371 = vpop.permute.xlu0 %1370
    %v1388 = vmul.f32 %v652, %v1341
    %v1389 = vmul.f32 %v653, %v1343
    %v1390 = vmul.f32 %v654, %v1345
    %v1391 = vmul.f32 %v655, %v1347
    %v1392 = vmul.f32 %v656, %v1349
    %v1393 = vmul.f32 %v657, %v1351
    %v1394 = vmul.f32 %v658, %v1353
    %v1395 = vmul.f32 %v659, %v1355
    %v1396 = vmul.f32 %v660, %v1357
    %v1397 = vmul.f32 %v661, %v1359
    %v1398 = vmul.f32 %v662, %v1361
    %v1399 = vmul.f32 %v663, %v1363
    %v1400 = vmul.f32 %v664, %v1365
    %v1401 = vmul.f32 %v665, %v1367
    %v1402 = vmul.f32 %v666, %v1369
    %v1403 = vmul.f32 %v667, %v1371
    %1420 = vrot.lane.b32.xlu0 %v1388, 126
    %v1421 = vpop.permute.xlu0 %1420
    %1422 = vrot.lane.b32.xlu0 %v1389, 126
    %v1423 = vpop.permute.xlu0 %1422
    %1424 = vrot.lane.b32.xlu0 %v1390, 126
    %v1425 = vpop.permute.xlu0 %1424
    %1426 = vrot.lane.b32.xlu0 %v1391, 126
    %v1427 = vpop.permute.xlu0 %1426
    %1428 = vrot.lane.b32.xlu0 %v1392, 126
    %v1429 = vpop.permute.xlu0 %1428
    %1430 = vrot.lane.b32.xlu0 %v1393, 126
    %v1431 = vpop.permute.xlu0 %1430
    %1432 = vrot.lane.b32.xlu0 %v1394, 126
    %v1433 = vpop.permute.xlu0 %1432
    %1434 = vrot.lane.b32.xlu0 %v1395, 126
    %v1435 = vpop.permute.xlu0 %1434
    %1436 = vrot.lane.b32.xlu0 %v1396, 126
    %v1437 = vpop.permute.xlu0 %1436
    %1438 = vrot.lane.b32.xlu0 %v1397, 126
    %v1439 = vpop.permute.xlu0 %1438
    %1440 = vrot.lane.b32.xlu0 %v1398, 126
    %v1441 = vpop.permute.xlu0 %1440
    %1442 = vrot.lane.b32.xlu0 %v1399, 126
    %v1443 = vpop.permute.xlu0 %1442
    %1444 = vrot.lane.b32.xlu0 %v1400, 126
    %v1445 = vpop.permute.xlu0 %1444
    %1446 = vrot.lane.b32.xlu0 %v1401, 126
    %v1447 = vpop.permute.xlu0 %1446
    %1448 = vrot.lane.b32.xlu0 %v1402, 126
    %v1449 = vpop.permute.xlu0 %1448
    %1450 = vrot.lane.b32.xlu0 %v1403, 126
    %v1451 = vpop.permute.xlu0 %1450
    %v1468 = vsub.f32 %v1260, %v1421
    %v1469 = vsub.f32 %v1261, %v1423
    %v1470 = vsub.f32 %v1262, %v1425
    %v1471 = vsub.f32 %v1263, %v1427
    %v1472 = vsub.f32 %v1264, %v1429
    %v1473 = vsub.f32 %v1265, %v1431
    %v1474 = vsub.f32 %v1266, %v1433
    %v1475 = vsub.f32 %v1267, %v1435
    %v1476 = vsub.f32 %v1268, %v1437
    %v1477 = vsub.f32 %v1269, %v1439
    %v1478 = vsub.f32 %v1270, %v1441
    %v1479 = vsub.f32 %v1271, %v1443
    %v1480 = vsub.f32 %v1272, %v1445
    %v1481 = vsub.f32 %v1273, %v1447
    %v1482 = vsub.f32 %v1274, %v1449
    %v1483 = vsub.f32 %v1275, %v1451
    %1484 = vrot.lane.b32.xlu0 %v1279, 4
    %v1485 = vpop.permute.xlu0 %1484
    %1486 = vrot.lane.b32.xlu0 %v1283, 4
    %v1487 = vpop.permute.xlu0 %1486
    %1488 = vrot.lane.b32.xlu0 %v1287, 4
    %v1489 = vpop.permute.xlu0 %1488
    %1490 = vrot.lane.b32.xlu0 %v1291, 4
    %v1491 = vpop.permute.xlu0 %1490
    %1492 = vrot.lane.b32.xlu0 %v1295, 4
    %v1493 = vpop.permute.xlu0 %1492
    %1494 = vrot.lane.b32.xlu0 %v1299, 4
    %v1495 = vpop.permute.xlu0 %1494
    %1496 = vrot.lane.b32.xlu0 %v1303, 4
    %v1497 = vpop.permute.xlu0 %1496
    %1498 = vrot.lane.b32.xlu0 %v1307, 4
    %v1499 = vpop.permute.xlu0 %1498
    %1500 = vrot.lane.b32.xlu0 %v1311, 4
    %v1501 = vpop.permute.xlu0 %1500
    %1502 = vrot.lane.b32.xlu0 %v1315, 4
    %v1503 = vpop.permute.xlu0 %1502
    %1504 = vrot.lane.b32.xlu0 %v1319, 4
    %v1505 = vpop.permute.xlu0 %1504
    %1506 = vrot.lane.b32.xlu0 %v1323, 4
    %v1507 = vpop.permute.xlu0 %1506
    %1508 = vrot.lane.b32.xlu0 %v1327, 4
    %v1509 = vpop.permute.xlu0 %1508
    %1510 = vrot.lane.b32.xlu0 %v1331, 4
    %v1511 = vpop.permute.xlu0 %1510
    %1512 = vrot.lane.b32.xlu0 %v1335, 4
    %v1513 = vpop.permute.xlu0 %1512
    %1514 = vrot.lane.b32.xlu0 %v1339, 4
    %v1515 = vpop.permute.xlu0 %1514
    %v1532 = vmul.f32 %v652, %v1485
    %v1533 = vmul.f32 %v653, %v1487
    %v1534 = vmul.f32 %v654, %v1489
    %v1535 = vmul.f32 %v655, %v1491
    %v1536 = vmul.f32 %v656, %v1493
    %v1537 = vmul.f32 %v657, %v1495
    %v1538 = vmul.f32 %v658, %v1497
    %v1539 = vmul.f32 %v659, %v1499
    %v1540 = vmul.f32 %v660, %v1501
    %v1541 = vmul.f32 %v661, %v1503
    %v1542 = vmul.f32 %v662, %v1505
    %v1543 = vmul.f32 %v663, %v1507
    %v1544 = vmul.f32 %v664, %v1509
    %v1545 = vmul.f32 %v665, %v1511
    %v1546 = vmul.f32 %v666, %v1513
    %v1547 = vmul.f32 %v667, %v1515
    %1548 = vrot.lane.b32.xlu0 %v1151, 6
    %v1549 = vpop.permute.xlu0 %1548
    %1550 = vrot.lane.b32.xlu0 %v1155, 6
    %v1551 = vpop.permute.xlu0 %1550
    %1552 = vrot.lane.b32.xlu0 %v1159, 6
    %v1553 = vpop.permute.xlu0 %1552
    %1554 = vrot.lane.b32.xlu0 %v1163, 6
    %v1555 = vpop.permute.xlu0 %1554
    %1556 = vrot.lane.b32.xlu0 %v1167, 6
    %v1557 = vpop.permute.xlu0 %1556
    %1558 = vrot.lane.b32.xlu0 %v1171, 6
    %v1559 = vpop.permute.xlu0 %1558
    %1560 = vrot.lane.b32.xlu0 %v1175, 6
    %v1561 = vpop.permute.xlu0 %1560
    %1562 = vrot.lane.b32.xlu0 %v1179, 6
    %v1563 = vpop.permute.xlu0 %1562
    %1564 = vrot.lane.b32.xlu0 %v1183, 6
    %v1565 = vpop.permute.xlu0 %1564
    %1566 = vrot.lane.b32.xlu0 %v1187, 6
    %v1567 = vpop.permute.xlu0 %1566
    %1568 = vrot.lane.b32.xlu0 %v1191, 6
    %v1569 = vpop.permute.xlu0 %1568
    %1570 = vrot.lane.b32.xlu0 %v1195, 6
    %v1571 = vpop.permute.xlu0 %1570
    %1572 = vrot.lane.b32.xlu0 %v1199, 6
    %v1573 = vpop.permute.xlu0 %1572
    %1574 = vrot.lane.b32.xlu0 %v1203, 6
    %v1575 = vpop.permute.xlu0 %1574
    %1576 = vrot.lane.b32.xlu0 %v1207, 6
    %v1577 = vpop.permute.xlu0 %1576
    %1578 = vrot.lane.b32.xlu0 %v1211, 6
    %v1579 = vpop.permute.xlu0 %1578
    %v1596 = vmul.f32 %v652, %v1549
    %v1597 = vmul.f32 %v653, %v1551
    %v1598 = vmul.f32 %v654, %v1553
    %v1599 = vmul.f32 %v655, %v1555
    %v1600 = vmul.f32 %v656, %v1557
    %v1601 = vmul.f32 %v657, %v1559
    %v1602 = vmul.f32 %v658, %v1561
    %v1603 = vmul.f32 %v659, %v1563
    %v1604 = vmul.f32 %v660, %v1565
    %v1605 = vmul.f32 %v661, %v1567
    %v1606 = vmul.f32 %v662, %v1569
    %v1607 = vmul.f32 %v663, %v1571
    %v1608 = vmul.f32 %v664, %v1573
    %v1609 = vmul.f32 %v665, %v1575
    %v1610 = vmul.f32 %v666, %v1577
    %v1611 = vmul.f32 %v667, %v1579
    %1628 = vrot.lane.b32.xlu0 %v1596, 126
    %v1629 = vpop.permute.xlu0 %1628
    %1630 = vrot.lane.b32.xlu0 %v1597, 126
    %v1631 = vpop.permute.xlu0 %1630
    %1632 = vrot.lane.b32.xlu0 %v1598, 126
    %v1633 = vpop.permute.xlu0 %1632
    %1634 = vrot.lane.b32.xlu0 %v1599, 126
    %v1635 = vpop.permute.xlu0 %1634
    %1636 = vrot.lane.b32.xlu0 %v1600, 126
    %v1637 = vpop.permute.xlu0 %1636
    %1638 = vrot.lane.b32.xlu0 %v1601, 126
    %v1639 = vpop.permute.xlu0 %1638
    %1640 = vrot.lane.b32.xlu0 %v1602, 126
    %v1641 = vpop.permute.xlu0 %1640
    %1642 = vrot.lane.b32.xlu0 %v1603, 126
    %v1643 = vpop.permute.xlu0 %1642
    %1644 = vrot.lane.b32.xlu0 %v1604, 126
    %v1645 = vpop.permute.xlu0 %1644
    %1646 = vrot.lane.b32.xlu0 %v1605, 126
    %v1647 = vpop.permute.xlu0 %1646
    %1648 = vrot.lane.b32.xlu0 %v1606, 126
    %v1649 = vpop.permute.xlu0 %1648
    %1650 = vrot.lane.b32.xlu0 %v1607, 126
    %v1651 = vpop.permute.xlu0 %1650
    %1652 = vrot.lane.b32.xlu0 %v1608, 126
    %v1653 = vpop.permute.xlu0 %1652
    %1654 = vrot.lane.b32.xlu0 %v1609, 126
    %v1655 = vpop.permute.xlu0 %1654
    %1656 = vrot.lane.b32.xlu0 %v1610, 126
    %v1657 = vpop.permute.xlu0 %1656
    %1658 = vrot.lane.b32.xlu0 %v1611, 126
    %v1659 = vpop.permute.xlu0 %1658
    %v1676 = vadd.f32 %v1532, %v1629
    %v1677 = vadd.f32 %v1533, %v1631
    %v1678 = vadd.f32 %v1534, %v1633
    %v1679 = vadd.f32 %v1535, %v1635
    %v1680 = vadd.f32 %v1536, %v1637
    %v1681 = vadd.f32 %v1537, %v1639
    %v1682 = vadd.f32 %v1538, %v1641
    %v1683 = vadd.f32 %v1539, %v1643
    %v1684 = vadd.f32 %v1540, %v1645
    %v1685 = vadd.f32 %v1541, %v1647
    %v1686 = vadd.f32 %v1542, %v1649
    %v1687 = vadd.f32 %v1543, %v1651
    %v1688 = vadd.f32 %v1544, %v1653
    %v1689 = vadd.f32 %v1545, %v1655
    %v1690 = vadd.f32 %v1546, %v1657
    %v1691 = vadd.f32 %v1547, %v1659
    %1708 = vrot.lane.b32.xlu0 %v1132, 2
    %v1709 = vpop.permute.xlu0 %1708
    %1710 = vrot.lane.b32.xlu0 %v1133, 2
    %v1711 = vpop.permute.xlu0 %1710
    %1712 = vrot.lane.b32.xlu0 %v1134, 2
    %v1713 = vpop.permute.xlu0 %1712
    %1714 = vrot.lane.b32.xlu0 %v1135, 2
    %v1715 = vpop.permute.xlu0 %1714
    %1716 = vrot.lane.b32.xlu0 %v1136, 2
    %v1717 = vpop.permute.xlu0 %1716
    %1718 = vrot.lane.b32.xlu0 %v1137, 2
    %v1719 = vpop.permute.xlu0 %1718
    %1720 = vrot.lane.b32.xlu0 %v1138, 2
    %v1721 = vpop.permute.xlu0 %1720
    %1722 = vrot.lane.b32.xlu0 %v1139, 2
    %v1723 = vpop.permute.xlu0 %1722
    %1724 = vrot.lane.b32.xlu0 %v1140, 2
    %v1725 = vpop.permute.xlu0 %1724
    %1726 = vrot.lane.b32.xlu0 %v1141, 2
    %v1727 = vpop.permute.xlu0 %1726
    %1728 = vrot.lane.b32.xlu0 %v1142, 2
    %v1729 = vpop.permute.xlu0 %1728
    %1730 = vrot.lane.b32.xlu0 %v1143, 2
    %v1731 = vpop.permute.xlu0 %1730
    %1732 = vrot.lane.b32.xlu0 %v1144, 2
    %v1733 = vpop.permute.xlu0 %1732
    %1734 = vrot.lane.b32.xlu0 %v1145, 2
    %v1735 = vpop.permute.xlu0 %1734
    %1736 = vrot.lane.b32.xlu0 %v1146, 2
    %v1737 = vpop.permute.xlu0 %1736
    %1738 = vrot.lane.b32.xlu0 %v1147, 2
    %v1739 = vpop.permute.xlu0 %1738
    %1772 = vrot.lane.b32.xlu0 %v1676, 2
    %v1773 = vpop.permute.xlu0 %1772
    %1774 = vrot.lane.b32.xlu0 %v1677, 2
    %v1775 = vpop.permute.xlu0 %1774
    %1776 = vrot.lane.b32.xlu0 %v1678, 2
    %v1777 = vpop.permute.xlu0 %1776
    %1778 = vrot.lane.b32.xlu0 %v1679, 2
    %v1779 = vpop.permute.xlu0 %1778
    %1780 = vrot.lane.b32.xlu0 %v1680, 2
    %v1781 = vpop.permute.xlu0 %1780
    %1782 = vrot.lane.b32.xlu0 %v1681, 2
    %v1783 = vpop.permute.xlu0 %1782
    %1784 = vrot.lane.b32.xlu0 %v1682, 2
    %v1785 = vpop.permute.xlu0 %1784
    %1786 = vrot.lane.b32.xlu0 %v1683, 2
    %v1787 = vpop.permute.xlu0 %1786
    %1788 = vrot.lane.b32.xlu0 %v1684, 2
    %v1789 = vpop.permute.xlu0 %1788
    %1790 = vrot.lane.b32.xlu0 %v1685, 2
    %v1791 = vpop.permute.xlu0 %1790
    %1792 = vrot.lane.b32.xlu0 %v1686, 2
    %v1793 = vpop.permute.xlu0 %1792
    %1794 = vrot.lane.b32.xlu0 %v1687, 2
    %v1795 = vpop.permute.xlu0 %1794
    %1796 = vrot.lane.b32.xlu0 %v1688, 2
    %v1797 = vpop.permute.xlu0 %1796
    %1798 = vrot.lane.b32.xlu0 %v1689, 2
    %v1799 = vpop.permute.xlu0 %1798
    %1800 = vrot.lane.b32.xlu0 %v1690, 2
    %v1801 = vpop.permute.xlu0 %1800
    %1802 = vrot.lane.b32.xlu0 %v1691, 2
    %v1803 = vpop.permute.xlu0 %1802
    %vm1820 = vcmask 15360
    %v1821 = vsel %vm1820, %v972, %v1709
    %v1822 = vsel %vm1820, %v973, %v1711
    %v1823 = vsel %vm1820, %v974, %v1713
    %v1824 = vsel %vm1820, %v975, %v1715
    %v1825 = vsel %vm1820, %v976, %v1717
    %v1826 = vsel %vm1820, %v977, %v1719
    %v1827 = vsel %vm1820, %v978, %v1721
    %v1828 = vsel %vm1820, %v979, %v1723
    %v1829 = vsel %vm1820, %v980, %v1725
    %v1830 = vsel %vm1820, %v981, %v1727
    %v1831 = vsel %vm1820, %v982, %v1729
    %v1832 = vsel %vm1820, %v983, %v1731
    %v1833 = vsel %vm1820, %v984, %v1733
    %v1834 = vsel %vm1820, %v985, %v1735
    %v1835 = vsel %vm1820, %v986, %v1737
    %v1836 = vsel %vm1820, %v987, %v1739
    %vm1837 = vcmask 31744
    %v1838 = vsel %vm1837, %v1821, %v1468
    %v1839 = vsel %vm1837, %v1822, %v1469
    %v1840 = vsel %vm1837, %v1823, %v1470
    %v1841 = vsel %vm1837, %v1824, %v1471
    %v1842 = vsel %vm1837, %v1825, %v1472
    %v1843 = vsel %vm1837, %v1826, %v1473
    %v1844 = vsel %vm1837, %v1827, %v1474
    %v1845 = vsel %vm1837, %v1828, %v1475
    %v1846 = vsel %vm1837, %v1829, %v1476
    %v1847 = vsel %vm1837, %v1830, %v1477
    %v1848 = vsel %vm1837, %v1831, %v1478
    %v1849 = vsel %vm1837, %v1832, %v1479
    %v1850 = vsel %vm1837, %v1833, %v1480
    %v1851 = vsel %vm1837, %v1834, %v1481
    %v1852 = vsel %vm1837, %v1835, %v1482
    %v1853 = vsel %vm1837, %v1836, %v1483
    %vm1854 = vcmask 48128
    %v1855 = vsel %vm1854, %v1838, %v1773
    %v1856 = vsel %vm1854, %v1839, %v1775
    %v1857 = vsel %vm1854, %v1840, %v1777
    %v1858 = vsel %vm1854, %v1841, %v1779
    %v1859 = vsel %vm1854, %v1842, %v1781
    %v1860 = vsel %vm1854, %v1843, %v1783
    %v1861 = vsel %vm1854, %v1844, %v1785
    %v1862 = vsel %vm1854, %v1845, %v1787
    %v1863 = vsel %vm1854, %v1846, %v1789
    %v1864 = vsel %vm1854, %v1847, %v1791
    %v1865 = vsel %vm1854, %v1848, %v1793
    %v1866 = vsel %vm1854, %v1849, %v1795
    %v1867 = vsel %vm1854, %v1850, %v1797
    %v1868 = vsel %vm1854, %v1851, %v1799
    %v1869 = vsel %vm1854, %v1852, %v1801
    %v1870 = vsel %vm1854, %v1853, %v1803
    %v1871 = vpack.c.bf16 %v1855, %v1855
    %v1872 = vpack.c.bf16 %v1856, %v1856
    %v1873 = vpack.c.bf16 %v1857, %v1857
    %v1874 = vpack.c.bf16 %v1858, %v1858
    %v1875 = vpack.c.bf16 %v1859, %v1859
    %v1876 = vpack.c.bf16 %v1860, %v1860
    %v1877 = vpack.c.bf16 %v1861, %v1861
    %v1878 = vpack.c.bf16 %v1862, %v1862
    %v1879 = vpack.c.bf16 %v1863, %v1863
    %v1880 = vpack.c.bf16 %v1864, %v1864
    %v1881 = vpack.c.bf16 %v1865, %v1865
    %v1882 = vpack.c.bf16 %v1866, %v1866
    %v1883 = vpack.c.bf16 %v1867, %v1867
    %v1884 = vpack.c.bf16 %v1868, %v1868
    %v1885 = vpack.c.bf16 %v1869, %v1869
    %v1886 = vpack.c.bf16 %v1870, %v1870
    %vm1887 = vcmask 58368
    %1888 = vst.msk [vmem:[%s6] sm:$0x3] %vm1887, %v1871
    %1889 = vst.msk [vmem:[%s6 + $0x2] sm:$0x3] %vm1887, %v1872
    %1890 = vst.msk [vmem:[%s6 + $0x4] sm:$0x3] %vm1887, %v1873
    %1891 = vst.msk [vmem:[%s6 + $0x6] sm:$0x3] %vm1887, %v1874
    %1892 = vst.msk [vmem:[%s6 + $0x8] sm:$0x3] %vm1887, %v1875
    %1893 = vst.msk [vmem:[%s6 + $0xa] sm:$0x3] %vm1887, %v1876
    %1894 = vst.msk [vmem:[%s6 + $0xc] sm:$0x3] %vm1887, %v1877
    %1895 = vst.msk [vmem:[%s6 + $0xe] sm:$0x3] %vm1887, %v1878
    %1896 = vst.msk [vmem:[%s6 + $0x10] sm:$0x3] %vm1887, %v1879
    %1897 = vst.msk [vmem:[%s6 + $0x12] sm:$0x3] %vm1887, %v1880
    %1898 = vst.msk [vmem:[%s6 + $0x14] sm:$0x3] %vm1887, %v1881
    %1899 = vst.msk [vmem:[%s6 + $0x16] sm:$0x3] %vm1887, %v1882
    %1900 = vst.msk [vmem:[%s6 + $0x18] sm:$0x3] %vm1887, %v1883
    %1901 = vst.msk [vmem:[%s6 + $0x1a] sm:$0x3] %vm1887, %v1884
    %1902 = vst.msk [vmem:[%s6 + $0x1c] sm:$0x3] %vm1887, %v1885
    %1903 = vst.msk [vmem:[%s6 + $0x1e] sm:$0x3] %vm1887, %v1886
    %v1904 = vld [vmem:[#allocation3] sm:$0x3]
    %v1905 = vld [vmem:[#allocation3 + $0x2] sm:$0x3]
    %v1906 = vld [vmem:[#allocation3 + $0x4] sm:$0x3]
    %v1907 = vld [vmem:[#allocation3 + $0x6] sm:$0x3]
    %v1908 = vld [vmem:[#allocation3 + $0x8] sm:$0x3]
    %v1909 = vld [vmem:[#allocation3 + $0xa] sm:$0x3]
    %v1910 = vld [vmem:[#allocation3 + $0xc] sm:$0x3]
    %v1911 = vld [vmem:[#allocation3 + $0xe] sm:$0x3]
    %v1912 = vld [vmem:[#allocation3 + $0x10] sm:$0x3]
    %v1913 = vld [vmem:[#allocation3 + $0x12] sm:$0x3]
    %v1914 = vld [vmem:[#allocation3 + $0x14] sm:$0x3]
    %v1915 = vld [vmem:[#allocation3 + $0x16] sm:$0x3]
    %v1916 = vld [vmem:[#allocation3 + $0x18] sm:$0x3]
    %v1917 = vld [vmem:[#allocation3 + $0x1a] sm:$0x3]
    %v1918 = vld [vmem:[#allocation3 + $0x1c] sm:$0x3]
    %v1919 = vld [vmem:[#allocation3 + $0x1e] sm:$0x3]
    %v1920 = vunpack.c.l.bf16 %v1904
    %v1921 = vunpack.c.l.bf16 %v1905
    %v1922 = vunpack.c.l.bf16 %v1906
    %v1923 = vunpack.c.l.bf16 %v1907
    %v1924 = vunpack.c.l.bf16 %v1908
    %v1925 = vunpack.c.l.bf16 %v1909
    %v1926 = vunpack.c.l.bf16 %v1910
    %v1927 = vunpack.c.l.bf16 %v1911
    %v1928 = vunpack.c.l.bf16 %v1912
    %v1929 = vunpack.c.l.bf16 %v1913
    %v1930 = vunpack.c.l.bf16 %v1914
    %v1931 = vunpack.c.l.bf16 %v1915
    %v1932 = vunpack.c.l.bf16 %v1916
    %v1933 = vunpack.c.l.bf16 %v1917
    %v1934 = vunpack.c.l.bf16 %v1918
    %v1935 = vunpack.c.l.bf16 %v1919
    %v1936 = vmul.f32 %v1920, %v671
    %v1937 = vmul.f32 %v1921, %v675
    %v1938 = vmul.f32 %v1922, %v679
    %v1939 = vmul.f32 %v1923, %v683
    %v1940 = vmul.f32 %v1924, %v687
    %v1941 = vmul.f32 %v1925, %v691
    %v1942 = vmul.f32 %v1926, %v695
    %v1943 = vmul.f32 %v1927, %v699
    %v1944 = vmul.f32 %v1928, %v703
    %v1945 = vmul.f32 %v1929, %v707
    %v1946 = vmul.f32 %v1930, %v711
    %v1947 = vmul.f32 %v1931, %v715
    %v1948 = vmul.f32 %v1932, %v719
    %v1949 = vmul.f32 %v1933, %v723
    %v1950 = vmul.f32 %v1934, %v727
    %v1951 = vmul.f32 %v1935, %v731
    %v1952 = vmul.f32 %v1920, %v845
    %v1953 = vmul.f32 %v1921, %v847
    %v1954 = vmul.f32 %v1922, %v849
    %v1955 = vmul.f32 %v1923, %v851
    %v1956 = vmul.f32 %v1924, %v853
    %v1957 = vmul.f32 %v1925, %v855
    %v1958 = vmul.f32 %v1926, %v857
    %v1959 = vmul.f32 %v1927, %v859
    %v1960 = vmul.f32 %v1928, %v861
    %v1961 = vmul.f32 %v1929, %v863
    %v1962 = vmul.f32 %v1930, %v865
    %v1963 = vmul.f32 %v1931, %v867
    %v1964 = vmul.f32 %v1932, %v869
    %v1965 = vmul.f32 %v1933, %v871
    %v1966 = vmul.f32 %v1934, %v873
    %v1967 = vmul.f32 %v1935, %v875
    %1984 = vrot.lane.b32.xlu0 %v1952, 126
    %v1985 = vpop.permute.xlu0 %1984
    %1986 = vrot.lane.b32.xlu0 %v1953, 126
    %v1987 = vpop.permute.xlu0 %1986
    %1988 = vrot.lane.b32.xlu0 %v1954, 126
    %v1989 = vpop.permute.xlu0 %1988
    %1990 = vrot.lane.b32.xlu0 %v1955, 126
    %v1991 = vpop.permute.xlu0 %1990
    %1992 = vrot.lane.b32.xlu0 %v1956, 126
    %v1993 = vpop.permute.xlu0 %1992
    %1994 = vrot.lane.b32.xlu0 %v1957, 126
    %v1995 = vpop.permute.xlu0 %1994
    %1996 = vrot.lane.b32.xlu0 %v1958, 126
    %v1997 = vpop.permute.xlu0 %1996
    %1998 = vrot.lane.b32.xlu0 %v1959, 126
    %v1999 = vpop.permute.xlu0 %1998
    %2000 = vrot.lane.b32.xlu0 %v1960, 126
    %v2001 = vpop.permute.xlu0 %2000
    %2002 = vrot.lane.b32.xlu0 %v1961, 126
    %v2003 = vpop.permute.xlu0 %2002
    %2004 = vrot.lane.b32.xlu0 %v1962, 126
    %v2005 = vpop.permute.xlu0 %2004
    %2006 = vrot.lane.b32.xlu0 %v1963, 126
    %v2007 = vpop.permute.xlu0 %2006
    %2008 = vrot.lane.b32.xlu0 %v1964, 126
    %v2009 = vpop.permute.xlu0 %2008
    %2010 = vrot.lane.b32.xlu0 %v1965, 126
    %v2011 = vpop.permute.xlu0 %2010
    %2012 = vrot.lane.b32.xlu0 %v1966, 126
    %v2013 = vpop.permute.xlu0 %2012
    %2014 = vrot.lane.b32.xlu0 %v1967, 126
    %v2015 = vpop.permute.xlu0 %2014
    %v2032 = vsub.f32 %v1936, %v1985
    %v2033 = vsub.f32 %v1937, %v1987
    %v2034 = vsub.f32 %v1938, %v1989
    %v2035 = vsub.f32 %v1939, %v1991
    %v2036 = vsub.f32 %v1940, %v1993
    %v2037 = vsub.f32 %v1941, %v1995
    %v2038 = vsub.f32 %v1942, %v1997
    %v2039 = vsub.f32 %v1943, %v1999
    %v2040 = vsub.f32 %v1944, %v2001
    %v2041 = vsub.f32 %v1945, %v2003
    %v2042 = vsub.f32 %v1946, %v2005
    %v2043 = vsub.f32 %v1947, %v2007
    %v2044 = vsub.f32 %v1948, %v2009
    %v2045 = vsub.f32 %v1949, %v2011
    %v2046 = vsub.f32 %v1950, %v2013
    %v2047 = vsub.f32 %v1951, %v2015
    %v2048 = vmul.f32 %v1920, %v767
    %v2049 = vmul.f32 %v1921, %v771
    %v2050 = vmul.f32 %v1922, %v775
    %v2051 = vmul.f32 %v1923, %v779
    %v2052 = vmul.f32 %v1924, %v783
    %v2053 = vmul.f32 %v1925, %v787
    %v2054 = vmul.f32 %v1926, %v791
    %v2055 = vmul.f32 %v1927, %v795
    %v2056 = vmul.f32 %v1928, %v799
    %v2057 = vmul.f32 %v1929, %v803
    %v2058 = vmul.f32 %v1930, %v807
    %v2059 = vmul.f32 %v1931, %v811
    %v2060 = vmul.f32 %v1932, %v815
    %v2061 = vmul.f32 %v1933, %v819
    %v2062 = vmul.f32 %v1934, %v823
    %v2063 = vmul.f32 %v1935, %v827
    %v2064 = vmul.f32 %v1920, %v1005
    %v2065 = vmul.f32 %v1921, %v1007
    %v2066 = vmul.f32 %v1922, %v1009
    %v2067 = vmul.f32 %v1923, %v1011
    %v2068 = vmul.f32 %v1924, %v1013
    %v2069 = vmul.f32 %v1925, %v1015
    %v2070 = vmul.f32 %v1926, %v1017
    %v2071 = vmul.f32 %v1927, %v1019
    %v2072 = vmul.f32 %v1928, %v1021
    %v2073 = vmul.f32 %v1929, %v1023
    %v2074 = vmul.f32 %v1930, %v1025
    %v2075 = vmul.f32 %v1931, %v1027
    %v2076 = vmul.f32 %v1932, %v1029
    %v2077 = vmul.f32 %v1933, %v1031
    %v2078 = vmul.f32 %v1934, %v1033
    %v2079 = vmul.f32 %v1935, %v1035
    %2096 = vrot.lane.b32.xlu0 %v2064, 126
    %v2097 = vpop.permute.xlu0 %2096
    %2098 = vrot.lane.b32.xlu0 %v2065, 126
    %v2099 = vpop.permute.xlu0 %2098
    %2100 = vrot.lane.b32.xlu0 %v2066, 126
    %v2101 = vpop.permute.xlu0 %2100
    %2102 = vrot.lane.b32.xlu0 %v2067, 126
    %v2103 = vpop.permute.xlu0 %2102
    %2104 = vrot.lane.b32.xlu0 %v2068, 126
    %v2105 = vpop.permute.xlu0 %2104
    %2106 = vrot.lane.b32.xlu0 %v2069, 126
    %v2107 = vpop.permute.xlu0 %2106
    %2108 = vrot.lane.b32.xlu0 %v2070, 126
    %v2109 = vpop.permute.xlu0 %2108
    %2110 = vrot.lane.b32.xlu0 %v2071, 126
    %v2111 = vpop.permute.xlu0 %2110
    %2112 = vrot.lane.b32.xlu0 %v2072, 126
    %v2113 = vpop.permute.xlu0 %2112
    %2114 = vrot.lane.b32.xlu0 %v2073, 126
    %v2115 = vpop.permute.xlu0 %2114
    %2116 = vrot.lane.b32.xlu0 %v2074, 126
    %v2117 = vpop.permute.xlu0 %2116
    %2118 = vrot.lane.b32.xlu0 %v2075, 126
    %v2119 = vpop.permute.xlu0 %2118
    %2120 = vrot.lane.b32.xlu0 %v2076, 126
    %v2121 = vpop.permute.xlu0 %2120
    %2122 = vrot.lane.b32.xlu0 %v2077, 126
    %v2123 = vpop.permute.xlu0 %2122
    %2124 = vrot.lane.b32.xlu0 %v2078, 126
    %v2125 = vpop.permute.xlu0 %2124
    %2126 = vrot.lane.b32.xlu0 %v2079, 126
    %v2127 = vpop.permute.xlu0 %2126
    %v2144 = vadd.f32 %v2048, %v2097
    %v2145 = vadd.f32 %v2049, %v2099
    %v2146 = vadd.f32 %v2050, %v2101
    %v2147 = vadd.f32 %v2051, %v2103
    %v2148 = vadd.f32 %v2052, %v2105
    %v2149 = vadd.f32 %v2053, %v2107
    %v2150 = vadd.f32 %v2054, %v2109
    %v2151 = vadd.f32 %v2055, %v2111
    %v2152 = vadd.f32 %v2056, %v2113
    %v2153 = vadd.f32 %v2057, %v2115
    %v2154 = vadd.f32 %v2058, %v2117
    %v2155 = vadd.f32 %v2059, %v2119
    %v2156 = vadd.f32 %v2060, %v2121
    %v2157 = vadd.f32 %v2061, %v2123
    %v2158 = vadd.f32 %v2062, %v2125
    %v2159 = vadd.f32 %v2063, %v2127
    %v2160 = vmul.f32 %v1920, %v1213
    %v2161 = vmul.f32 %v1921, %v1215
    %v2162 = vmul.f32 %v1922, %v1217
    %v2163 = vmul.f32 %v1923, %v1219
    %v2164 = vmul.f32 %v1924, %v1221
    %v2165 = vmul.f32 %v1925, %v1223
    %v2166 = vmul.f32 %v1926, %v1225
    %v2167 = vmul.f32 %v1927, %v1227
    %v2168 = vmul.f32 %v1928, %v1229
    %v2169 = vmul.f32 %v1929, %v1231
    %v2170 = vmul.f32 %v1930, %v1233
    %v2171 = vmul.f32 %v1931, %v1235
    %v2172 = vmul.f32 %v1932, %v1237
    %v2173 = vmul.f32 %v1933, %v1239
    %v2174 = vmul.f32 %v1934, %v1241
    %v2175 = vmul.f32 %v1935, %v1243
    %v2176 = vmul.f32 %v1920, %v1341
    %v2177 = vmul.f32 %v1921, %v1343
    %v2178 = vmul.f32 %v1922, %v1345
    %v2179 = vmul.f32 %v1923, %v1347
    %v2180 = vmul.f32 %v1924, %v1349
    %v2181 = vmul.f32 %v1925, %v1351
    %v2182 = vmul.f32 %v1926, %v1353
    %v2183 = vmul.f32 %v1927, %v1355
    %v2184 = vmul.f32 %v1928, %v1357
    %v2185 = vmul.f32 %v1929, %v1359
    %v2186 = vmul.f32 %v1930, %v1361
    %v2187 = vmul.f32 %v1931, %v1363
    %v2188 = vmul.f32 %v1932, %v1365
    %v2189 = vmul.f32 %v1933, %v1367
    %v2190 = vmul.f32 %v1934, %v1369
    %v2191 = vmul.f32 %v1935, %v1371
    %2208 = vrot.lane.b32.xlu0 %v2176, 126
    %v2209 = vpop.permute.xlu0 %2208
    %2210 = vrot.lane.b32.xlu0 %v2177, 126
    %v2211 = vpop.permute.xlu0 %2210
    %2212 = vrot.lane.b32.xlu0 %v2178, 126
    %v2213 = vpop.permute.xlu0 %2212
    %2214 = vrot.lane.b32.xlu0 %v2179, 126
    %v2215 = vpop.permute.xlu0 %2214
    %2216 = vrot.lane.b32.xlu0 %v2180, 126
    %v2217 = vpop.permute.xlu0 %2216
    %2218 = vrot.lane.b32.xlu0 %v2181, 126
    %v2219 = vpop.permute.xlu0 %2218
    %2220 = vrot.lane.b32.xlu0 %v2182, 126
    %v2221 = vpop.permute.xlu0 %2220
    %2222 = vrot.lane.b32.xlu0 %v2183, 126
    %v2223 = vpop.permute.xlu0 %2222
    %2224 = vrot.lane.b32.xlu0 %v2184, 126
    %v2225 = vpop.permute.xlu0 %2224
    %2226 = vrot.lane.b32.xlu0 %v2185, 126
    %v2227 = vpop.permute.xlu0 %2226
    %2228 = vrot.lane.b32.xlu0 %v2186, 126
    %v2229 = vpop.permute.xlu0 %2228
    %2230 = vrot.lane.b32.xlu0 %v2187, 126
    %v2231 = vpop.permute.xlu0 %2230
    %2232 = vrot.lane.b32.xlu0 %v2188, 126
    %v2233 = vpop.permute.xlu0 %2232
    %2234 = vrot.lane.b32.xlu0 %v2189, 126
    %v2235 = vpop.permute.xlu0 %2234
    %2236 = vrot.lane.b32.xlu0 %v2190, 126
    %v2237 = vpop.permute.xlu0 %2236
    %2238 = vrot.lane.b32.xlu0 %v2191, 126
    %v2239 = vpop.permute.xlu0 %2238
    %v2256 = vsub.f32 %v2160, %v2209
    %v2257 = vsub.f32 %v2161, %v2211
    %v2258 = vsub.f32 %v2162, %v2213
    %v2259 = vsub.f32 %v2163, %v2215
    %v2260 = vsub.f32 %v2164, %v2217
    %v2261 = vsub.f32 %v2165, %v2219
    %v2262 = vsub.f32 %v2166, %v2221
    %v2263 = vsub.f32 %v2167, %v2223
    %v2264 = vsub.f32 %v2168, %v2225
    %v2265 = vsub.f32 %v2169, %v2227
    %v2266 = vsub.f32 %v2170, %v2229
    %v2267 = vsub.f32 %v2171, %v2231
    %v2268 = vsub.f32 %v2172, %v2233
    %v2269 = vsub.f32 %v2173, %v2235
    %v2270 = vsub.f32 %v2174, %v2237
    %v2271 = vsub.f32 %v2175, %v2239
    %v2272 = vmul.f32 %v1920, %v1485
    %v2273 = vmul.f32 %v1921, %v1487
    %v2274 = vmul.f32 %v1922, %v1489
    %v2275 = vmul.f32 %v1923, %v1491
    %v2276 = vmul.f32 %v1924, %v1493
    %v2277 = vmul.f32 %v1925, %v1495
    %v2278 = vmul.f32 %v1926, %v1497
    %v2279 = vmul.f32 %v1927, %v1499
    %v2280 = vmul.f32 %v1928, %v1501
    %v2281 = vmul.f32 %v1929, %v1503
    %v2282 = vmul.f32 %v1930, %v1505
    %v2283 = vmul.f32 %v1931, %v1507
    %v2284 = vmul.f32 %v1932, %v1509
    %v2285 = vmul.f32 %v1933, %v1511
    %v2286 = vmul.f32 %v1934, %v1513
    %v2287 = vmul.f32 %v1935, %v1515
    %v2288 = vmul.f32 %v1920, %v1549
    %v2289 = vmul.f32 %v1921, %v1551
    %v2290 = vmul.f32 %v1922, %v1553
    %v2291 = vmul.f32 %v1923, %v1555
    %v2292 = vmul.f32 %v1924, %v1557
    %v2293 = vmul.f32 %v1925, %v1559
    %v2294 = vmul.f32 %v1926, %v1561
    %v2295 = vmul.f32 %v1927, %v1563
    %v2296 = vmul.f32 %v1928, %v1565
    %v2297 = vmul.f32 %v1929, %v1567
    %v2298 = vmul.f32 %v1930, %v1569
    %v2299 = vmul.f32 %v1931, %v1571
    %v2300 = vmul.f32 %v1932, %v1573
    %v2301 = vmul.f32 %v1933, %v1575
    %v2302 = vmul.f32 %v1934, %v1577
    %v2303 = vmul.f32 %v1935, %v1579
    %2320 = vrot.lane.b32.xlu0 %v2288, 126
    %v2321 = vpop.permute.xlu0 %2320
    %2322 = vrot.lane.b32.xlu0 %v2289, 126
    %v2323 = vpop.permute.xlu0 %2322
    %2324 = vrot.lane.b32.xlu0 %v2290, 126
    %v2325 = vpop.permute.xlu0 %2324
    %2326 = vrot.lane.b32.xlu0 %v2291, 126
    %v2327 = vpop.permute.xlu0 %2326
    %2328 = vrot.lane.b32.xlu0 %v2292, 126
    %v2329 = vpop.permute.xlu0 %2328
    %2330 = vrot.lane.b32.xlu0 %v2293, 126
    %v2331 = vpop.permute.xlu0 %2330
    %2332 = vrot.lane.b32.xlu0 %v2294, 126
    %v2333 = vpop.permute.xlu0 %2332
    %2334 = vrot.lane.b32.xlu0 %v2295, 126
    %v2335 = vpop.permute.xlu0 %2334
    %2336 = vrot.lane.b32.xlu0 %v2296, 126
    %v2337 = vpop.permute.xlu0 %2336
    %2338 = vrot.lane.b32.xlu0 %v2297, 126
    %v2339 = vpop.permute.xlu0 %2338
    %2340 = vrot.lane.b32.xlu0 %v2298, 126
    %v2341 = vpop.permute.xlu0 %2340
    %2342 = vrot.lane.b32.xlu0 %v2299, 126
    %v2343 = vpop.permute.xlu0 %2342
    %2344 = vrot.lane.b32.xlu0 %v2300, 126
    %v2345 = vpop.permute.xlu0 %2344
    %2346 = vrot.lane.b32.xlu0 %v2301, 126
    %v2347 = vpop.permute.xlu0 %2346
    %2348 = vrot.lane.b32.xlu0 %v2302, 126
    %v2349 = vpop.permute.xlu0 %2348
    %2350 = vrot.lane.b32.xlu0 %v2303, 126
    %v2351 = vpop.permute.xlu0 %2350
    %v2368 = vadd.f32 %v2272, %v2321
    %v2369 = vadd.f32 %v2273, %v2323
    %v2370 = vadd.f32 %v2274, %v2325
    %v2371 = vadd.f32 %v2275, %v2327
    %v2372 = vadd.f32 %v2276, %v2329
    %v2373 = vadd.f32 %v2277, %v2331
    %v2374 = vadd.f32 %v2278, %v2333
    %v2375 = vadd.f32 %v2279, %v2335
    %v2376 = vadd.f32 %v2280, %v2337
    %v2377 = vadd.f32 %v2281, %v2339
    %v2378 = vadd.f32 %v2282, %v2341
    %v2379 = vadd.f32 %v2283, %v2343
    %v2380 = vadd.f32 %v2284, %v2345
    %v2381 = vadd.f32 %v2285, %v2347
    %v2382 = vadd.f32 %v2286, %v2349
    %v2383 = vadd.f32 %v2287, %v2351
    %2400 = vrot.lane.b32.xlu0 %v2144, 2
    %v2401 = vpop.permute.xlu0 %2400
    %2402 = vrot.lane.b32.xlu0 %v2145, 2
    %v2403 = vpop.permute.xlu0 %2402
    %2404 = vrot.lane.b32.xlu0 %v2146, 2
    %v2405 = vpop.permute.xlu0 %2404
    %2406 = vrot.lane.b32.xlu0 %v2147, 2
    %v2407 = vpop.permute.xlu0 %2406
    %2408 = vrot.lane.b32.xlu0 %v2148, 2
    %v2409 = vpop.permute.xlu0 %2408
    %2410 = vrot.lane.b32.xlu0 %v2149, 2
    %v2411 = vpop.permute.xlu0 %2410
    %2412 = vrot.lane.b32.xlu0 %v2150, 2
    %v2413 = vpop.permute.xlu0 %2412
    %2414 = vrot.lane.b32.xlu0 %v2151, 2
    %v2415 = vpop.permute.xlu0 %2414
    %2416 = vrot.lane.b32.xlu0 %v2152, 2
    %v2417 = vpop.permute.xlu0 %2416
    %2418 = vrot.lane.b32.xlu0 %v2153, 2
    %v2419 = vpop.permute.xlu0 %2418
    %2420 = vrot.lane.b32.xlu0 %v2154, 2
    %v2421 = vpop.permute.xlu0 %2420
    %2422 = vrot.lane.b32.xlu0 %v2155, 2
    %v2423 = vpop.permute.xlu0 %2422
    %2424 = vrot.lane.b32.xlu0 %v2156, 2
    %v2425 = vpop.permute.xlu0 %2424
    %2426 = vrot.lane.b32.xlu0 %v2157, 2
    %v2427 = vpop.permute.xlu0 %2426
    %2428 = vrot.lane.b32.xlu0 %v2158, 2
    %v2429 = vpop.permute.xlu0 %2428
    %2430 = vrot.lane.b32.xlu0 %v2159, 2
    %v2431 = vpop.permute.xlu0 %2430
    %2464 = vrot.lane.b32.xlu0 %v2368, 2
    %v2465 = vpop.permute.xlu0 %2464
    %2466 = vrot.lane.b32.xlu0 %v2369, 2
    %v2467 = vpop.permute.xlu0 %2466
    %2468 = vrot.lane.b32.xlu0 %v2370, 2
    %v2469 = vpop.permute.xlu0 %2468
    %2470 = vrot.lane.b32.xlu0 %v2371, 2
    %v2471 = vpop.permute.xlu0 %2470
    %2472 = vrot.lane.b32.xlu0 %v2372, 2
    %v2473 = vpop.permute.xlu0 %2472
    %2474 = vrot.lane.b32.xlu0 %v2373, 2
    %v2475 = vpop.permute.xlu0 %2474
    %2476 = vrot.lane.b32.xlu0 %v2374, 2
    %v2477 = vpop.permute.xlu0 %2476
    %2478 = vrot.lane.b32.xlu0 %v2375, 2
    %v2479 = vpop.permute.xlu0 %2478
    %2480 = vrot.lane.b32.xlu0 %v2376, 2
    %v2481 = vpop.permute.xlu0 %2480
    %2482 = vrot.lane.b32.xlu0 %v2377, 2
    %v2483 = vpop.permute.xlu0 %2482
    %2484 = vrot.lane.b32.xlu0 %v2378, 2
    %v2485 = vpop.permute.xlu0 %2484
    %2486 = vrot.lane.b32.xlu0 %v2379, 2
    %v2487 = vpop.permute.xlu0 %2486
    %2488 = vrot.lane.b32.xlu0 %v2380, 2
    %v2489 = vpop.permute.xlu0 %2488
    %2490 = vrot.lane.b32.xlu0 %v2381, 2
    %v2491 = vpop.permute.xlu0 %2490
    %2492 = vrot.lane.b32.xlu0 %v2382, 2
    %v2493 = vpop.permute.xlu0 %2492
    %2494 = vrot.lane.b32.xlu0 %v2383, 2
    %v2495 = vpop.permute.xlu0 %2494
    %v2512 = vsel %vm1820, %v2032, %v2401
    %v2513 = vsel %vm1820, %v2033, %v2403
    %v2514 = vsel %vm1820, %v2034, %v2405
    %v2515 = vsel %vm1820, %v2035, %v2407
    %v2516 = vsel %vm1820, %v2036, %v2409
    %v2517 = vsel %vm1820, %v2037, %v2411
    %v2518 = vsel %vm1820, %v2038, %v2413
    %v2519 = vsel %vm1820, %v2039, %v2415
    %v2520 = vsel %vm1820, %v2040, %v2417
    %v2521 = vsel %vm1820, %v2041, %v2419
    %v2522 = vsel %vm1820, %v2042, %v2421
    %v2523 = vsel %vm1820, %v2043, %v2423
    %v2524 = vsel %vm1820, %v2044, %v2425
    %v2525 = vsel %vm1820, %v2045, %v2427
    %v2526 = vsel %vm1820, %v2046, %v2429
    %v2527 = vsel %vm1820, %v2047, %v2431
    %v2528 = vsel %vm1837, %v2512, %v2256
    %v2529 = vsel %vm1837, %v2513, %v2257
    %v2530 = vsel %vm1837, %v2514, %v2258
    %v2531 = vsel %vm1837, %v2515, %v2259
    %v2532 = vsel %vm1837, %v2516, %v2260
    %v2533 = vsel %vm1837, %v2517, %v2261
    %v2534 = vsel %vm1837, %v2518, %v2262
    %v2535 = vsel %vm1837, %v2519, %v2263
    %v2536 = vsel %vm1837, %v2520, %v2264
    %v2537 = vsel %vm1837, %v2521, %v2265
    %v2538 = vsel %vm1837, %v2522, %v2266
    %v2539 = vsel %vm1837, %v2523, %v2267
    %v2540 = vsel %vm1837, %v2524, %v2268
    %v2541 = vsel %vm1837, %v2525, %v2269
    %v2542 = vsel %vm1837, %v2526, %v2270
    %v2543 = vsel %vm1837, %v2527, %v2271
    %v2544 = vsel %vm1854, %v2528, %v2465
    %v2545 = vsel %vm1854, %v2529, %v2467
    %v2546 = vsel %vm1854, %v2530, %v2469
    %v2547 = vsel %vm1854, %v2531, %v2471
    %v2548 = vsel %vm1854, %v2532, %v2473
    %v2549 = vsel %vm1854, %v2533, %v2475
    %v2550 = vsel %vm1854, %v2534, %v2477
    %v2551 = vsel %vm1854, %v2535, %v2479
    %v2552 = vsel %vm1854, %v2536, %v2481
    %v2553 = vsel %vm1854, %v2537, %v2483
    %v2554 = vsel %vm1854, %v2538, %v2485
    %v2555 = vsel %vm1854, %v2539, %v2487
    %v2556 = vsel %vm1854, %v2540, %v2489
    %v2557 = vsel %vm1854, %v2541, %v2491
    %v2558 = vsel %vm1854, %v2542, %v2493
    %v2559 = vsel %vm1854, %v2543, %v2495
    %v2560 = vpack.c.bf16 %v2544, %v2544
    %v2561 = vpack.c.bf16 %v2545, %v2545
    %v2562 = vpack.c.bf16 %v2546, %v2546
    %v2563 = vpack.c.bf16 %v2547, %v2547
    %v2564 = vpack.c.bf16 %v2548, %v2548
    %v2565 = vpack.c.bf16 %v2549, %v2549
    %v2566 = vpack.c.bf16 %v2550, %v2550
    %v2567 = vpack.c.bf16 %v2551, %v2551
    %v2568 = vpack.c.bf16 %v2552, %v2552
    %v2569 = vpack.c.bf16 %v2553, %v2553
    %v2570 = vpack.c.bf16 %v2554, %v2554
    %v2571 = vpack.c.bf16 %v2555, %v2555
    %v2572 = vpack.c.bf16 %v2556, %v2556
    %v2573 = vpack.c.bf16 %v2557, %v2557
    %v2574 = vpack.c.bf16 %v2558, %v2558
    %v2575 = vpack.c.bf16 %v2559, %v2559
    %2576 = vst.msk [vmem:[%s7] sm:$0x3] %vm1887, %v2560
    %2577 = vst.msk [vmem:[%s7 + $0x2] sm:$0x3] %vm1887, %v2561
    %2578 = vst.msk [vmem:[%s7 + $0x4] sm:$0x3] %vm1887, %v2562
    %2579 = vst.msk [vmem:[%s7 + $0x6] sm:$0x3] %vm1887, %v2563
    %2580 = vst.msk [vmem:[%s7 + $0x8] sm:$0x3] %vm1887, %v2564
    %2581 = vst.msk [vmem:[%s7 + $0xa] sm:$0x3] %vm1887, %v2565
    %2582 = vst.msk [vmem:[%s7 + $0xc] sm:$0x3] %vm1887, %v2566
    %2583 = vst.msk [vmem:[%s7 + $0xe] sm:$0x3] %vm1887, %v2567
    %2584 = vst.msk [vmem:[%s7 + $0x10] sm:$0x3] %vm1887, %v2568
    %2585 = vst.msk [vmem:[%s7 + $0x12] sm:$0x3] %vm1887, %v2569
    %2586 = vst.msk [vmem:[%s7 + $0x14] sm:$0x3] %vm1887, %v2570
    %2587 = vst.msk [vmem:[%s7 + $0x16] sm:$0x3] %vm1887, %v2571
    %2588 = vst.msk [vmem:[%s7 + $0x18] sm:$0x3] %vm1887, %v2572
    %2589 = vst.msk [vmem:[%s7 + $0x1a] sm:$0x3] %vm1887, %v2573
    %2590 = vst.msk [vmem:[%s7 + $0x1c] sm:$0x3] %vm1887, %v2574
    %2591 = vst.msk [vmem:[%s7 + $0x1e] sm:$0x3] %vm1887, %v2575
    // Predicated region
    $region108: #{glm_block_forward.9} parent=1 // pred_check
      _
    $region109: #{glm_block_forward.9} parent=1 // pred_check_branch
      %2593 = sbr.rel (0) target = $region111
    $region110: #{glm_block_forward.9} parent=1 // pred_region
      _
    $region111: #{glm_block_forward.9} parent=1 // pred_fallthru
      _
    // Predicated region
    $region112: #{glm_block_forward.9} parent=1 // pred_check
      _
    $region113: #{glm_block_forward.9} parent=1 // pred_check_branch
      %2595 = sbr.rel (0) target = $region115
    $region114: #{glm_block_forward.9} parent=1 // pred_region
      _
    $region115: #{glm_block_forward.9} parent=1 // pred_fallthru
      _
    // Predicated region
    $region116: #{glm_block_forward.9} parent=1 // pred_check
      _
    $region117: #{glm_block_forward.9} parent=1 // pred_check_branch
      %2597 = sbr.rel (0) target = $region119
    $region118: #{glm_block_forward.9} parent=1 // pred_region
      _
    $region119: #{glm_block_forward.9} parent=1 // pred_fallthru
      _
    // Predicated region
    $region120: #{glm_block_forward.9} parent=1 // pred_check
      _
    $region121: #{glm_block_forward.9} parent=1 // pred_check_branch
      %2599 = sbr.rel (0) target = $region123
    $region122: #{glm_block_forward.9} parent=1 // pred_region
      _
    $region123: #{glm_block_forward.9} parent=1 // pred_fallthru
      _

// kernel: glm_block_forward.13
$region0: #{glm_block_forward.13}
  #allocation0 [shape = 'u32[]', space=smem, size = 0x4, offset = 0x4, fixed_abs, tag = 'smem constant byte address 0x4 - core index']
  #allocation1 [shape = 'u32[144,128]{1,0:T(1,128)}', space=vmem, size = 0x12000, scoped, tag = 'internal scratch']
  #allocation2 [shape = 'f32[16,32]{1,0:T(8,128)}', space=vmem, size = 0x2000, scoped, tag = 'scratch operand']
  %s0 = inlined_call_operand.vmem [shape: bf16[16,128], index: 0, kind: input, shape index: {}]
  %s1 = inlined_call_operand.vmem [shape: bf16[128,32], index: 1, kind: input, shape index: {}]
  %s2 = inlined_call_operand.vmem [shape: f32[1,32], index: 2, kind: input, shape index: {}]
  %s3 = inlined_call_operand.vmem [shape: bf16[16,32], index: 3, kind: input, shape index: {}]
  %s4 = inlined_call_operand.hbm [shape: f32[16,32], index: 4, kind: output, shape index: {}]
  %s5 = sld [smem:[#allocation0]]
  $region34: #{glm_block_forward.13} parent=0
    _
  %s7 = ssub.s32 1, %s5
  %s8 = scalar_select 0, %s7, %s5
  $region1: #{glm_block_forward.13} parent=0
    #allocation3 [shape = 'u8[8192]{0}', space=vmem, size = 0x2000, scoped, tag = 'output window, operand 0, single buffered']
    #allocation4 [shape = 's32[1]{0}', space=sflag, size = 0x4, scoped, tag = 'scoped memory for glm_block_forward.13']
    %9 = vsyncpa [#allocation4], 0
    // Predicated region
    $region2: #{glm_block_forward.13} parent=1 // pred_check
      _
    $region3: #{glm_block_forward.13} parent=1 // pred_check_branch
      %11 = sbr.rel (0) target = $region5
    $region4: #{glm_block_forward.13} parent=1 // pred_region
      _
    $region5: #{glm_block_forward.13} parent=1 // pred_fallthru
      _
    // Predicated region
    $region6: #{glm_block_forward.13} parent=1 // pred_check
      _
    $region7: #{glm_block_forward.13} parent=1 // pred_check_branch
      %13 = sbr.rel (0) target = $region9
    $region8: #{glm_block_forward.13} parent=1 // pred_region
      _
    $region9: #{glm_block_forward.13} parent=1 // pred_fallthru
      _
    // Predicated region
    $region10: #{glm_block_forward.13} parent=1 // pred_check
      _
    $region11: #{glm_block_forward.13} parent=1 // pred_check_branch
      %15 = sbr.rel (0) target = $region13
    $region12: #{glm_block_forward.13} parent=1 // pred_region
      _
    $region13: #{glm_block_forward.13} parent=1 // pred_fallthru
      _
    // Predicated region
    $region14: #{glm_block_forward.13} parent=1 // pred_check
      _
    $region15: #{glm_block_forward.13} parent=1 // pred_check_branch
      %17 = sbr.rel (0) target = $region17
    $region16: #{glm_block_forward.13} parent=1 // pred_region
      _
    $region17: #{glm_block_forward.13} parent=1 // pred_fallthru
      _
    %p19 = scmp.eq.s32.totalorder 0, 0
    // Predicated region
    $region18: #{glm_block_forward.13} parent=1 // pred_check
      %p20 = pneg %p19
    $region19: #{glm_block_forward.13} parent=1 // pred_check_branch
      %22 = sbr.rel (%p20) target = $region21
    $region20: #{glm_block_forward.13} parent=1 // pred_region
      %vm23 = vcmask 261120
      %24 = vst.msk [vmem:[#allocation2] sm:$0xff] %vm23, 0.0
      %25 = vst.msk [vmem:[#allocation2 + $0x8] sm:$0xff] %vm23, 0.0
    $region21: #{glm_block_forward.13} parent=1 // pred_fallthru
      _
    %v26 = vld [vmem:[#allocation2] sm:$0xff]
    %v27 = vld [vmem:[#allocation2 + $0x8] sm:$0xff]
    %v28 = vld [vmem:[%s0] sm:$0xf]
    %v29 = vld [vmem:[%s0 + $0x4] sm:$0xf]
    %v30 = vld [vmem:[%s1] sm:$0xf]
    %v31 = vld [vmem:[%s1 + $0x4] sm:$0xf]
    %v32 = vld [vmem:[%s1 + $0x8] sm:$0xf]
    %v33 = vld [vmem:[%s1 + $0xc] sm:$0xf]
    %v34 = vld [vmem:[%s1 + $0x10] sm:$0xf]
    %v35 = vld [vmem:[%s1 + $0x14] sm:$0xf]
    %v36 = vld [vmem:[%s1 + $0x18] sm:$0xf]
    %v37 = vld [vmem:[%s1 + $0x1c] sm:$0xf]
    %v38 = vld [vmem:[%s1 + $0x20] sm:$0xf]
    %v39 = vld [vmem:[%s1 + $0x24] sm:$0xf]
    %v40 = vld [vmem:[%s1 + $0x28] sm:$0xf]
    %v41 = vld [vmem:[%s1 + $0x2c] sm:$0xf]
    %v42 = vld [vmem:[%s1 + $0x30] sm:$0xf]
    %v43 = vld [vmem:[%s1 + $0x34] sm:$0xf]
    %v44 = vld [vmem:[%s1 + $0x38] sm:$0xf]
    %v45 = vld [vmem:[%s1 + $0x3c] sm:$0xf]
    %v48 = vunpack.c.l.b16 %v28
    %v49 = vunpack.c.l.b16 %v29
    %v50 = vpack.c.b16 %v49, %v48
    %v68 = vunpack.c.l.b16 %v30
    %v69 = vunpack.c.l.b16 %v31
    %v70 = vunpack.c.l.b16 %v32
    %v71 = vunpack.c.l.b16 %v33
    %v72 = vunpack.c.l.b16 %v34
    %v73 = vunpack.c.l.b16 %v35
    %v74 = vunpack.c.l.b16 %v36
    %v75 = vunpack.c.l.b16 %v37
    %v76 = vunpack.c.l.b16 %v38
    %v77 = vunpack.c.l.b16 %v39
    %v78 = vunpack.c.l.b16 %v40
    %v79 = vunpack.c.l.b16 %v41
    %v80 = vunpack.c.l.b16 %v42
    %v81 = vunpack.c.l.b16 %v43
    %v82 = vunpack.c.l.b16 %v44
    %v83 = vunpack.c.l.b16 %v45
    %v84 = vpack.c.b16 %v69, %v68
    %v85 = vpack.c.b16 %v71, %v70
    %v86 = vpack.c.b16 %v73, %v72
    %v87 = vpack.c.b16 %v75, %v74
    %v88 = vpack.c.b16 %v77, %v76
    %v89 = vpack.c.b16 %v79, %v78
    %v90 = vpack.c.b16 %v81, %v80
    %v91 = vpack.c.b16 %v83, %v82
    %100 = vmatprep.subr.bf16.mxu0 0
    %101 = vmatpush1.bf16.msra.mxu0 %v84
    %102 = vmatprep.subr.bf16.mxu0 0
    %103 = vmatpush1.bf16.msra.mxu0 %v85
    %104 = vmatprep.subr.bf16.mxu0 0
    %105 = vmatpush1.bf16.msra.mxu0 %v86
    %106 = vmatprep.subr.bf16.mxu0 0
    %107 = vmatpush1.bf16.msra.mxu0 %v87
    %108 = vmatprep.subr.bf16.mxu0 0
    %109 = vmatpush1.bf16.msra.mxu0 %v88
    %110 = vmatprep.subr.bf16.mxu0 0
    %111 = vmatpush1.bf16.msra.mxu0 %v89
    %112 = vmatprep.subr.bf16.mxu0 0
    %113 = vmatpush1.bf16.msra.mxu0 %v90
    %114 = vmatprep.subr.bf16.mxu0 0
    %115 = vmatpush1.bf16.msra.mxu0 %v91
    %116 = vmatprep.subr.bf16.mxu0 0
    %117 = vmatpush1.bf16.msra.mxu0 0
    %118 = vmatprep.subr.bf16.mxu0 0
    %119 = vmatpush1.bf16.msra.mxu0 0
    %120 = vmatprep.subr.bf16.mxu0 0
    %121 = vmatpush1.bf16.msra.mxu0 0
    %122 = vmatprep.subr.bf16.mxu0 0
    %123 = vmatpush1.bf16.msra.mxu0 0
    %124 = vmatprep.subr.bf16.mxu0 0
    %125 = vmatpush1.bf16.msra.mxu0 0
    %126 = vmatprep.subr.bf16.mxu0 0
    %127 = vmatpush1.bf16.msra.mxu0 0
    %128 = vmatprep.subr.bf16.mxu0 0
    %129 = vmatpush1.bf16.msra.mxu0 0
    %130 = vmatprep.subr.bf16.mxu0 0
    %131 = vmatpush1.bf16.msra.mxu0 0
    %132 = vmatprep.mubr.bf16.mxu0 0
    %133 = vmatmul.mubr.bf16.gmra.mrb[0].mxu0 %v50
    %v134 = vpop.f32.mrb[0].mxu0
    %v135 = vadd.f32 0.0, %v134
    %v136 = vpop.f32.mrb[0].mxu0
    %v137 = vpop.f32.mrb[0].mxu0
    %v138 = vadd.f32 0.0, %v137
    %v139 = vpop.f32.mrb[0].mxu0
    %140 = vdwg.mxu0
    %v141 = vadd.f32 %v26, %v135
    %v142 = vadd.f32 %v27, %v138
    %vm143 = vcmask 261120
    %144 = vst.msk [vmem:[#allocation2] sm:$0xff] %vm143, %v141
    %145 = vst.msk [vmem:[#allocation2 + $0x8] sm:$0xff] %vm143, %v142
    // Predicated region
    $region22: #{glm_block_forward.13} parent=1 // pred_check
      %p146 = pneg %p19
    $region23: #{glm_block_forward.13} parent=1 // pred_check_branch
      %148 = sbr.rel (%p146) target = $region25
    $region24: #{glm_block_forward.13} parent=1 // pred_region
      %v149 = vld [vmem:[#allocation2] sm:$0xff]
      %v150 = vld [vmem:[#allocation2 + $0x8] sm:$0xff]
      %v151 = vld [vmem:[%s2] sm:$0x1]
      %v153 = vlaneseq
      %v154 = vshrl.u32 %v153, 7
      %v155 = vsub.s32 0, %v154
      %v156 = vrot.slane %v151, %v155
      %v158 = vadd.f32 %v149, %v156
      %v159 = vadd.f32 %v150, %v156
      %v160 = vld [vmem:[%s3] sm:$0xf]
      %v161 = vld [vmem:[%s3 + $0x4] sm:$0xf]
      %v162 = vunpack.c.l.bf16 %v160
      %v163 = vunpack.c.l.bf16 %v161
      %v164 = vmul.f32 %v162, 7.483315
      %v165 = vmul.f32 %v163, 7.483315
      %v166 = vadd.f32 %v164, %v158
      %v167 = vadd.f32 %v165, %v159
      %168 = vst.msk [vmem:[#allocation3] sm:$0xff] %vm143, %v166
      %169 = vst.msk [vmem:[#allocation3 + $0x8] sm:$0xff] %vm143, %v167
    $region25: #{glm_block_forward.13} parent=1 // pred_fallthru
      _
    // Predicated region
    $region26: #{glm_block_forward.13} parent=1 // pred_check
      _
    $region27: #{glm_block_forward.13} parent=1 // pred_check_branch
      %171 = sbr.rel (0) target = $region29
    $region28: #{glm_block_forward.13} parent=1 // pred_region
      %s173 = ssub.s32 256, 256
      %174 = vsyncadd [#allocation4], %s173
      %s175 = sshll.u32 [#allocation3], 4
      %s176 = int_to_ptr.vmem [resolvable:$true] %s175
      %181 = dma.vmem_to_hbm [thread:$0]  %s176, 256, %s4, [#allocation4], 128, 128, 8
    $region29: #{glm_block_forward.13} parent=1 // pred_fallthru
      _
    // Predicated region
    $region30: #{glm_block_forward.13} parent=1 // pred_check
      _
    $region31: #{glm_block_forward.13} parent=1 // pred_check_branch
      %183 = sbr.rel (0) target = $region33
    $region32: #{glm_block_forward.13} parent=1 // pred_region
      %184 = dma.done [#allocation4], 256
    $region33: #{glm_block_forward.13} parent=1 // pred_fallthru
      _
    %185 = vsyncpa [#allocation4], 1

</llo_original>
